<compile_context>
chip_gen: v7x
topology: tpu7x:2x2x1
jax: 0.10.0
libtpu: 0.0.40
codegen_flags: <defaults>
</compile_context>

<pallas_src>
import functools
import math

import jax
import jax.numpy as jnp
from jax.experimental import pallas as pl
from jax.experimental.pallas import tpu as pltpu


# ------------------------------ constants ------------------------------------

IMG_SHAPE = (16, 16)          # (H, W) — static test-time image shape
NUM_ANCHORS = 3
NUM_FG_CLASSES = 4            # + 1 background (index 0)
ROI_SIZE = 7
RPN_NMS_PRE = 64
RPN_MAX_NUM = 32
RCNN_MAX_PER_IMG = 16
LANE = 128                    # pad stored kernel outputs / fused weights to 128 lanes
BB1_CH, BB2_CH, NECK_CH, RPN_CH = 16, 32, 32, 32


# --------------------------- pallas_call helper -------------------------------
# TODO(synk): at these toy shapes a single full-array block per call is optimal;
# when batch / image size grows, add (tm, tk)/(tk, tn) tiling with a "parallel"
# M axis (v7x megacore) and an explicit vmem_limit_bytes.

def _zero_map(n):
    return lambda *args, _n=n: (0,) * _n


def _full_spec(shape):
    return pl.BlockSpec(tuple(shape), _zero_map(len(shape)))


def pallas_full(kernel, out_shape, *args):
    """Single-program pallas_call with whole-array VMEM blocks."""
    multi = isinstance(out_shape, (tuple, list))
    outs = tuple(out_shape) if multi else (out_shape,)
    out_specs = tuple(_full_spec(o.shape) for o in outs)
    call = pl.pallas_call(
        kernel,
        out_shape=tuple(outs) if multi else outs[0],
        grid=(1,),
        in_specs=[_full_spec(a.shape) for a in args],
        out_specs=out_specs if multi else out_specs[0],
        compiler_params=pltpu.CompilerParams(dimension_semantics=("arbitrary",)),
    )
    return call(*args)


# ------------------------------ Pallas kernels --------------------------------

def _gemm_kernel(a_ref, w_ref, b_ref, o_ref, *, relu):
    acc = jnp.dot(a_ref[...], w_ref[...], preferred_element_type=jnp.float32)
    acc = acc + b_ref[...]
    if relu:
        acc = jnp.maximum(acc, 0.0)
    o_ref[...] = acc


def pallas_gemm(a_bf16, w_bf16, b_f32, relu=False):
    M = a_bf16.shape[0]
    N = w_bf16.shape[1]
    return pallas_full(
        functools.partial(_gemm_kernel, relu=relu),
        jax.ShapeDtypeStruct((M, N), jnp.float32),
        a_bf16, w_bf16, b_f32)


def _neck_kernel(c1_ref, c2_ref, w1_ref, b1_ref, w2_ref, b2_ref, p1_ref, p2_ref):
    # both FPN lateral 1x1 convs fused into a single launch
    p1_ref[...] = jnp.dot(c1_ref[...], w1_ref[...],
                          preferred_element_type=jnp.float32) + b1_ref[...]
    p2_ref[...] = jnp.dot(c2_ref[...], w2_ref[...],
                          preferred_element_type=jnp.float32) + b2_ref[...]


def _rpn_head_kernel(patch_ref, wc_ref, bc_ref, wcr_ref, bcr_ref,
                     out_ref, gap_ref, *, rows_per_img, batch):
    # shared 3x3 rpn conv over both FPN levels (rows concatenated along M)
    t = jnp.dot(patch_ref[...], wc_ref[...],
                preferred_element_type=jnp.float32) + bc_ref[...]
    t = jnp.maximum(t, 0.0)                                       # (M, 32)
    # fused cls|reg 1x1 projection (cols 0:A = cls, A:A+4A = reg, rest = pad)
    out_ref[...] = jnp.dot(t.astype(wcr_ref.dtype), wcr_ref[...],
                           preferred_element_type=jnp.float32) + bcr_ref[...]
    # global-average-pool of the level-0 rows of each image (for bg_vector)
    gaps = [jnp.mean(t[b * rows_per_img:(b + 1) * rows_per_img],
                     axis=0, keepdims=True) for b in range(batch)]
    gap_ref[...] = jnp.concatenate(gaps, axis=0)


def _decode_deltas(x1a, y1a, x2a, y2a, dx, dy, dw, dh, max_h, max_w, max_ratio):
    dw = jnp.clip(dw, -max_ratio, max_ratio)
    dh = jnp.clip(dh, -max_ratio, max_ratio)
    px = (x1a + x2a) * 0.5
    py = (y1a + y2a) * 0.5
    pw = x2a - x1a + 1.0
    ph = y2a - y1a + 1.0
    gw = pw * jnp.exp(dw)
    gh = ph * jnp.exp(dh)
    gx = px + pw * dx
    gy = py + ph * dy
    x1 = jnp.clip(gx - (gw - 1.0) * 0.5, 0.0, max_w - 1.0)
    y1 = jnp.clip(gy - (gh - 1.0) * 0.5, 0.0, max_h - 1.0)
    x2 = jnp.clip(gx + (gw - 1.0) * 0.5, 0.0, max_w - 1.0)
    y2 = jnp.clip(gy + (gh - 1.0) * 0.5, 0.0, max_h - 1.0)
    return x1, y1, x2, y2


def _delta2bbox_t_kernel(r_ref, d_ref, o_ref, *, max_h, max_w, max_ratio):
    # transposed (4, P) layout: P proposals live along the lane dimension
    r = r_ref[...]
    d = d_ref[...]
    x1, y1, x2, y2 = _decode_deltas(
        r[0:1], r[1:2], r[2:3], r[3:4],
        d[0:1], d[1:2], d[2:3], d[3:4],
        max_h, max_w, max_ratio)
    o_ref[...] = jnp.concatenate([x1, y1, x2, y2], axis=0)


def pallas_delta2bbox(rois, deltas, img_shape, wh_ratio_clip=16.0 / 1000.0):
    P = rois.shape[0]
    max_ratio = abs(math.log(wh_ratio_clip))
    boxes_t = pallas_full(
        functools.partial(_delta2bbox_t_kernel,
                          max_h=float(img_shape[0]), max_w=float(img_shape[1]),
                          max_ratio=max_ratio),
        jax.ShapeDtypeStruct((4, P), jnp.float32),
        rois.T.astype(jnp.float32), deltas.T.astype(jnp.float32))
    return boxes_t.T


def _bbox_det_kernel(flat_ref, gap_ref, rois_ref,
                     fc1w_ref, fc1b_ref, bgfcw_ref, bgfcb_ref,
                     bgw_ref, bgb_ref, fc2w_ref, fc2b_ref,
                     crw_ref, crb_ref, o_ref,
                     *, num_fg, max_h, max_w, max_ratio):
    f32 = jnp.float32
    bf16 = jnp.bfloat16
    # --- fused bbox-head MLP (all intermediates stay on-chip) ---
    h1 = jnp.dot(flat_ref[...], fc1w_ref[...], preferred_element_type=f32) + fc1b_ref[...]
    bgv = jnp.maximum(
        jnp.dot(gap_ref[...], bgfcw_ref[...], preferred_element_type=f32) + bgfcb_ref[...],
        0.0)                                                    # rpn bg_fc (relu)
    bg = jnp.dot(bgv.astype(bf16), bgw_ref[...], preferred_element_type=f32) + bgb_ref[...]
    h = jnp.maximum(h1 + bg, 0.0)                               # decoder-style bg fusion
    h = jnp.maximum(
        jnp.dot(h.astype(bf16), fc2w_ref[...], preferred_element_type=f32) + fc2b_ref[...],
        0.0)
    out = jnp.dot(h.astype(bf16), crw_ref[...], preferred_element_type=f32) + crb_ref[...]

    ncls = num_fg + 1
    cls = out[:, 0:ncls]                                        # (P, C+1)
    reg = out[:, ncls:ncls + 4]                                 # (P, 4)
    # --- softmax (approx reciprocal -> EUP) + fg max / first-argmax ---
    m = jnp.max(cls, axis=-1, keepdims=True)
    e = jnp.exp(cls - m)
    probs = e * pl.reciprocal(jnp.sum(e, axis=-1, keepdims=True), approx=True)
    fg = probs[:, 1:]                                           # class 0 = background
    best = jnp.max(fg, axis=-1, keepdims=True)
    col = jax.lax.broadcasted_iota(jnp.int32, fg.shape, 1).astype(f32)
    label = jnp.min(jnp.where(fg >= best, col, float(num_fg)), axis=-1, keepdims=True)
    # --- delta2bbox on the rois ---
    rois = rois_ref[...]                                        # (P, 5)
    x1, y1, x2, y2 = _decode_deltas(
        rois[:, 1:2], rois[:, 2:3], rois[:, 3:4], rois[:, 4:5],
        reg[:, 0:1], reg[:, 1:2], reg[:, 2:3], reg[:, 3:4],
        max_h, max_w, max_ratio)
    zero = jnp.zeros_like(best)
    o_ref[...] = jnp.concatenate([x1, y1, x2, y2, best, label, zero, zero], axis=1)


# ------------------------------ conv via GEMM ---------------------------------
# TODO(synk): im2col is still built wrapper-side (fused by XLA under jit);
# a fully in-kernel im2col would need strided window slices inside Mosaic.

def im2col(x_nhwc, kh, kw, stride, pad):
    B, H, W, C = x_nhwc.shape
    x = jnp.pad(x_nhwc, ((0, 0), (pad, pad), (pad, pad), (0, 0)))
    Hp, Wp = H + 2 * pad, W + 2 * pad
    Ho = (Hp - kh) // stride + 1
    Wo = (Wp - kw) // stride + 1
    cols = []
    for i in range(kh):
        for j in range(kw):
            cols.append(x[:, i:i + stride * Ho:stride, j:j + stride * Wo:stride, :])
    patches = jnp.concatenate(cols, axis=-1).reshape(B * Ho * Wo, kh * kw * C)
    return patches, Ho, Wo


def conv_gemm(x_nhwc, wmat_bf16, bias_f32, out_ch, kh, kw, stride, pad, relu=False):
    B = x_nhwc.shape[0]
    patches, Ho, Wo = im2col(x_nhwc, kh, kw, stride, pad)
    out = pallas_gemm(patches.astype(jnp.bfloat16), wmat_bf16, bias_f32, relu=relu)
    return out[:, :out_ch].reshape(B, Ho, Wo, out_ch)            # NHWC


# ------------------------------ parameters ------------------------------------

def init_params(key):
    ks = iter(jax.random.split(key, 32))

    def w(shape, scale=0.05):
        return (jax.random.normal(next(ks), shape) * scale).astype(jnp.float32)

    def z(shape):
        return jnp.zeros(shape, jnp.float32)

    return {
        # backbone
        "bb1_w": w((BB1_CH, 3, 3, 3)), "bb1_b": z((BB1_CH,)),
        "bb2_w": w((BB2_CH, BB1_CH, 3, 3)), "bb2_b": z((BB2_CH,)),
        # neck (FPN laterals)
        "lat1_w": w((NECK_CH, BB1_CH, 1, 1)), "lat1_b": z((NECK_CH,)),
        "lat2_w": w((NECK_CH, BB2_CH, 1, 1)), "lat2_b": z((NECK_CH,)),
        # rpn head
        "rpn_conv_w": w((RPN_CH, NECK_CH, 3, 3)), "rpn_conv_b": z((RPN_CH,)),
        "rpn_cls_w": w((NUM_ANCHORS, RPN_CH, 1, 1)), "rpn_cls_b": z((NUM_ANCHORS,)),
        "rpn_reg_w": w((NUM_ANCHORS * 4, RPN_CH, 1, 1)), "rpn_reg_b": z((NUM_ANCHORS * 4,)),
        "bg_fc_w": w((RPN_CH, 32)), "bg_fc_b": z((32,)),
        # bbox head (with bg_vector decoder fusion)
        "fc1_w": w((NECK_CH * ROI_SIZE * ROI_SIZE, 128)), "fc1_b": z((128,)),
        "bg_w": w((32, 128)), "bg_b": z((128,)),
        "fc2_w": w((128, 128)), "fc2_b": z((128,)),
        "cls_w": w((128, NUM_FG_CLASSES + 1)), "cls_b": z((NUM_FG_CLASSES + 1,)),
        "reg_w": w((128, 4)), "reg_b": z((4,)),
    }


def prepare_params(p):
    """One-time conversion to bf16 GEMM matrices with lane-dense (128) padding."""
    bf16 = jnp.bfloat16

    def conv_wmat(w, n_pad=LANE):
        O, C, kh, kw = w.shape
        wm = jnp.transpose(w, (2, 3, 1, 0)).reshape(kh * kw * C, O)   # (i,j,c) order
        return jnp.pad(wm, ((0, 0), (0, n_pad - O))).astype(bf16)

    def pad_bias(b, n_pad=LANE):
        return jnp.pad(b, (0, n_pad - b.shape[0])).reshape(1, n_pad).astype(jnp.float32)

    q = {}
    q["bb1_w"] = conv_wmat(p["bb1_w"]); q["bb1_b"] = pad_bias(p["bb1_b"])
    q["bb2_w"] = conv_wmat(p["bb2_w"]); q["bb2_b"] = pad_bias(p["bb2_b"])
    q["lat1_w"] = conv_wmat(p["lat1_w"]); q["lat1_b"] = pad_bias(p["lat1_b"])
    q["lat2_w"] = conv_wmat(p["lat2_w"]); q["lat2_b"] = pad_bias(p["lat2_b"])
    # rpn shared conv (intermediate, stays at N=32)
    q["rpn_conv_w"] = conv_wmat(p["rpn_conv_w"], n_pad=RPN_CH)
    q["rpn_conv_b"] = p["rpn_conv_b"].reshape(1, RPN_CH).astype(jnp.float32)
    # fused rpn cls|reg 1x1 projection: (32, 3 + 12) padded to 128 lanes
    wc = p["rpn_cls_w"].reshape(NUM_ANCHORS, RPN_CH).T
    wr = p["rpn_reg_w"].reshape(NUM_ANCHORS * 4, RPN_CH).T
    q["rpn_clsreg_w"] = jnp.pad(jnp.concatenate([wc, wr], axis=1),
                                ((0, 0), (0, LANE - NUM_ANCHORS * 5))).astype(bf16)
    q["rpn_clsreg_b"] = pad_bias(jnp.concatenate([p["rpn_cls_b"], p["rpn_reg_b"]]))
    # bg path + bbox head
    q["bg_fc_w"] = p["bg_fc_w"].astype(bf16)
    q["bg_fc_b"] = p["bg_fc_b"].reshape(1, -1).astype(jnp.float32)
    q["bg_w"] = p["bg_w"].astype(bf16)
    q["bg_b"] = p["bg_b"].reshape(1, -1).astype(jnp.float32)
    q["fc1_w"] = p["fc1_w"].astype(bf16)
    q["fc1_b"] = p["fc1_b"].reshape(1, -1).astype(jnp.float32)
    q["fc2_w"] = p["fc2_w"].astype(bf16)
    q["fc2_b"] = p["fc2_b"].reshape(1, -1).astype(jnp.float32)
    # fused cls|reg projection: (128, 5 + 4) padded to 128 lanes
    q["clsreg_w"] = jnp.pad(jnp.concatenate([p["cls_w"], p["reg_w"]], axis=1),
                            ((0, 0), (0, LANE - (NUM_FG_CLASSES + 1 + 4)))).astype(bf16)
    q["clsreg_b"] = pad_bias(jnp.concatenate([p["cls_b"], p["reg_b"]]))
    return q


# ------------------------------ model pieces ----------------------------------

def grid_anchors(featmap_size, stride, scales=(2.0, 3.0, 4.0)):
    H, W = featmap_size
    base = jnp.array(
        [[-0.5 * (s * stride - 1), -0.5 * (s * stride - 1),
          0.5 * (s * stride - 1), 0.5 * (s * stride - 1)] for s in scales],
        dtype=jnp.float32)
    shift_x = jnp.arange(W, dtype=jnp.float32) * stride
    shift_y = jnp.arange(H, dtype=jnp.float32) * stride
    sx, sy = jnp.meshgrid(shift_x, shift_y)
    shifts = jnp.stack([sx.ravel(), sy.ravel(), sx.ravel(), sy.ravel()], axis=1)
    return (shifts[:, None, :] + base[None, :, :]).reshape(-1, 4)


def extract_feat(q, img_nchw):
    B = img_nchw.shape[0]
    x = jnp.transpose(img_nchw, (0, 2, 3, 1))                     # NHWC once
    c1 = conv_gemm(x, q["bb1_w"], q["bb1_b"], BB1_CH, 3, 3, stride=2, pad=1, relu=True)
    c2 = conv_gemm(c1, q["bb2_w"], q["bb2_b"], BB2_CH, 3, 3, stride=2, pad=1, relu=True)
    c1f = c1.reshape(-1, BB1_CH).astype(jnp.bfloat16)
    c2f = c2.reshape(-1, BB2_CH).astype(jnp.bfloat16)
    p1s, p2s = pallas_full(
        _neck_kernel,
        (jax.ShapeDtypeStruct((c1f.shape[0], LANE), jnp.float32),
         jax.ShapeDtypeStruct((c2f.shape[0], LANE), jnp.float32)),
        c1f, c2f, q["lat1_w"], q["lat1_b"], q["lat2_w"], q["lat2_b"])
    p1 = p1s[:, :NECK_CH].reshape(B, c1.shape[1], c1.shape[2], NECK_CH)
    p2 = p2s[:, :NECK_CH].reshape(B, c2.shape[1], c2.shape[2], NECK_CH)
    return (p1, p2), (2, 4)


def rpn_head(q, feats):
    B = feats[0].shape[0]
    patch_list, level_shapes = [], []
    for f in feats:
        patches, Ho, Wo = im2col(f, 3, 3, stride=1, pad=1)
        patch_list.append(patches)
        level_shapes.append((Ho, Wo))
    patches = jnp.concatenate(patch_list, axis=0).astype(jnp.bfloat16)   # (M, 288)
    M = patches.shape[0]
    rows0 = level_shapes[0][0] * level_shapes[0][1]
    out, gap = pallas_full(
        functools.partial(_rpn_head_kernel, rows_per_img=rows0, batch=B),
        (jax.ShapeDtypeStruct((M, LANE), jnp.float32),
         jax.ShapeDtypeStruct((B, RPN_CH), jnp.float32)),
        patches, q["rpn_conv_w"], q["rpn_conv_b"],
        q["rpn_clsreg_w"], q["rpn_clsreg_b"])
    return out, gap, level_shapes


def rpn_get_bboxes(rpn_out, level_shapes, strides, img_shape, batch):
    A = NUM_ANCHORS
    row0 = 0
    all_anchors, all_logits, all_deltas = [], [], []
    for (Ho, Wo), stride in zip(level_shapes, strides):
        n = Ho * Wo
        blk = rpn_out[row0:row0 + n]                      # image-0 rows of this level
        all_logits.append(blk[:, 0:A].reshape(-1))
        all_deltas.append(blk[:, A:A + 4 * A].reshape(n * A, 4))
        all_anchors.append(grid_anchors((Ho, Wo), stride))
        row0 += n * batch
    scores = jax.nn.sigmoid(jnp.concatenate(all_logits))
    deltas = jnp.concatenate(all_deltas, axis=0)
    anchors = jnp.concatenate(all_anchors, axis=0)
    # Since RPN_NMS_PRE >= RPN_MAX_NUM, a single global top-k equals the
    # reference's per-level nms_pre top-k followed by a global top-k.
    # TODO(synk): RPN NMS is data-dependent sequential suppression; fixed top-k instead.
    k = min(RPN_MAX_NUM, scores.shape[0])
    top_s, idx = jax.lax.top_k(scores, k)
    boxes = pallas_delta2bbox(anchors[idx], deltas[idx], img_shape)
    return jnp.concatenate([boxes, top_s[:, None]], axis=1)       # (P, 5)


def bbox2roi(proposals):
    P = proposals.shape[0]
    return jnp.concatenate([jnp.zeros((P, 1), jnp.float32), proposals[:, :4]], axis=1)


def roi_extract(feat_nhwc, rois, spatial_scale):
    # TODO(synk): level-mapped multi-sample RoIAlign is a data-dependent gather;
    # kept as plain-JAX bilinear sampling glue (single level, one sample per bin).
    B, H, W, C = feat_nhwc.shape

    def one(roi):
        bidx = roi[0].astype(jnp.int32)
        fm = jnp.take(feat_nhwc, bidx, axis=0)                    # (H, W, C)
        x1, y1, x2, y2 = (roi[1] * spatial_scale, roi[2] * spatial_scale,
                          roi[3] * spatial_scale, roi[4] * spatial_scale)
        rw = jnp.maximum(x2 - x1, 1.0)
        rh = jnp.maximum(y2 - y1, 1.0)
        xs = x1 + (jnp.arange(ROI_SIZE, dtype=jnp.float32) + 0.5) * rw / ROI_SIZE
        ys = y1 + (jnp.arange(ROI_SIZE, dtype=jnp.float32) + 0.5) * rh / ROI_SIZE
        xg, yg = jnp.meshgrid(xs, ys)
        xg = jnp.clip(xg, 0.0, W - 1.0)
        yg = jnp.clip(yg, 0.0, H - 1.0)
        x0 = jnp.floor(xg).astype(jnp.int32)
        y0 = jnp.floor(yg).astype(jnp.int32)
        x1i = jnp.minimum(x0 + 1, W - 1)
        y1i = jnp.minimum(y0 + 1, H - 1)
        wx = (xg - x0.astype(jnp.float32))[..., None]
        wy = (yg - y0.astype(jnp.float32))[..., None]
        v00 = fm[y0, x0]
        v01 = fm[y0, x1i]
        v10 = fm[y1i, x0]
        v11 = fm[y1i, x1i]
        out = (v00 * (1 - wx) * (1 - wy) + v01 * wx * (1 - wy)
               + v10 * (1 - wx) * wy + v11 * wx * wy)             # (7, 7, C)
        return jnp.transpose(out, (2, 0, 1))                      # (C, 7, 7) torch order

    return jax.vmap(one)(rois)                                    # (P, C, 7, 7)


def bbox_head_and_detect(q, roi_feats, gap0, rois, img_shape):
    P = roi_feats.shape[0]
    flat = roi_feats.reshape(P, -1).astype(jnp.bfloat16)
    max_ratio = abs(math.log(16.0 / 1000.0))
    return pallas_full(
        functools.partial(_bbox_det_kernel, num_fg=NUM_FG_CLASSES,
                          max_h=float(img_shape[0]), max_w=float(img_shape[1]),
                          max_ratio=max_ratio),
        jax.ShapeDtypeStruct((P, 8), jnp.float32),
        flat, gap0.astype(jnp.bfloat16), rois.astype(jnp.float32),
        q["fc1_w"], q["fc1_b"], q["bg_fc_w"], q["bg_fc_b"],
        q["bg_w"], q["bg_b"], q["fc2_w"], q["fc2_b"],
        q["clsreg_w"], q["clsreg_b"])


@functools.partial(jax.jit, static_argnames=("img_shape",))
def onnx_model_forward(q, img, scale_factor, *, img_shape):
    # extract_feat: backbone + neck
    feats, strides = extract_feat(q, img)
    # simple_test_rpn
    rpn_out, gap, level_shapes = rpn_head(q, feats)
    proposals = rpn_get_bboxes(rpn_out, level_shapes, strides, img_shape, img.shape[0])
    # simple_test_bboxes (with_decoder=True, rescale=True)
    rois = bbox2roi(proposals)
    roi_feats = roi_extract(feats[0], rois, spatial_scale=1.0 / strides[0])
    det = bbox_head_and_detect(q, roi_feats, gap[0:1], rois, img_shape)
    # TODO(synk): per-class RCNN NMS has no clean Pallas equivalent; fixed top-k by score.
    best = det[:, 4]
    k = min(RCNN_MAX_PER_IMG, det.shape[0])
    top_s, idx = jax.lax.top_k(best, k)
    boxes = det[idx, 0:4] / scale_factor                          # rescale=True
    det_bboxes = jnp.concatenate([boxes, top_s[:, None]], axis=1)
    det_labels = det[idx, 5].astype(jnp.int32)
    return det_bboxes, det_labels


# ----------------------------------- main --------------------------------------

if __name__ == "__main__":
    key = jax.random.PRNGKey(0)
    k_params, k_img = jax.random.split(key)
    params = init_params(k_params)
    q = prepare_params(params)        # one-time bf16 / fused / 128-lane-padded weights

    img = jax.random.normal(k_img, (2, 3, IMG_SHAPE[0], IMG_SHAPE[1]), jnp.float32)
    scale_factor = jnp.float32(1.5)

    det_bboxes, det_labels = onnx_model_forward(q, img, scale_factor, img_shape=IMG_SHAPE)
    jax.block_until_ready((det_bboxes, det_labels))
    assert det_bboxes.shape == (RCNN_MAX_PER_IMG, 5)
    assert det_labels.shape == (RCNN_MAX_PER_IMG,)
    print("KERNEL_OK")
</pallas_src>

<mosaic_0001>
module attributes {stable_mosaic.version = 11 : i64} {
  func.func private @main(%arg0: i32) attributes {dimension_semantics = [#tpu.dimension_semantics<core_parallel>], iteration_bounds = array<i64: 2>, tpu.core_type = #tpu.core_type<sc_scalar_subcore>, window_params = []} {
    return
  }
}

module attributes {stable_mosaic.version = 11 : i64} {
  func.func private @main(%arg0: i32) attributes {dimension_semantics = [#tpu.dimension_semantics<core_parallel>], iteration_bounds = array<i64: 2>, tpu.core_type = #tpu.core_type<sc_scalar_subcore>, window_params = []} {
    return
  }
}

module attributes {stable_mosaic.version = 11 : i64} {
  func.func @_gemm_kernel(%arg0: i32, %arg1: memref<128x27xbf16, #tpu.memory_space<vmem>>, %arg2: memref<27x128xbf16, #tpu.memory_space<vmem>>, %arg3: memref<1x128xf32, #tpu.memory_space<vmem>>, %arg4: memref<128x128xf32, #tpu.memory_space<vmem>>) attributes {dimension_semantics = [#tpu.dimension_semantics<arbitrary>], iteration_bounds = array<i64: 1>, scalar_prefetch = 0 : i64, scratch_operands = 0 : i64, tpu.core_type = #tpu.core_type<tc>, window_params = [{pipeline_mode = #tpu.pipeline_mode<synchronous>, transform_indices = @transform_0, window_bounds = array<i64: 128, 27>}, {pipeline_mode = #tpu.pipeline_mode<synchronous>, transform_indices = @transform_1, window_bounds = array<i64: 27, 128>}, {pipeline_mode = #tpu.pipeline_mode<synchronous>, transform_indices = @transform_2, window_bounds = array<i64: 1, 128>}, {pipeline_mode = #tpu.pipeline_mode<synchronous>, transform_indices = @transform_3, window_bounds = array<i64: 128, 128>}]} {
    %c0 = arith.constant 0 : index
    %c0_0 = arith.constant 0 : index
    %0 = vector.load %arg1[%c0, %c0_0] : memref<128x27xbf16, #tpu.memory_space<vmem>>, vector<128x27xbf16>
    %c0_1 = arith.constant 0 : index
    %c0_2 = arith.constant 0 : index
    %1 = vector.load %arg2[%c0_1, %c0_2] : memref<27x128xbf16, #tpu.memory_space<vmem>>, vector<27x128xbf16>
    %cst = arith.constant dense<0.000000e+00> : vector<128x128xf32>
    %2 = tpu.matmul %0, %1, %cst {dimension_numbers = #tpu.dot_dimension_numbers<[1], [0], [0], [1], [0, 0, 1, 1], [], []>} : vector<128x27xbf16>, vector<27x128xbf16>, vector<128x128xf32> -> vector<128x128xf32>
    %c0_3 = arith.constant 0 : index
    %c0_4 = arith.constant 0 : index
    %3 = vector.load %arg3[%c0_3, %c0_4] : memref<1x128xf32, #tpu.memory_space<vmem>>, vector<1x128xf32>
    %4 = vector.broadcast %3 : vector<1x128xf32> to vector<128x128xf32>
    %5 = arith.addf %2, %4 : vector<128x128xf32>
    %cst_5 = arith.constant 0.000000e+00 : f32
    %6 = vector.broadcast %cst_5 : f32 to vector<128x128xf32>
    %7 = arith.maximumf %5, %6 : vector<128x128xf32>
    %c0_6 = arith.constant 0 : index
    %c0_7 = arith.constant 0 : index
    %8 = vector.load %arg4[%c0_6, %c0_7] : memref<128x128xf32, #tpu.memory_space<vmem>>, vector<128x128xf32>
    tpu.vector_store %arg4[%c0_6, %c0_7], %7 {strides = array<i32>} : memref<128x128xf32, #tpu.memory_space<vmem>>, vector<128x128xf32>,
    return
  }
  func.func @transform_0(%arg0: i32) -> (i32, i32) {
    %c0_i32 = arith.constant 0 : i32
    %c0_i32_0 = arith.constant 0 : i32
    %c0_i32_1 = arith.constant 0 : i32
    return %c0_i32, %c0_i32_0 : i32, i32
  }
  func.func @transform_1(%arg0: i32) -> (i32, i32) {
    %c0_i32 = arith.constant 0 : i32
    %c0_i32_0 = arith.constant 0 : i32
    %c0_i32_1 = arith.constant 0 : i32
    return %c0_i32, %c0_i32_0 : i32, i32
  }
  func.func @transform_2(%arg0: i32) -> (i32, i32) {
    %c0_i32 = arith.constant 0 : i32
    %c0_i32_0 = arith.constant 0 : i32
    %c0_i32_1 = arith.constant 0 : i32
    return %c0_i32, %c0_i32_0 : i32, i32
  }
  func.func @transform_3(%arg0: i32) -> (i32, i32) {
    %c0_i32 = arith.constant 0 : i32
    %c0_i32_0 = arith.constant 0 : i32
    %c0_i32_1 = arith.constant 0 : i32
    return %c0_i32, %c0_i32_0 : i32, i32
  }
}

module attributes {stable_mosaic.version = 11 : i64} {
  func.func @_gemm_kernel(%arg0: i32, %arg1: memref<32x144xbf16, #tpu.memory_space<vmem>>, %arg2: memref<144x128xbf16, #tpu.memory_space<vmem>>, %arg3: memref<1x128xf32, #tpu.memory_space<vmem>>, %arg4: memref<32x128xf32, #tpu.memory_space<vmem>>) attributes {dimension_semantics = [#tpu.dimension_semantics<arbitrary>], iteration_bounds = array<i64: 1>, scalar_prefetch = 0 : i64, scratch_operands = 0 : i64, tpu.core_type = #tpu.core_type<tc>, window_params = [{pipeline_mode = #tpu.pipeline_mode<synchronous>, transform_indices = @transform_0, window_bounds = array<i64: 32, 144>}, {pipeline_mode = #tpu.pipeline_mode<synchronous>, transform_indices = @transform_1, window_bounds = array<i64: 144, 128>}, {pipeline_mode = #tpu.pipeline_mode<synchronous>, transform_indices = @transform_2, window_bounds = array<i64: 1, 128>}, {pipeline_mode = #tpu.pipeline_mode<synchronous>, transform_indices = @transform_3, window_bounds = array<i64: 32, 128>}]} {
    %c0 = arith.constant 0 : index
    %c0_0 = arith.constant 0 : index
    %0 = vector.load %arg1[%c0, %c0_0] : memref<32x144xbf16, #tpu.memory_space<vmem>>, vector<32x144xbf16>
    %c0_1 = arith.constant 0 : index
    %c0_2 = arith.constant 0 : index
    %1 = vector.load %arg2[%c0_1, %c0_2] : memref<144x128xbf16, #tpu.memory_space<vmem>>, vector<144x128xbf16>
    %cst = arith.constant dense<0.000000e+00> : vector<32x128xf32>
    %2 = tpu.matmul %0, %1, %cst {dimension_numbers = #tpu.dot_dimension_numbers<[1], [0], [0], [1], [0, 0, 1, 1], [], []>} : vector<32x144xbf16>, vector<144x128xbf16>, vector<32x128xf32> -> vector<32x128xf32>
    %c0_3 = arith.constant 0 : index
    %c0_4 = arith.constant 0 : index
    %3 = vector.load %arg3[%c0_3, %c0_4] : memref<1x128xf32, #tpu.memory_space<vmem>>, vector<1x128xf32>
    %4 = vector.broadcast %3 : vector<1x128xf32> to vector<32x128xf32>
    %5 = arith.addf %2, %4 : vector<32x128xf32>
    %cst_5 = arith.constant 0.000000e+00 : f32
    %6 = vector.broadcast %cst_5 : f32 to vector<32x128xf32>
    %7 = arith.maximumf %5, %6 : vector<32x128xf32>
    %c0_6 = arith.constant 0 : index
    %c0_7 = arith.constant 0 : index
    %8 = vector.load %arg4[%c0_6, %c0_7] : memref<32x128xf32, #tpu.memory_space<vmem>>, vector<32x128xf32>
    tpu.vector_store %arg4[%c0_6, %c0_7], %7 {strides = array<i32>} : memref<32x128xf32, #tpu.memory_space<vmem>>, vector<32x128xf32>,
    return
  }
  func.func @transform_0(%arg0: i32) -> (i32, i32) {
    %c0_i32 = arith.constant 0 : i32
    %c0_i32_0 = arith.constant 0 : i32
    %c0_i32_1 = arith.constant 0 : i32
    return %c0_i32, %c0_i32_0 : i32, i32
  }
  func.func @transform_1(%arg0: i32) -> (i32, i32) {
    %c0_i32 = arith.constant 0 : i32
    %c0_i32_0 = arith.constant 0 : i32
    %c0_i32_1 = arith.constant 0 : i32
    return %c0_i32, %c0_i32_0 : i32, i32
  }
  func.func @transform_2(%arg0: i32) -> (i32, i32) {
    %c0_i32 = arith.constant 0 : i32
    %c0_i32_0 = arith.constant 0 : i32
    %c0_i32_1 = arith.constant 0 : i32
    return %c0_i32, %c0_i32_0 : i32, i32
  }
  func.func @transform_3(%arg0: i32) -> (i32, i32) {
    %c0_i32 = arith.constant 0 : i32
    %c0_i32_0 = arith.constant 0 : i32
    %c0_i32_1 = arith.constant 0 : i32
    return %c0_i32, %c0_i32_0 : i32, i32
  }
}

module attributes {stable_mosaic.version = 11 : i64} {
  func.func @_neck_kernel(%arg0: i32, %arg1: memref<128x16xbf16, #tpu.memory_space<vmem>>, %arg2: memref<32x32xbf16, #tpu.memory_space<vmem>>, %arg3: memref<16x128xbf16, #tpu.memory_space<vmem>>, %arg4: memref<1x128xf32, #tpu.memory_space<vmem>>, %arg5: memref<32x128xbf16, #tpu.memory_space<vmem>>, %arg6: memref<1x128xf32, #tpu.memory_space<vmem>>, %arg7: memref<128x128xf32, #tpu.memory_space<vmem>>, %arg8: memref<32x128xf32, #tpu.memory_space<vmem>>) attributes {dimension_semantics = [#tpu.dimension_semantics<arbitrary>], iteration_bounds = array<i64: 1>, scalar_prefetch = 0 : i64, scratch_operands = 0 : i64, tpu.core_type = #tpu.core_type<tc>, window_params = [{pipeline_mode = #tpu.pipeline_mode<synchronous>, transform_indices = @transform_0, window_bounds = array<i64: 128, 16>}, {pipeline_mode = #tpu.pipeline_mode<synchronous>, transform_indices = @transform_1, window_bounds = array<i64: 32, 32>}, {pipeline_mode = #tpu.pipeline_mode<synchronous>, transform_indices = @transform_2, window_bounds = array<i64: 16, 128>}, {pipeline_mode = #tpu.pipeline_mode<synchronous>, transform_indices = @transform_3, window_bounds = array<i64: 1, 128>}, {pipeline_mode = #tpu.pipeline_mode<synchronous>, transform_indices = @transform_4, window_bounds = array<i64: 32, 128>}, {pipeline_mode = #tpu.pipeline_mode<synchronous>, transform_indices = @transform_5, window_bounds = array<i64: 1, 128>}, {pipeline_mode = #tpu.pipeline_mode<synchronous>, transform_indices = @transform_6, window_bounds = array<i64: 128, 128>}, {pipeline_mode = #tpu.pipeline_mode<synchronous>, transform_indices = @transform_7, window_bounds = array<i64: 32, 128>}]} {
    %c0 = arith.constant 0 : index
    %c0_0 = arith.constant 0 : index
    %0 = vector.load %arg1[%c0, %c0_0] : memref<128x16xbf16, #tpu.memory_space<vmem>>, vector<128x16xbf16>
    %c0_1 = arith.constant 0 : index
    %c0_2 = arith.constant 0 : index
    %1 = vector.load %arg3[%c0_1, %c0_2] : memref<16x128xbf16, #tpu.memory_space<vmem>>, vector<16x128xbf16>
    %cst = arith.constant dense<0.000000e+00> : vector<128x128xf32>
    %2 = tpu.matmul %0, %1, %cst {dimension_numbers = #tpu.dot_dimension_numbers<[1], [0], [0], [1], [0, 0, 1, 1], [], []>} : vector<128x16xbf16>, vector<16x128xbf16>, vector<128x128xf32> -> vector<128x128xf32>
    %c0_3 = arith.constant 0 : index
    %c0_4 = arith.constant 0 : index
    %3 = vector.load %arg4[%c0_3, %c0_4] : memref<1x128xf32, #tpu.memory_space<vmem>>, vector<1x128xf32>
    %4 = vector.broadcast %3 : vector<1x128xf32> to vector<128x128xf32>
    %5 = arith.addf %2, %4 : vector<128x128xf32>
    %c0_5 = arith.constant 0 : index
    %c0_6 = arith.constant 0 : index
    %6 = vector.load %arg7[%c0_5, %c0_6] : memref<128x128xf32, #tpu.memory_space<vmem>>, vector<128x128xf32>
    tpu.vector_store %arg7[%c0_5, %c0_6], %5 {strides = array<i32>} : memref<128x128xf32, #tpu.memory_space<vmem>>, vector<128x128xf32>,
    %c0_7 = arith.constant 0 : index
    %c0_8 = arith.constant 0 : index
    %7 = vector.load %arg2[%c0_7, %c0_8] : memref<32x32xbf16, #tpu.memory_space<vmem>>, vector<32x32xbf16>
    %c0_9 = arith.constant 0 : index
    %c0_10 = arith.constant 0 : index
    %8 = vector.load %arg5[%c0_9, %c0_10] : memref<32x128xbf16, #tpu.memory_space<vmem>>, vector<32x128xbf16>
    %cst_11 = arith.constant dense<0.000000e+00> : vector<32x128xf32>
    %9 = tpu.matmul %7, %8, %cst_11 {dimension_numbers = #tpu.dot_dimension_numbers<[1], [0], [0], [1], [0, 0, 1, 1], [], []>} : vector<32x32xbf16>, vector<32x128xbf16>, vector<32x128xf32> -> vector<32x128xf32>
    %c0_12 = arith.constant 0 : index
    %c0_13 = arith.constant 0 : index
    %10 = vector.load %arg6[%c0_12, %c0_13] : memref<1x128xf32, #tpu.memory_space<vmem>>, vector<1x128xf32>
    %11 = vector.broadcast %10 : vector<1x128xf32> to vector<32x128xf32>
    %12 = arith.addf %9, %11 : vector<32x128xf32>
    %c0_14 = arith.constant 0 : index
    %c0_15 = arith.constant 0 : index
    %13 = vector.load %arg8[%c0_14, %c0_15] : memref<32x128xf32, #tpu.memory_space<vmem>>, vector<32x128xf32>
    tpu.vector_store %arg8[%c0_14, %c0_15], %12 {strides = array<i32>} : memref<32x128xf32, #tpu.memory_space<vmem>>, vector<32x128xf32>,
    return
  }
  func.func @transform_0(%arg0: i32) -> (i32, i32) {
    %c0_i32 = arith.constant 0 : i32
    %c0_i32_0 = arith.constant 0 : i32
    %c0_i32_1 = arith.constant 0 : i32
    return %c0_i32, %c0_i32_0 : i32, i32
  }
  func.func @transform_1(%arg0: i32) -> (i32, i32) {
    %c0_i32 = arith.constant 0 : i32
    %c0_i32_0 = arith.constant 0 : i32
    %c0_i32_1 = arith.constant 0 : i32
    return %c0_i32, %c0_i32_0 : i32, i32
  }
  func.func @transform_2(%arg0: i32) -> (i32, i32) {
    %c0_i32 = arith.constant 0 : i32
    %c0_i32_0 = arith.constant 0 : i32
    %c0_i32_1 = arith.constant 0 : i32
    return %c0_i32, %c0_i32_0 : i32, i32
  }
  func.func @transform_3(%arg0: i32) -> (i32, i32) {
    %c0_i32 = arith.constant 0 : i32
    %c0_i32_0 = arith.constant 0 : i32
    %c0_i32_1 = arith.constant 0 : i32
    return %c0_i32, %c0_i32_0 : i32, i32
  }
  func.func @transform_4(%arg0: i32) -> (i32, i32) {
    %c0_i32 = arith.constant 0 : i32
    %c0_i32_0 = arith.constant 0 : i32
    %c0_i32_1 = arith.constant 0 : i32
    return %c0_i32, %c0_i32_0 : i32, i32
  }
  func.func @transform_5(%arg0: i32) -> (i32, i32) {
    %c0_i32 = arith.constant 0 : i32
    %c0_i32_0 = arith.constant 0 : i32
    %c0_i32_1 = arith.constant 0 : i32
    return %c0_i32, %c0_i32_0 : i32, i32
  }
  func.func @transform_6(%arg0: i32) -> (i32, i32) {
    %c0_i32 = arith.constant 0 : i32
    %c0_i32_0 = arith.constant 0 : i32
    %c0_i32_1 = arith.constant 0 : i32
    return %c0_i32, %c0_i32_0 : i32, i32
  }
  func.func @transform_7(%arg0: i32) -> (i32, i32) {
    %c0_i32 = arith.constant 0 : i32
    %c0_i32_0 = arith.constant 0 : i32
    %c0_i32_1 = arith.constant 0 : i32
    return %c0_i32, %c0_i32_0 : i32, i32
  }
}

module attributes {stable_mosaic.version = 11 : i64} {
  func.func @_rpn_head_kernel(%arg0: i32, %arg1: memref<160x288xbf16, #tpu.memory_space<vmem>>, %arg2: memref<288x32xbf16, #tpu.memory_space<vmem>>, %arg3: memref<1x32xf32, #tpu.memory_space<vmem>>, %arg4: memref<32x128xbf16, #tpu.memory_space<vmem>>, %arg5: memref<1x128xf32, #tpu.memory_space<vmem>>, %arg6: memref<160x128xf32, #tpu.memory_space<vmem>>, %arg7: memref<2x32xf32, #tpu.memory_space<vmem>>) attributes {dimension_semantics = [#tpu.dimension_semantics<arbitrary>], iteration_bounds = array<i64: 1>, scalar_prefetch = 0 : i64, scratch_operands = 0 : i64, tpu.core_type = #tpu.core_type<tc>, window_params = [{pipeline_mode = #tpu.pipeline_mode<synchronous>, transform_indices = @transform_0, window_bounds = array<i64: 160, 288>}, {pipeline_mode = #tpu.pipeline_mode<synchronous>, transform_indices = @transform_1, window_bounds = array<i64: 288, 32>}, {pipeline_mode = #tpu.pipeline_mode<synchronous>, transform_indices = @transform_2, window_bounds = array<i64: 1, 32>}, {pipeline_mode = #tpu.pipeline_mode<synchronous>, transform_indices = @transform_3, window_bounds = array<i64: 32, 128>}, {pipeline_mode = #tpu.pipeline_mode<synchronous>, transform_indices = @transform_4, window_bounds = array<i64: 1, 128>}, {pipeline_mode = #tpu.pipeline_mode<synchronous>, transform_indices = @transform_5, window_bounds = array<i64: 160, 128>}, {pipeline_mode = #tpu.pipeline_mode<synchronous>, transform_indices = @transform_6, window_bounds = array<i64: 2, 32>}]} {
    %c0 = arith.constant 0 : index
    %c0_0 = arith.constant 0 : index
    %0 = vector.load %arg1[%c0, %c0_0] : memref<160x288xbf16, #tpu.memory_space<vmem>>, vector<160x288xbf16>
    %c0_1 = arith.constant 0 : index
    %c0_2 = arith.constant 0 : index
    %1 = vector.load %arg2[%c0_1, %c0_2] : memref<288x32xbf16, #tpu.memory_space<vmem>>, vector<288x32xbf16>
    %cst = arith.constant dense<0.000000e+00> : vector<160x32xf32>
    %2 = tpu.matmul %0, %1, %cst {dimension_numbers = #tpu.dot_dimension_numbers<[1], [0], [0], [1], [0, 0, 1, 1], [], []>} : vector<160x288xbf16>, vector<288x32xbf16>, vector<160x32xf32> -> vector<160x32xf32>
    %c0_3 = arith.constant 0 : index
    %c0_4 = arith.constant 0 : index
    %3 = vector.load %arg3[%c0_3, %c0_4] : memref<1x32xf32, #tpu.memory_space<vmem>>, vector<1x32xf32>
    %4 = vector.broadcast %3 : vector<1x32xf32> to vector<160x32xf32>
    %5 = arith.addf %2, %4 : vector<160x32xf32>
    %cst_5 = arith.constant 0.000000e+00 : f32
    %6 = vector.broadcast %cst_5 : f32 to vector<160x32xf32>
    %7 = arith.maximumf %5, %6 : vector<160x32xf32>
    %8 = arith.truncf %7 : vector<160x32xf32> to vector<160x32xbf16>
    %c0_6 = arith.constant 0 : index
    %c0_7 = arith.constant 0 : index
    %9 = vector.load %arg4[%c0_6, %c0_7] : memref<32x128xbf16, #tpu.memory_space<vmem>>, vector<32x128xbf16>
    %cst_8 = arith.constant dense<0.000000e+00> : vector<160x128xf32>
    %10 = tpu.matmul %8, %9, %cst_8 {dimension_numbers = #tpu.dot_dimension_numbers<[1], [0], [0], [1], [0, 0, 1, 1], [], []>} : vector<160x32xbf16>, vector<32x128xbf16>, vector<160x128xf32> -> vector<160x128xf32>
    %c0_9 = arith.constant 0 : index
    %c0_10 = arith.constant 0 : index
    %11 = vector.load %arg5[%c0_9, %c0_10] : memref<1x128xf32, #tpu.memory_space<vmem>>, vector<1x128xf32>
    %12 = vector.broadcast %11 : vector<1x128xf32> to vector<160x128xf32>
    %13 = arith.addf %10, %12 : vector<160x128xf32>
    %c0_11 = arith.constant 0 : index
    %c0_12 = arith.constant 0 : index
    %14 = vector.load %arg6[%c0_11, %c0_12] : memref<160x128xf32, #tpu.memory_space<vmem>>, vector<160x128xf32>
    tpu.vector_store %arg6[%c0_11, %c0_12], %13 {strides = array<i32>} : memref<160x128xf32, #tpu.memory_space<vmem>>, vector<160x128xf32>,
    %15 = vector.extract_strided_slice %7 {offsets = [0, 0], sizes = [64, 32], strides = [1, 1]} : vector<160x32xf32> to vector<64x32xf32>
    %cst_13 = arith.constant dense<0.000000e+00> : vector<32xf32>
    %16 = vector.multi_reduction <add>, %15, %cst_13 [0] : vector<64x32xf32> to vector<32xf32>
    %17 = vector.shape_cast %16 : vector<32xf32> to vector<1x32xf32>
    %cst_14 = arith.constant 6.400000e+01 : f32
    %18 = vector.broadcast %cst_14 : f32 to vector<1x32xf32>
    %19 = arith.divf %17, %18 : vector<1x32xf32>
    %20 = vector.extract_strided_slice %7 {offsets = [64, 0], sizes = [64, 32], strides = [1, 1]} : vector<160x32xf32> to vector<64x32xf32>
    %cst_15 = arith.constant dense<0.000000e+00> : vector<32xf32>
    %21 = vector.multi_reduction <add>, %20, %cst_15 [0] : vector<64x32xf32> to vector<32xf32>
    %22 = vector.shape_cast %21 : vector<32xf32> to vector<1x32xf32>
    %cst_16 = arith.constant 6.400000e+01 : f32
    %23 = vector.broadcast %cst_16 : f32 to vector<1x32xf32>
    %24 = arith.divf %22, %23 : vector<1x32xf32>
    %25 = tpu.concatenate %19, %24 in 0 : vector<1x32xf32>, vector<1x32xf32> -> vector<2x32xf32>
    %c0_17 = arith.constant 0 : index
    %c0_18 = arith.constant 0 : index
    %26 = vector.load %arg7[%c0_17, %c0_18] : memref<2x32xf32, #tpu.memory_space<vmem>>, vector<2x32xf32>
    tpu.vector_store %arg7[%c0_17, %c0_18], %25 {strides = array<i32>} : memref<2x32xf32, #tpu.memory_space<vmem>>, vector<2x32xf32>,
    return
  }
  func.func @transform_0(%arg0: i32) -> (i32, i32) {
    %c0_i32 = arith.constant 0 : i32
    %c0_i32_0 = arith.constant 0 : i32
    %c0_i32_1 = arith.constant 0 : i32
    return %c0_i32, %c0_i32_0 : i32, i32
  }
  func.func @transform_1(%arg0: i32) -> (i32, i32) {
    %c0_i32 = arith.constant 0 : i32
    %c0_i32_0 = arith.constant 0 : i32
    %c0_i32_1 = arith.constant 0 : i32
    return %c0_i32, %c0_i32_0 : i32, i32
  }
  func.func @transform_2(%arg0: i32) -> (i32, i32) {
    %c0_i32 = arith.constant 0 : i32
    %c0_i32_0 = arith.constant 0 : i32
    %c0_i32_1 = arith.constant 0 : i32
    return %c0_i32, %c0_i32_0 : i32, i32
  }
  func.func @transform_3(%arg0: i32) -> (i32, i32) {
    %c0_i32 = arith.constant 0 : i32
    %c0_i32_0 = arith.constant 0 : i32
    %c0_i32_1 = arith.constant 0 : i32
    return %c0_i32, %c0_i32_0 : i32, i32
  }
  func.func @transform_4(%arg0: i32) -> (i32, i32) {
    %c0_i32 = arith.constant 0 : i32
    %c0_i32_0 = arith.constant 0 : i32
    %c0_i32_1 = arith.constant 0 : i32
    return %c0_i32, %c0_i32_0 : i32, i32
  }
  func.func @transform_5(%arg0: i32) -> (i32, i32) {
    %c0_i32 = arith.constant 0 : i32
    %c0_i32_0 = arith.constant 0 : i32
    %c0_i32_1 = arith.constant 0 : i32
    return %c0_i32, %c0_i32_0 : i32, i32
  }
  func.func @transform_6(%arg0: i32) -> (i32, i32) {
    %c0_i32 = arith.constant 0 : i32
    %c0_i32_0 = arith.constant 0 : i32
    %c0_i32_1 = arith.constant 0 : i32
    return %c0_i32, %c0_i32_0 : i32, i32
  }
}

module attributes {stable_mosaic.version = 11 : i64} {
  func.func @_delta2bbox_t_kernel(%arg0: i32, %arg1: memref<4x32xf32, #tpu.memory_space<vmem>>, %arg2: memref<4x32xf32, #tpu.memory_space<vmem>>, %arg3: memref<4x32xf32, #tpu.memory_space<vmem>>) attributes {dimension_semantics = [#tpu.dimension_semantics<arbitrary>], iteration_bounds = array<i64: 1>, scalar_prefetch = 0 : i64, scratch_operands = 0 : i64, tpu.core_type = #tpu.core_type<tc>, window_params = [{pipeline_mode = #tpu.pipeline_mode<synchronous>, transform_indices = @transform_0, window_bounds = array<i64: 4, 32>}, {pipeline_mode = #tpu.pipeline_mode<synchronous>, transform_indices = @transform_1, window_bounds = array<i64: 4, 32>}, {pipeline_mode = #tpu.pipeline_mode<synchronous>, transform_indices = @transform_2, window_bounds = array<i64: 4, 32>}]} {
    %c0 = arith.constant 0 : index
    %c0_0 = arith.constant 0 : index
    %0 = vector.load %arg1[%c0, %c0_0] : memref<4x32xf32, #tpu.memory_space<vmem>>, vector<4x32xf32>
    %c0_1 = arith.constant 0 : index
    %c0_2 = arith.constant 0 : index
    %1 = vector.load %arg2[%c0_1, %c0_2] : memref<4x32xf32, #tpu.memory_space<vmem>>, vector<4x32xf32>
    %2 = vector.extract_strided_slice %0 {offsets = [0, 0], sizes = [1, 32], strides = [1, 1]} : vector<4x32xf32> to vector<1x32xf32>
    %3 = vector.extract_strided_slice %0 {offsets = [1, 0], sizes = [1, 32], strides = [1, 1]} : vector<4x32xf32> to vector<1x32xf32>
    %4 = vector.extract_strided_slice %0 {offsets = [2, 0], sizes = [1, 32], strides = [1, 1]} : vector<4x32xf32> to vector<1x32xf32>
    %5 = vector.extract_strided_slice %0 {offsets = [3, 0], sizes = [1, 32], strides = [1, 1]} : vector<4x32xf32> to vector<1x32xf32>
    %6 = vector.extract_strided_slice %1 {offsets = [0, 0], sizes = [1, 32], strides = [1, 1]} : vector<4x32xf32> to vector<1x32xf32>
    %7 = vector.extract_strided_slice %1 {offsets = [1, 0], sizes = [1, 32], strides = [1, 1]} : vector<4x32xf32> to vector<1x32xf32>
    %8 = vector.extract_strided_slice %1 {offsets = [2, 0], sizes = [1, 32], strides = [1, 1]} : vector<4x32xf32> to vector<1x32xf32>
    %9 = vector.extract_strided_slice %1 {offsets = [3, 0], sizes = [1, 32], strides = [1, 1]} : vector<4x32xf32> to vector<1x32xf32>
    %cst = arith.constant -4.13516665 : f32
    %cst_3 = arith.constant 4.13516665 : f32
    %10 = vector.broadcast %cst : f32 to vector<1x32xf32>
    %11 = arith.maximumf %10, %8 : vector<1x32xf32>
    %12 = vector.broadcast %cst_3 : f32 to vector<1x32xf32>
    %13 = arith.minimumf %12, %11 : vector<1x32xf32>
    %cst_4 = arith.constant -4.13516665 : f32
    %cst_5 = arith.constant 4.13516665 : f32
    %14 = vector.broadcast %cst_4 : f32 to vector<1x32xf32>
    %15 = arith.maximumf %14, %9 : vector<1x32xf32>
    %16 = vector.broadcast %cst_5 : f32 to vector<1x32xf32>
    %17 = arith.minimumf %16, %15 : vector<1x32xf32>
    %18 = arith.addf %2, %4 : vector<1x32xf32>
    %cst_6 = arith.constant 5.000000e-01 : f32
    %19 = vector.broadcast %cst_6 : f32 to vector<1x32xf32>
    %20 = arith.mulf %18, %19 : vector<1x32xf32>
    %21 = arith.addf %3, %5 : vector<1x32xf32>
    %cst_7 = arith.constant 5.000000e-01 : f32
    %22 = vector.broadcast %cst_7 : f32 to vector<1x32xf32>
    %23 = arith.mulf %21, %22 : vector<1x32xf32>
    %24 = arith.subf %4, %2 : vector<1x32xf32>
    %cst_8 = arith.constant 1.000000e+00 : f32
    %25 = vector.broadcast %cst_8 : f32 to vector<1x32xf32>
    %26 = arith.addf %24, %25 : vector<1x32xf32>
    %27 = arith.subf %5, %3 : vector<1x32xf32>
    %cst_9 = arith.constant 1.000000e+00 : f32
    %28 = vector.broadcast %cst_9 : f32 to vector<1x32xf32>
    %29 = arith.addf %27, %28 : vector<1x32xf32>
    %30 = math.exp %13 : vector<1x32xf32>
    %31 = arith.mulf %26, %30 : vector<1x32xf32>
    %32 = math.exp %17 : vector<1x32xf32>
    %33 = arith.mulf %29, %32 : vector<1x32xf32>
    %34 = arith.mulf %26, %6 : vector<1x32xf32>
    %35 = arith.addf %20, %34 : vector<1x32xf32>
    %36 = arith.mulf %29, %7 : vector<1x32xf32>
    %37 = arith.addf %23, %36 : vector<1x32xf32>
    %cst_10 = arith.constant 1.000000e+00 : f32
    %38 = vector.broadcast %cst_10 : f32 to vector<1x32xf32>
    %39 = arith.subf %31, %38 : vector<1x32xf32>
    %cst_11 = arith.constant 5.000000e-01 : f32
    %40 = vector.broadcast %cst_11 : f32 to vector<1x32xf32>
    %41 = arith.mulf %39, %40 : vector<1x32xf32>
    %42 = arith.subf %35, %41 : vector<1x32xf32>
    %cst_12 = arith.constant 0.000000e+00 : f32
    %cst_13 = arith.constant 1.500000e+01 : f32
    %43 = vector.broadcast %cst_12 : f32 to vector<1x32xf32>
    %44 = arith.maximumf %43, %42 : vector<1x32xf32>
    %45 = vector.broadcast %cst_13 : f32 to vector<1x32xf32>
    %46 = arith.minimumf %45, %44 : vector<1x32xf32>
    %cst_14 = arith.constant 1.000000e+00 : f32
    %47 = vector.broadcast %cst_14 : f32 to vector<1x32xf32>
    %48 = arith.subf %33, %47 : vector<1x32xf32>
    %cst_15 = arith.constant 5.000000e-01 : f32
    %49 = vector.broadcast %cst_15 : f32 to vector<1x32xf32>
    %50 = arith.mulf %48, %49 : vector<1x32xf32>
    %51 = arith.subf %37, %50 : vector<1x32xf32>
    %cst_16 = arith.constant 0.000000e+00 : f32
    %cst_17 = arith.constant 1.500000e+01 : f32
    %52 = vector.broadcast %cst_16 : f32 to vector<1x32xf32>
    %53 = arith.maximumf %52, %51 : vector<1x32xf32>
    %54 = vector.broadcast %cst_17 : f32 to vector<1x32xf32>
    %55 = arith.minimumf %54, %53 : vector<1x32xf32>
    %cst_18 = arith.constant 1.000000e+00 : f32
    %56 = vector.broadcast %cst_18 : f32 to vector<1x32xf32>
    %57 = arith.subf %31, %56 : vector<1x32xf32>
    %cst_19 = arith.constant 5.000000e-01 : f32
    %58 = vector.broadcast %cst_19 : f32 to vector<1x32xf32>
    %59 = arith.mulf %57, %58 : vector<1x32xf32>
    %60 = arith.addf %35, %59 : vector<1x32xf32>
    %cst_20 = arith.constant 0.000000e+00 : f32
    %cst_21 = arith.constant 1.500000e+01 : f32
    %61 = vector.broadcast %cst_20 : f32 to vector<1x32xf32>
    %62 = arith.maximumf %61, %60 : vector<1x32xf32>
    %63 = vector.broadcast %cst_21 : f32 to vector<1x32xf32>
    %64 = arith.minimumf %63, %62 : vector<1x32xf32>
    %cst_22 = arith.constant 1.000000e+00 : f32
    %65 = vector.broadcast %cst_22 : f32 to vector<1x32xf32>
    %66 = arith.subf %33, %65 : vector<1x32xf32>
    %cst_23 = arith.constant 5.000000e-01 : f32
    %67 = vector.broadcast %cst_23 : f32 to vector<1x32xf32>
    %68 = arith.mulf %66, %67 : vector<1x32xf32>
    %69 = arith.addf %37, %68 : vector<1x32xf32>
    %cst_24 = arith.constant 0.000000e+00 : f32
    %cst_25 = arith.constant 1.500000e+01 : f32
    %70 = vector.broadcast %cst_24 : f32 to vector<1x32xf32>
    %71 = arith.maximumf %70, %69 : vector<1x32xf32>
    %72 = vector.broadcast %cst_25 : f32 to vector<1x32xf32>
    %73 = arith.minimumf %72, %71 : vector<1x32xf32>
    %74 = tpu.concatenate %46, %55, %64, %73 in 0 : vector<1x32xf32>, vector<1x32xf32>, vector<1x32xf32>, vector<1x32xf32> -> vector<4x32xf32>
    %c0_26 = arith.constant 0 : index
    %c0_27 = arith.constant 0 : index
    %75 = vector.load %arg3[%c0_26, %c0_27] : memref<4x32xf32, #tpu.memory_space<vmem>>, vector<4x32xf32>
    tpu.vector_store %arg3[%c0_26, %c0_27], %74 {strides = array<i32>} : memref<4x32xf32, #tpu.memory_space<vmem>>, vector<4x32xf32>,
    return
  }
  func.func @transform_0(%arg0: i32) -> (i32, i32) {
    %c0_i32 = arith.constant 0 : i32
    %c0_i32_0 = arith.constant 0 : i32
    %c0_i32_1 = arith.constant 0 : i32
    return %c0_i32, %c0_i32_0 : i32, i32
  }
  func.func @transform_1(%arg0: i32) -> (i32, i32) {
    %c0_i32 = arith.constant 0 : i32
    %c0_i32_0 = arith.constant 0 : i32
    %c0_i32_1 = arith.constant 0 : i32
    return %c0_i32, %c0_i32_0 : i32, i32
  }
  func.func @transform_2(%arg0: i32) -> (i32, i32) {
    %c0_i32 = arith.constant 0 : i32
    %c0_i32_0 = arith.constant 0 : i32
    %c0_i32_1 = arith.constant 0 : i32
    return %c0_i32, %c0_i32_0 : i32, i32
  }
}

module attributes {stable_mosaic.version = 11 : i64} {
  func.func @_bbox_det_kernel(%arg0: i32, %arg1: memref<32x1568xbf16, #tpu.memory_space<vmem>>, %arg2: memref<1x32xbf16, #tpu.memory_space<vmem>>, %arg3: memref<32x5xf32, #tpu.memory_space<vmem>>, %arg4: memref<1568x128xbf16, #tpu.memory_space<vmem>>, %arg5: memref<1x128xf32, #tpu.memory_space<vmem>>, %arg6: memref<32x32xbf16, #tpu.memory_space<vmem>>, %arg7: memref<1x32xf32, #tpu.memory_space<vmem>>, %arg8: memref<32x128xbf16, #tpu.memory_space<vmem>>, %arg9: memref<1x128xf32, #tpu.memory_space<vmem>>, %arg10: memref<128x128xbf16, #tpu.memory_space<vmem>>, %arg11: memref<1x128xf32, #tpu.memory_space<vmem>>, %arg12: memref<128x128xbf16, #tpu.memory_space<vmem>>, %arg13: memref<1x128xf32, #tpu.memory_space<vmem>>, %arg14: memref<32x8xf32, #tpu.memory_space<vmem>>) attributes {dimension_semantics = [#tpu.dimension_semantics<arbitrary>], iteration_bounds = array<i64: 1>, scalar_prefetch = 0 : i64, scratch_operands = 0 : i64, tpu.core_type = #tpu.core_type<tc>, window_params = [{pipeline_mode = #tpu.pipeline_mode<synchronous>, transform_indices = @transform_0, window_bounds = array<i64: 32, 1568>}, {pipeline_mode = #tpu.pipeline_mode<synchronous>, transform_indices = @transform_1, window_bounds = array<i64: 1, 32>}, {pipeline_mode = #tpu.pipeline_mode<synchronous>, transform_indices = @transform_2, window_bounds = array<i64: 32, 5>}, {pipeline_mode = #tpu.pipeline_mode<synchronous>, transform_indices = @transform_3, window_bounds = array<i64: 1568, 128>}, {pipeline_mode = #tpu.pipeline_mode<synchronous>, transform_indices = @transform_4, window_bounds = array<i64: 1, 128>}, {pipeline_mode = #tpu.pipeline_mode<synchronous>, transform_indices = @transform_5, window_bounds = array<i64: 32, 32>}, {pipeline_mode = #tpu.pipeline_mode<synchronous>, transform_indices = @transform_6, window_bounds = array<i64: 1, 32>}, {pipeline_mode = #tpu.pipeline_mode<synchronous>, transform_indices = @transform_7, window_bounds = array<i64: 32, 128>}, {pipeline_mode = #tpu.pipeline_mode<synchronous>, transform_indices = @transform_8, window_bounds = array<i64: 1, 128>}, {pipeline_mode = #tpu.pipeline_mode<synchronous>, transform_indices = @transform_9, window_bounds = array<i64: 128, 128>}, {pipeline_mode = #tpu.pipeline_mode<synchronous>, transform_indices = @transform_10, window_bounds = array<i64: 1, 128>}, {pipeline_mode = #tpu.pipeline_mode<synchronous>, transform_indices = @transform_11, window_bounds = array<i64: 128, 128>}, {pipeline_mode = #tpu.pipeline_mode<synchronous>, transform_indices = @transform_12, window_bounds = array<i64: 1, 128>}, {pipeline_mode = #tpu.pipeline_mode<synchronous>, transform_indices = @transform_13, window_bounds = array<i64: 32, 8>}]} {
    %c0 = arith.constant 0 : index
    %c0_0 = arith.constant 0 : index
    %0 = vector.load %arg1[%c0, %c0_0] : memref<32x1568xbf16, #tpu.memory_space<vmem>>, vector<32x1568xbf16>
    %c0_1 = arith.constant 0 : index
    %c0_2 = arith.constant 0 : index
    %1 = vector.load %arg4[%c0_1, %c0_2] : memref<1568x128xbf16, #tpu.memory_space<vmem>>, vector<1568x128xbf16>
    %cst = arith.constant dense<0.000000e+00> : vector<32x128xf32>
    %2 = tpu.matmul %0, %1, %cst {dimension_numbers = #tpu.dot_dimension_numbers<[1], [0], [0], [1], [0, 0, 1, 1], [], []>} : vector<32x1568xbf16>, vector<1568x128xbf16>, vector<32x128xf32> -> vector<32x128xf32>
    %c0_3 = arith.constant 0 : index
    %c0_4 = arith.constant 0 : index
    %3 = vector.load %arg5[%c0_3, %c0_4] : memref<1x128xf32, #tpu.memory_space<vmem>>, vector<1x128xf32>
    %4 = vector.broadcast %3 : vector<1x128xf32> to vector<32x128xf32>
    %5 = arith.addf %2, %4 : vector<32x128xf32>
    %c0_5 = arith.constant 0 : index
    %c0_6 = arith.constant 0 : index
    %6 = vector.load %arg2[%c0_5, %c0_6] : memref<1x32xbf16, #tpu.memory_space<vmem>>, vector<1x32xbf16>
    %c0_7 = arith.constant 0 : index
    %c0_8 = arith.constant 0 : index
    %7 = vector.load %arg6[%c0_7, %c0_8] : memref<32x32xbf16, #tpu.memory_space<vmem>>, vector<32x32xbf16>
    %cst_9 = arith.constant dense<0.000000e+00> : vector<1x32xf32>
    %8 = tpu.matmul %6, %7, %cst_9 {dimension_numbers = #tpu.dot_dimension_numbers<[1], [0], [0], [1], [0, 0, 1, 1], [], []>} : vector<1x32xbf16>, vector<32x32xbf16>, vector<1x32xf32> -> vector<1x32xf32>
    %c0_10 = arith.constant 0 : index
    %c0_11 = arith.constant 0 : index
    %9 = vector.load %arg7[%c0_10, %c0_11] : memref<1x32xf32, #tpu.memory_space<vmem>>, vector<1x32xf32>
    %10 = arith.addf %8, %9 : vector<1x32xf32>
    %cst_12 = arith.constant 0.000000e+00 : f32
    %11 = vector.broadcast %cst_12 : f32 to vector<1x32xf32>
    %12 = arith.maximumf %10, %11 : vector<1x32xf32>
    %13 = arith.truncf %12 : vector<1x32xf32> to vector<1x32xbf16>
    %c0_13 = arith.constant 0 : index
    %c0_14 = arith.constant 0 : index
    %14 = vector.load %arg8[%c0_13, %c0_14] : memref<32x128xbf16, #tpu.memory_space<vmem>>, vector<32x128xbf16>
    %cst_15 = arith.constant dense<0.000000e+00> : vector<1x128xf32>
    %15 = tpu.matmul %13, %14, %cst_15 {dimension_numbers = #tpu.dot_dimension_numbers<[1], [0], [0], [1], [0, 0, 1, 1], [], []>} : vector<1x32xbf16>, vector<32x128xbf16>, vector<1x128xf32> -> vector<1x128xf32>
    %c0_16 = arith.constant 0 : index
    %c0_17 = arith.constant 0 : index
    %16 = vector.load %arg9[%c0_16, %c0_17] : memref<1x128xf32, #tpu.memory_space<vmem>>, vector<1x128xf32>
    %17 = arith.addf %15, %16 : vector<1x128xf32>
    %18 = vector.broadcast %17 : vector<1x128xf32> to vector<32x128xf32>
    %19 = arith.addf %5, %18 : vector<32x128xf32>
    %cst_18 = arith.constant 0.000000e+00 : f32
    %20 = vector.broadcast %cst_18 : f32 to vector<32x128xf32>
    %21 = arith.maximumf %19, %20 : vector<32x128xf32>
    %22 = arith.truncf %21 : vector<32x128xf32> to vector<32x128xbf16>
    %c0_19 = arith.constant 0 : index
    %c0_20 = arith.constant 0 : index
    %23 = vector.load %arg10[%c0_19, %c0_20] : memref<128x128xbf16, #tpu.memory_space<vmem>>, vector<128x128xbf16>
    %cst_21 = arith.constant dense<0.000000e+00> : vector<32x128xf32>
    %24 = tpu.matmul %22, %23, %cst_21 {dimension_numbers = #tpu.dot_dimension_numbers<[1], [0], [0], [1], [0, 0, 1, 1], [], []>} : vector<32x128xbf16>, vector<128x128xbf16>, vector<32x128xf32> -> vector<32x128xf32>
    %c0_22 = arith.constant 0 : index
    %c0_23 = arith.constant 0 : index
    %25 = vector.load %arg11[%c0_22, %c0_23] : memref<1x128xf32, #tpu.memory_space<vmem>>, vector<1x128xf32>
    %26 = vector.broadcast %25 : vector<1x128xf32> to vector<32x128xf32>
    %27 = arith.addf %24, %26 : vector<32x128xf32>
    %cst_24 = arith.constant 0.000000e+00 : f32
    %28 = vector.broadcast %cst_24 : f32 to vector<32x128xf32>
    %29 = arith.maximumf %27, %28 : vector<32x128xf32>
    %30 = arith.truncf %29 : vector<32x128xf32> to vector<32x128xbf16>
    %c0_25 = arith.constant 0 : index
    %c0_26 = arith.constant 0 : index
    %31 = vector.load %arg12[%c0_25, %c0_26] : memref<128x128xbf16, #tpu.memory_space<vmem>>, vector<128x128xbf16>
    %cst_27 = arith.constant dense<0.000000e+00> : vector<32x128xf32>
    %32 = tpu.matmul %30, %31, %cst_27 {dimension_numbers = #tpu.dot_dimension_numbers<[1], [0], [0], [1], [0, 0, 1, 1], [], []>} : vector<32x128xbf16>, vector<128x128xbf16>, vector<32x128xf32> -> vector<32x128xf32>
    %c0_28 = arith.constant 0 : index
    %c0_29 = arith.constant 0 : index
    %33 = vector.load %arg13[%c0_28, %c0_29] : memref<1x128xf32, #tpu.memory_space<vmem>>, vector<1x128xf32>
    %34 = vector.broadcast %33 : vector<1x128xf32> to vector<32x128xf32>
    %35 = arith.addf %32, %34 : vector<32x128xf32>
    %36 = vector.extract_strided_slice %35 {offsets = [0, 0], sizes = [32, 5], strides = [1, 1]} : vector<32x128xf32> to vector<32x5xf32>
    %37 = vector.extract_strided_slice %35 {offsets = [0, 5], sizes = [32, 4], strides = [1, 1]} : vector<32x128xf32> to vector<32x4xf32>
    %cst_30 = arith.constant dense<0xFF800000> : vector<32xf32>
    %38 = vector.multi_reduction <maximumf>, %36, %cst_30 [1] : vector<32x5xf32> to vector<32xf32>
    %39 = vector.shape_cast %38 : vector<32xf32> to vector<32x1xf32>
    %40 = vector.broadcast %39 : vector<32x1xf32> to vector<32x5xf32>
    %41 = arith.subf %36, %40 : vector<32x5xf32>
    %42 = math.exp %41 : vector<32x5xf32>
    %cst_31 = arith.constant dense<0.000000e+00> : vector<32xf32>
    %43 = vector.multi_reduction <add>, %42, %cst_31 [1] : vector<32x5xf32> to vector<32xf32>
    %44 = vector.shape_cast %43 : vector<32xf32> to vector<32x1xf32>
    %45 = tpu.reciprocal %44 {approx = true} : vector<32x1xf32> -> vector<32x1xf32>
    %46 = vector.broadcast %45 : vector<32x1xf32> to vector<32x5xf32>
    %47 = arith.mulf %42, %46 : vector<32x5xf32>
    %48 = vector.extract_strided_slice %47 {offsets = [0, 1], sizes = [32, 4], strides = [1, 1]} : vector<32x5xf32> to vector<32x4xf32>
    %cst_32 = arith.constant dense<0xFF800000> : vector<32xf32>
    %49 = vector.multi_reduction <maximumf>, %48, %cst_32 [1] : vector<32x4xf32> to vector<32xf32>
    %50 = vector.shape_cast %49 : vector<32xf32> to vector<32x1xf32>
    %51 = tpu.iota {dimensions = array<i32: 1>} : vector<32x4xi32>
    %52 = arith.sitofp %51 : vector<32x4xi32> to vector<32x4xf32>
    %53 = vector.broadcast %50 : vector<32x1xf32> to vector<32x4xf32>
    %54 = arith.cmpf oge, %48, %53 : vector<32x4xf32>
    %cst_33 = arith.constant 4.000000e+00 : f32
    %55 = vector.broadcast %cst_33 : f32 to vector<32x4xf32>
    %56 = arith.select %54, %52, %55 : vector<32x4xi1>, vector<32x4xf32>
    %cst_34 = arith.constant dense<0x7F800000> : vector<32xf32>
    %57 = vector.multi_reduction <minimumf>, %56, %cst_34 [1] : vector<32x4xf32> to vector<32xf32>
    %58 = vector.shape_cast %57 : vector<32xf32> to vector<32x1xf32>
    %c0_35 = arith.constant 0 : index
    %c0_36 = arith.constant 0 : index
    %59 = vector.load %arg3[%c0_35, %c0_36] : memref<32x5xf32, #tpu.memory_space<vmem>>, vector<32x5xf32>
    %60 = vector.extract_strided_slice %59 {offsets = [0, 1], sizes = [32, 1], strides = [1, 1]} : vector<32x5xf32> to vector<32x1xf32>
    %61 = vector.extract_strided_slice %59 {offsets = [0, 2], sizes = [32, 1], strides = [1, 1]} : vector<32x5xf32> to vector<32x1xf32>
    %62 = vector.extract_strided_slice %59 {offsets = [0, 3], sizes = [32, 1], strides = [1, 1]} : vector<32x5xf32> to vector<32x1xf32>
    %63 = vector.extract_strided_slice %59 {offsets = [0, 4], sizes = [32, 1], strides = [1, 1]} : vector<32x5xf32> to vector<32x1xf32>
    %64 = vector.extract_strided_slice %37 {offsets = [0, 0], sizes = [32, 1], strides = [1, 1]} : vector<32x4xf32> to vector<32x1xf32>
    %65 = vector.extract_strided_slice %37 {offsets = [0, 1], sizes = [32, 1], strides = [1, 1]} : vector<32x4xf32> to vector<32x1xf32>
    %66 = vector.extract_strided_slice %37 {offsets = [0, 2], sizes = [32, 1], strides = [1, 1]} : vector<32x4xf32> to vector<32x1xf32>
    %67 = vector.extract_strided_slice %37 {offsets = [0, 3], sizes = [32, 1], strides = [1, 1]} : vector<32x4xf32> to vector<32x1xf32>
    %cst_37 = arith.constant -4.13516665 : f32
    %cst_38 = arith.constant 4.13516665 : f32
    %68 = vector.broadcast %cst_37 : f32 to vector<32x1xf32>
    %69 = arith.maximumf %68, %66 : vector<32x1xf32>
    %70 = vector.broadcast %cst_38 : f32 to vector<32x1xf32>
    %71 = arith.minimumf %70, %69 : vector<32x1xf32>
    %cst_39 = arith.constant -4.13516665 : f32
    %cst_40 = arith.constant 4.13516665 : f32
    %72 = vector.broadcast %cst_39 : f32 to vector<32x1xf32>
    %73 = arith.maximumf %72, %67 : vector<32x1xf32>
    %74 = vector.broadcast %cst_40 : f32 to vector<32x1xf32>
    %75 = arith.minimumf %74, %73 : vector<32x1xf32>
    %76 = arith.addf %60, %62 : vector<32x1xf32>
    %cst_41 = arith.constant 5.000000e-01 : f32
    %77 = vector.broadcast %cst_41 : f32 to vector<32x1xf32>
    %78 = arith.mulf %76, %77 : vector<32x1xf32>
    %79 = arith.addf %61, %63 : vector<32x1xf32>
    %cst_42 = arith.constant 5.000000e-01 : f32
    %80 = vector.broadcast %cst_42 : f32 to vector<32x1xf32>
    %81 = arith.mulf %79, %80 : vector<32x1xf32>
    %82 = arith.subf %62, %60 : vector<32x1xf32>
    %cst_43 = arith.constant 1.000000e+00 : f32
    %83 = vector.broadcast %cst_43 : f32 to vector<32x1xf32>
    %84 = arith.addf %82, %83 : vector<32x1xf32>
    %85 = arith.subf %63, %61 : vector<32x1xf32>
    %cst_44 = arith.constant 1.000000e+00 : f32
    %86 = vector.broadcast %cst_44 : f32 to vector<32x1xf32>
    %87 = arith.addf %85, %86 : vector<32x1xf32>
    %88 = math.exp %71 : vector<32x1xf32>
    %89 = arith.mulf %84, %88 : vector<32x1xf32>
    %90 = math.exp %75 : vector<32x1xf32>
    %91 = arith.mulf %87, %90 : vector<32x1xf32>
    %92 = arith.mulf %84, %64 : vector<32x1xf32>
    %93 = arith.addf %78, %92 : vector<32x1xf32>
    %94 = arith.mulf %87, %65 : vector<32x1xf32>
    %95 = arith.addf %81, %94 : vector<32x1xf32>
    %cst_45 = arith.constant 1.000000e+00 : f32
    %96 = vector.broadcast %cst_45 : f32 to vector<32x1xf32>
    %97 = arith.subf %89, %96 : vector<32x1xf32>
    %cst_46 = arith.constant 5.000000e-01 : f32
    %98 = vector.broadcast %cst_46 : f32 to vector<32x1xf32>
    %99 = arith.mulf %97, %98 : vector<32x1xf32>
    %100 = arith.subf %93, %99 : vector<32x1xf32>
    %cst_47 = arith.constant 0.000000e+00 : f32
    %cst_48 = arith.constant 1.500000e+01 : f32
    %101 = vector.broadcast %cst_47 : f32 to vector<32x1xf32>
    %102 = arith.maximumf %101, %100 : vector<32x1xf32>
    %103 = vector.broadcast %cst_48 : f32 to vector<32x1xf32>
    %104 = arith.minimumf %103, %102 : vector<32x1xf32>
    %cst_49 = arith.constant 1.000000e+00 : f32
    %105 = vector.broadcast %cst_49 : f32 to vector<32x1xf32>
    %106 = arith.subf %91, %105 : vector<32x1xf32>
    %cst_50 = arith.constant 5.000000e-01 : f32
    %107 = vector.broadcast %cst_50 : f32 to vector<32x1xf32>
    %108 = arith.mulf %106, %107 : vector<32x1xf32>
    %109 = arith.subf %95, %108 : vector<32x1xf32>
    %cst_51 = arith.constant 0.000000e+00 : f32
    %cst_52 = arith.constant 1.500000e+01 : f32
    %110 = vector.broadcast %cst_51 : f32 to vector<32x1xf32>
    %111 = arith.maximumf %110, %109 : vector<32x1xf32>
    %112 = vector.broadcast %cst_52 : f32 to vector<32x1xf32>
    %113 = arith.minimumf %112, %111 : vector<32x1xf32>
    %cst_53 = arith.constant 1.000000e+00 : f32
    %114 = vector.broadcast %cst_53 : f32 to vector<32x1xf32>
    %115 = arith.subf %89, %114 : vector<32x1xf32>
    %cst_54 = arith.constant 5.000000e-01 : f32
    %116 = vector.broadcast %cst_54 : f32 to vector<32x1xf32>
    %117 = arith.mulf %115, %116 : vector<32x1xf32>
    %118 = arith.addf %93, %117 : vector<32x1xf32>
    %cst_55 = arith.constant 0.000000e+00 : f32
    %cst_56 = arith.constant 1.500000e+01 : f32
    %119 = vector.broadcast %cst_55 : f32 to vector<32x1xf32>
    %120 = arith.maximumf %119, %118 : vector<32x1xf32>
    %121 = vector.broadcast %cst_56 : f32 to vector<32x1xf32>
    %122 = arith.minimumf %121, %120 : vector<32x1xf32>
    %cst_57 = arith.constant 1.000000e+00 : f32
    %123 = vector.broadcast %cst_57 : f32 to vector<32x1xf32>
    %124 = arith.subf %91, %123 : vector<32x1xf32>
    %cst_58 = arith.constant 5.000000e-01 : f32
    %125 = vector.broadcast %cst_58 : f32 to vector<32x1xf32>
    %126 = arith.mulf %124, %125 : vector<32x1xf32>
    %127 = arith.addf %95, %126 : vector<32x1xf32>
    %cst_59 = arith.constant 0.000000e+00 : f32
    %cst_60 = arith.constant 1.500000e+01 : f32
    %128 = vector.broadcast %cst_59 : f32 to vector<32x1xf32>
    %129 = arith.maximumf %128, %127 : vector<32x1xf32>
    %130 = vector.broadcast %cst_60 : f32 to vector<32x1xf32>
    %131 = arith.minimumf %130, %129 : vector<32x1xf32>
    %cst_61 = arith.constant 0.000000e+00 : f32
    %132 = vector.broadcast %cst_61 : f32 to vector<32x1xf32>
    %133 = tpu.concatenate %104, %113, %122, %131, %50, %58, %132, %132 in 1 : vector<32x1xf32>, vector<32x1xf32>, vector<32x1xf32>, vector<32x1xf32>, vector<32x1xf32>, vector<32x1xf32>, vector<32x1xf32>, vector<32x1xf32> -> vector<32x8xf32>
    %c0_62 = arith.constant 0 : index
    %c0_63 = arith.constant 0 : index
    %134 = vector.load %arg14[%c0_62, %c0_63] : memref<32x8xf32, #tpu.memory_space<vmem>>, vector<32x8xf32>
    tpu.vector_store %arg14[%c0_62, %c0_63], %133 {strides = array<i32>} : memref<32x8xf32, #tpu.memory_space<vmem>>, vector<32x8xf32>,
    return
  }
  func.func @transform_0(%arg0: i32) -> (i32, i32) {
    %c0_i32 = arith.constant 0 : i32
    %c0_i32_0 = arith.constant 0 : i32
    %c0_i32_1 = arith.constant 0 : i32
    return %c0_i32, %c0_i32_0 : i32, i32
  }
  func.func @transform_1(%arg0: i32) -> (i32, i32) {
    %c0_i32 = arith.constant 0 : i32
    %c0_i32_0 = arith.constant 0 : i32
    %c0_i32_1 = arith.constant 0 : i32
    return %c0_i32, %c0_i32_0 : i32, i32
  }
  func.func @transform_2(%arg0: i32) -> (i32, i32) {
    %c0_i32 = arith.constant 0 : i32
    %c0_i32_0 = arith.constant 0 : i32
    %c0_i32_1 = arith.constant 0 : i32
    return %c0_i32, %c0_i32_0 : i32, i32
  }
  func.func @transform_3(%arg0: i32) -> (i32, i32) {
    %c0_i32 = arith.constant 0 : i32
    %c0_i32_0 = arith.constant 0 : i32
    %c0_i32_1 = arith.constant 0 : i32
    return %c0_i32, %c0_i32_0 : i32, i32
  }
  func.func @transform_4(%arg0: i32) -> (i32, i32) {
    %c0_i32 = arith.constant 0 : i32
    %c0_i32_0 = arith.constant 0 : i32
    %c0_i32_1 = arith.constant 0 : i32
    return %c0_i32, %c0_i32_0 : i32, i32
  }
  func.func @transform_5(%arg0: i32) -> (i32, i32) {
    %c0_i32 = arith.constant 0 : i32
    %c0_i32_0 = arith.constant 0 : i32
    %c0_i32_1 = arith.constant 0 : i32
    return %c0_i32, %c0_i32_0 : i32, i32
  }
  func.func @transform_6(%arg0: i32) -> (i32, i32) {
    %c0_i32 = arith.constant 0 : i32
    %c0_i32_0 = arith.constant 0 : i32
    %c0_i32_1 = arith.constant 0 : i32
    return %c0_i32, %c0_i32_0 : i32, i32
  }
  func.func @transform_7(%arg0: i32) -> (i32, i32) {
    %c0_i32 = arith.constant 0 : i32
    %c0_i32_0 = arith.constant 0 : i32
    %c0_i32_1 = arith.constant 0 : i32
    return %c0_i32, %c0_i32_0 : i32, i32
  }
  func.func @transform_8(%arg0: i32) -> (i32, i32) {
    %c0_i32 = arith.constant 0 : i32
    %c0_i32_0 = arith.constant 0 : i32
    %c0_i32_1 = arith.constant 0 : i32
    return %c0_i32, %c0_i32_0 : i32, i32
  }
  func.func @transform_9(%arg0: i32) -> (i32, i32) {
    %c0_i32 = arith.constant 0 : i32
    %c0_i32_0 = arith.constant 0 : i32
    %c0_i32_1 = arith.constant 0 : i32
    return %c0_i32, %c0_i32_0 : i32, i32
  }
  func.func @transform_10(%arg0: i32) -> (i32, i32) {
    %c0_i32 = arith.constant 0 : i32
    %c0_i32_0 = arith.constant 0 : i32
    %c0_i32_1 = arith.constant 0 : i32
    return %c0_i32, %c0_i32_0 : i32, i32
  }
  func.func @transform_11(%arg0: i32) -> (i32, i32) {
    %c0_i32 = arith.constant 0 : i32
    %c0_i32_0 = arith.constant 0 : i32
    %c0_i32_1 = arith.constant 0 : i32
    return %c0_i32, %c0_i32_0 : i32, i32
  }
  func.func @transform_12(%arg0: i32) -> (i32, i32) {
    %c0_i32 = arith.constant 0 : i32
    %c0_i32_0 = arith.constant 0 : i32
    %c0_i32_1 = arith.constant 0 : i32
    return %c0_i32, %c0_i32_0 : i32, i32
  }
  func.func @transform_13(%arg0: i32) -> (i32, i32) {
    %c0_i32 = arith.constant 0 : i32
    %c0_i32_0 = arith.constant 0 : i32
    %c0_i32_1 = arith.constant 0 : i32
    return %c0_i32, %c0_i32_0 : i32, i32
  }
}

</mosaic_0001>

<llo_original>
// kernel: onnx_model_forward.6
$region0: #{onnx_model_forward.6}
  #allocation0 [shape = 'u32[]', space=smem, size = 0x4, offset = 0x4, fixed_abs, tag = 'smem constant byte address 0x4 - core index']
  #allocation1 [shape = 'u32[144,128]{1,0:T(1,128)}', space=vmem, size = 0x12000, scoped, tag = 'internal scratch']
  %s0 = inlined_call_operand.vmem [shape: bf16[128,27], index: 0, kind: input, shape index: {}]
  %s1 = inlined_call_operand.vmem [shape: bf16[27,128], index: 1, kind: input, shape index: {}]
  %s2 = inlined_call_operand.vmem [shape: f32[1,128], index: 2, kind: input, shape index: {}]
  %s3 = inlined_call_operand.vmem [shape: f32[128,128], index: 3, kind: output, shape index: {}]
  %s4 = sld [smem:[#allocation0]]
  $region22: #{onnx_model_forward.6} parent=0
    _
  %s6 = ssub.s32 1, %s4
  %s7 = scalar_select 0, %s6, %s4
  // Predicated region
  $region2: #{onnx_model_forward.6} parent=0 // pred_check
    _
  $region3: #{onnx_model_forward.6} parent=0 // pred_check_branch
    %9 = sbr.rel (0) target = $region5
  $region4: #{onnx_model_forward.6} parent=0 // pred_region
    _
  $region5: #{onnx_model_forward.6} parent=0 // pred_fallthru
    _
  // Predicated region
  $region6: #{onnx_model_forward.6} parent=0 // pred_check
    _
  $region7: #{onnx_model_forward.6} parent=0 // pred_check_branch
    %11 = sbr.rel (0) target = $region9
  $region8: #{onnx_model_forward.6} parent=0 // pred_region
    _
  $region9: #{onnx_model_forward.6} parent=0 // pred_fallthru
    _
  // Predicated region
  $region10: #{onnx_model_forward.6} parent=0 // pred_check
    _
  $region11: #{onnx_model_forward.6} parent=0 // pred_check_branch
    %13 = sbr.rel (0) target = $region13
  $region12: #{onnx_model_forward.6} parent=0 // pred_region
    _
  $region13: #{onnx_model_forward.6} parent=0 // pred_fallthru
    _
  %v15 = vld [vmem:[%s0] sm:$0xf]
  %v16 = vld [vmem:[%s0 + $0x4] sm:$0xf]
  %v17 = vld [vmem:[%s0 + $0x8] sm:$0xf]
  %v18 = vld [vmem:[%s0 + $0xc] sm:$0xf]
  %v19 = vld [vmem:[%s0 + $0x10] sm:$0xf]
  %v20 = vld [vmem:[%s0 + $0x14] sm:$0xf]
  %v21 = vld [vmem:[%s0 + $0x18] sm:$0xf]
  %v22 = vld [vmem:[%s0 + $0x1c] sm:$0xf]
  %v23 = vld [vmem:[%s0 + $0x20] sm:$0xf]
  %v24 = vld [vmem:[%s0 + $0x24] sm:$0xf]
  %v25 = vld [vmem:[%s0 + $0x28] sm:$0xf]
  %v26 = vld [vmem:[%s0 + $0x2c] sm:$0xf]
  %v27 = vld [vmem:[%s0 + $0x30] sm:$0xf]
  %v28 = vld [vmem:[%s0 + $0x34] sm:$0xf]
  %v29 = vld [vmem:[%s0 + $0x38] sm:$0xf]
  %v30 = vld [vmem:[%s0 + $0x3c] sm:$0xf]
  %v31 = vld [vmem:[%s1] sm:$0xf]
  %v32 = vld [vmem:[%s1 + $0x4] sm:$0xf]
  %v33 = vld [vmem:[%s1 + $0x8] sm:$0xf]
  %v34 = vld [vmem:[%s1 + $0xc] sm:$0x3]
  %v35 = vld [vmem:[%s2] sm:$0x1]
  %v37 = vlaneseq
  %v38 = vshrl.u32 %v37, 7
  %v39 = vsub.s32 0, %v38
  %v40 = vrot.slane %v35, %v39
  %v58 = vunpack.c.l.b16 %v15
  %v59 = vunpack.c.l.b16 %v16
  %v60 = vunpack.c.l.b16 %v17
  %v61 = vunpack.c.l.b16 %v18
  %v62 = vunpack.c.l.b16 %v19
  %v63 = vunpack.c.l.b16 %v20
  %v64 = vunpack.c.l.b16 %v21
  %v65 = vunpack.c.l.b16 %v22
  %v66 = vunpack.c.l.b16 %v23
  %v67 = vunpack.c.l.b16 %v24
  %v68 = vunpack.c.l.b16 %v25
  %v69 = vunpack.c.l.b16 %v26
  %v70 = vunpack.c.l.b16 %v27
  %v71 = vunpack.c.l.b16 %v28
  %v72 = vunpack.c.l.b16 %v29
  %v73 = vunpack.c.l.b16 %v30
  %v74 = vpack.c.b16 %v59, %v58
  %v75 = vpack.c.b16 %v61, %v60
  %v76 = vpack.c.b16 %v63, %v62
  %v77 = vpack.c.b16 %v65, %v64
  %v78 = vpack.c.b16 %v67, %v66
  %v79 = vpack.c.b16 %v69, %v68
  %v80 = vpack.c.b16 %v71, %v70
  %v81 = vpack.c.b16 %v73, %v72
  %v86 = vunpack.c.l.b16 %v31
  %v87 = vunpack.c.l.b16 %v32
  %v88 = vunpack.c.l.b16 %v33
  %v89 = vunpack.c.l.b16 %v34
  %v90 = vpack.c.b16 %v87, %v86
  %v91 = vpack.c.b16 %v89, %v88
  %vm93 = vcmask 220160
  %v95 = vsel %vm93, %v74, 0
  %v98 = vsel %vm93, %v75, 0
  %v101 = vsel %vm93, %v76, 0
  %v104 = vsel %vm93, %v77, 0
  %v107 = vsel %vm93, %v78, 0
  %v110 = vsel %vm93, %v79, 0
  %v113 = vsel %vm93, %v80, 0
  %v116 = vsel %vm93, %v81, 0
  %vm118 = vcmask 1044480
  %vm119 = vcmask 1045504
  %v120 = vsel %vm118, 4294967295, 65535
  %v121 = vsel %vm119, %v120, 0
  %v123 = vand.u32 %v91, %v121
  %125 = vmatprep.subr.bf16.mxu0 0
  %126 = vmatpush1.bf16.msra.mxu0 %v90
  %127 = vmatprep.subr.bf16.mxu0 0
  %128 = vmatpush1.bf16.msra.mxu0 %v123
  %129 = vmatprep.subr.bf16.mxu0 0
  %130 = vmatpush1.bf16.msra.mxu0 0
  %131 = vmatprep.subr.bf16.mxu0 0
  %132 = vmatpush1.bf16.msra.mxu0 0
  %133 = vmatprep.subr.bf16.mxu0 0
  %134 = vmatpush1.bf16.msra.mxu0 0
  %135 = vmatprep.subr.bf16.mxu0 0
  %136 = vmatpush1.bf16.msra.mxu0 0
  %137 = vmatprep.subr.bf16.mxu0 0
  %138 = vmatpush1.bf16.msra.mxu0 0
  %139 = vmatprep.subr.bf16.mxu0 0
  %140 = vmatpush1.bf16.msra.mxu0 0
  %141 = vmatprep.subr.bf16.mxu0 0
  %142 = vmatpush1.bf16.msra.mxu0 0
  %143 = vmatprep.subr.bf16.mxu0 0
  %144 = vmatpush1.bf16.msra.mxu0 0
  %145 = vmatprep.subr.bf16.mxu0 0
  %146 = vmatpush1.bf16.msra.mxu0 0
  %147 = vmatprep.subr.bf16.mxu0 0
  %148 = vmatpush1.bf16.msra.mxu0 0
  %149 = vmatprep.subr.bf16.mxu0 0
  %150 = vmatpush1.bf16.msra.mxu0 0
  %151 = vmatprep.subr.bf16.mxu0 0
  %152 = vmatpush1.bf16.msra.mxu0 0
  %153 = vmatprep.subr.bf16.mxu0 0
  %154 = vmatpush1.bf16.msra.mxu0 0
  %155 = vmatprep.subr.bf16.mxu0 0
  %156 = vmatpush1.bf16.msra.mxu0 0
  %157 = vmatprep.mubr.bf16.mxu0 0
  %158 = vmatmul.mubr.bf16.gmra.mrb[0].mxu0 %v95
  %v159 = vpop.f32.mrb[0].mxu0
  %v160 = vadd.f32 %v40, %v159
  %v161 = vpop.f32.mrb[0].mxu0
  %v162 = vpop.f32.mrb[0].mxu0
  %v163 = vadd.f32 %v40, %v162
  %v164 = vpop.f32.mrb[0].mxu0
  %165 = vmatprep.mubr.bf16.mxu0 0
  %166 = vmatmul.mubr.bf16.gmra.mrb[0].mxu0 %v98
  %v167 = vpop.f32.mrb[0].mxu0
  %v168 = vadd.f32 %v40, %v167
  %v169 = vpop.f32.mrb[0].mxu0
  %v170 = vpop.f32.mrb[0].mxu0
  %v171 = vadd.f32 %v40, %v170
  %v172 = vpop.f32.mrb[0].mxu0
  %173 = vmatprep.mubr.bf16.mxu0 0
  %174 = vmatmul.mubr.bf16.gmra.mrb[0].mxu0 %v101
  %v175 = vpop.f32.mrb[0].mxu0
  %v176 = vadd.f32 %v40, %v175
  %v177 = vpop.f32.mrb[0].mxu0
  %v178 = vpop.f32.mrb[0].mxu0
  %v179 = vadd.f32 %v40, %v178
  %v180 = vpop.f32.mrb[0].mxu0
  %181 = vmatprep.mubr.bf16.mxu0 0
  %182 = vmatmul.mubr.bf16.gmra.mrb[0].mxu0 %v104
  %v183 = vpop.f32.mrb[0].mxu0
  %v184 = vadd.f32 %v40, %v183
  %v185 = vpop.f32.mrb[0].mxu0
  %v186 = vpop.f32.mrb[0].mxu0
  %v187 = vadd.f32 %v40, %v186
  %v188 = vpop.f32.mrb[0].mxu0
  %189 = vmatprep.mubr.bf16.mxu0 0
  %190 = vmatmul.mubr.bf16.gmra.mrb[0].mxu0 %v107
  %v191 = vpop.f32.mrb[0].mxu0
  %v192 = vadd.f32 %v40, %v191
  %v193 = vpop.f32.mrb[0].mxu0
  %v194 = vpop.f32.mrb[0].mxu0
  %v195 = vadd.f32 %v40, %v194
  %v196 = vpop.f32.mrb[0].mxu0
  %197 = vmatprep.mubr.bf16.mxu0 0
  %198 = vmatmul.mubr.bf16.gmra.mrb[0].mxu0 %v110
  %v199 = vpop.f32.mrb[0].mxu0
  %v200 = vadd.f32 %v40, %v199
  %v201 = vpop.f32.mrb[0].mxu0
  %v202 = vpop.f32.mrb[0].mxu0
  %v203 = vadd.f32 %v40, %v202
  %v204 = vpop.f32.mrb[0].mxu0
  %205 = vmatprep.mubr.bf16.mxu0 0
  %206 = vmatmul.mubr.bf16.gmra.mrb[0].mxu0 %v113
  %v207 = vpop.f32.mrb[0].mxu0
  %v208 = vadd.f32 %v40, %v207
  %v209 = vpop.f32.mrb[0].mxu0
  %v210 = vpop.f32.mrb[0].mxu0
  %v211 = vadd.f32 %v40, %v210
  %v212 = vpop.f32.mrb[0].mxu0
  %213 = vmatprep.mubr.bf16.mxu0 0
  %214 = vmatmul.mubr.bf16.gmra.mrb[0].mxu0 %v116
  %v215 = vpop.f32.mrb[0].mxu0
  %v216 = vadd.f32 %v40, %v215
  %v217 = vpop.f32.mrb[0].mxu0
  %v218 = vpop.f32.mrb[0].mxu0
  %v219 = vadd.f32 %v40, %v218
  %v220 = vpop.f32.mrb[0].mxu0
  %221 = vdwg.mxu0
  %v222 = vmax.f32 %v160, 0.0
  %v223 = vmax.f32 %v163, 0.0
  %v224 = vmax.f32 %v168, 0.0
  %v225 = vmax.f32 %v171, 0.0
  %v226 = vmax.f32 %v176, 0.0
  %v227 = vmax.f32 %v179, 0.0
  %v228 = vmax.f32 %v184, 0.0
  %v229 = vmax.f32 %v187, 0.0
  %v230 = vmax.f32 %v192, 0.0
  %v231 = vmax.f32 %v195, 0.0
  %v232 = vmax.f32 %v200, 0.0
  %v233 = vmax.f32 %v203, 0.0
  %v234 = vmax.f32 %v208, 0.0
  %v235 = vmax.f32 %v211, 0.0
  %v236 = vmax.f32 %v216, 0.0
  %v237 = vmax.f32 %v219, 0.0
  %238 = vst [vmem:[%s3] sm:$0xff] %v222
  %239 = vst [vmem:[%s3 + $0x8] sm:$0xff] %v223
  %240 = vst [vmem:[%s3 + $0x10] sm:$0xff] %v224
  %241 = vst [vmem:[%s3 + $0x18] sm:$0xff] %v225
  %242 = vst [vmem:[%s3 + $0x20] sm:$0xff] %v226
  %243 = vst [vmem:[%s3 + $0x28] sm:$0xff] %v227
  %244 = vst [vmem:[%s3 + $0x30] sm:$0xff] %v228
  %245 = vst [vmem:[%s3 + $0x38] sm:$0xff] %v229
  %246 = vst [vmem:[%s3 + $0x40] sm:$0xff] %v230
  %247 = vst [vmem:[%s3 + $0x48] sm:$0xff] %v231
  %248 = vst [vmem:[%s3 + $0x50] sm:$0xff] %v232
  %249 = vst [vmem:[%s3 + $0x58] sm:$0xff] %v233
  %250 = vst [vmem:[%s3 + $0x60] sm:$0xff] %v234
  %251 = vst [vmem:[%s3 + $0x68] sm:$0xff] %v235
  %252 = vst [vmem:[%s3 + $0x70] sm:$0xff] %v236
  %253 = vst [vmem:[%s3 + $0x78] sm:$0xff] %v237
  // Predicated region
  $region14: #{onnx_model_forward.6} parent=0 // pred_check
    _
  $region15: #{onnx_model_forward.6} parent=0 // pred_check_branch
    %255 = sbr.rel (0) target = $region17
  $region16: #{onnx_model_forward.6} parent=0 // pred_region
    _
  $region17: #{onnx_model_forward.6} parent=0 // pred_fallthru
    _
  // Predicated region
  $region18: #{onnx_model_forward.6} parent=0 // pred_check
    _
  $region19: #{onnx_model_forward.6} parent=0 // pred_check_branch
    %257 = sbr.rel (0) target = $region21
  $region20: #{onnx_model_forward.6} parent=0 // pred_region
    _
  $region21: #{onnx_model_forward.6} parent=0 // pred_fallthru
    _

// kernel: onnx_model_forward.7
$region0: #{onnx_model_forward.7}
  #allocation0 [shape = 'u32[]', space=smem, size = 0x4, offset = 0x4, fixed_abs, tag = 'smem constant byte address 0x4 - core index']
  #allocation1 [shape = 'u32[144,128]{1,0:T(1,128)}', space=vmem, size = 0x12000, scoped, tag = 'internal scratch']
  %s0 = inlined_call_operand.vmem [shape: bf16[32,144], index: 0, kind: input, shape index: {}]
  %s1 = inlined_call_operand.vmem [shape: bf16[144,128], index: 1, kind: input, shape index: {}]
  %s2 = inlined_call_operand.vmem [shape: f32[1,128], index: 2, kind: input, shape index: {}]
  %s3 = inlined_call_operand.vmem [shape: f32[32,128], index: 3, kind: output, shape index: {}]
  %s4 = sld [smem:[#allocation0]]
  $region22: #{onnx_model_forward.7} parent=0
    _
  %s6 = ssub.s32 1, %s4
  %s7 = scalar_select 0, %s6, %s4
  // Predicated region
  $region2: #{onnx_model_forward.7} parent=0 // pred_check
    _
  $region3: #{onnx_model_forward.7} parent=0 // pred_check_branch
    %9 = sbr.rel (0) target = $region5
  $region4: #{onnx_model_forward.7} parent=0 // pred_region
    _
  $region5: #{onnx_model_forward.7} parent=0 // pred_fallthru
    _
  // Predicated region
  $region6: #{onnx_model_forward.7} parent=0 // pred_check
    _
  $region7: #{onnx_model_forward.7} parent=0 // pred_check_branch
    %11 = sbr.rel (0) target = $region9
  $region8: #{onnx_model_forward.7} parent=0 // pred_region
    _
  $region9: #{onnx_model_forward.7} parent=0 // pred_fallthru
    _
  // Predicated region
  $region10: #{onnx_model_forward.7} parent=0 // pred_check
    _
  $region11: #{onnx_model_forward.7} parent=0 // pred_check_branch
    %13 = sbr.rel (0) target = $region13
  $region12: #{onnx_model_forward.7} parent=0 // pred_region
    _
  $region13: #{onnx_model_forward.7} parent=0 // pred_fallthru
    _
  %v15 = vld [vmem:[%s0] sm:$0xff]
  %v16 = vld [vmem:[%s0 + $0x8] sm:$0xff]
  %v17 = vld [vmem:[%s0 + $0x10] sm:$0xff]
  %v18 = vld [vmem:[%s0 + $0x18] sm:$0xff]
  %v19 = vld [vmem:[%s1] sm:$0xf]
  %v20 = vld [vmem:[%s1 + $0x4] sm:$0xf]
  %v21 = vld [vmem:[%s1 + $0x8] sm:$0xf]
  %v22 = vld [vmem:[%s1 + $0xc] sm:$0xf]
  %v23 = vld [vmem:[%s1 + $0x10] sm:$0xf]
  %v24 = vld [vmem:[%s1 + $0x14] sm:$0xf]
  %v25 = vld [vmem:[%s1 + $0x18] sm:$0xf]
  %v26 = vld [vmem:[%s1 + $0x1c] sm:$0xf]
  %v27 = vld [vmem:[%s1 + $0x20] sm:$0xf]
  %v28 = vld [vmem:[%s1 + $0x24] sm:$0xf]
  %v29 = vld [vmem:[%s1 + $0x28] sm:$0xf]
  %v30 = vld [vmem:[%s1 + $0x2c] sm:$0xf]
  %v31 = vld [vmem:[%s1 + $0x30] sm:$0xf]
  %v32 = vld [vmem:[%s1 + $0x34] sm:$0xf]
  %v33 = vld [vmem:[%s1 + $0x38] sm:$0xf]
  %v34 = vld [vmem:[%s1 + $0x3c] sm:$0xf]
  %v35 = vld [vmem:[%s1 + $0x40] sm:$0xf]
  %v36 = vld [vmem:[%s1 + $0x44] sm:$0xf]
  %v37 = vld [vmem:[%s2] sm:$0x1]
  %v39 = vlaneseq
  %v40 = vshrl.u32 %v39, 7
  %v41 = vsub.s32 0, %v40
  %v42 = vrot.slane %v37, %v41
  %v48 = vunpack.c.l.b16 %v15
  %v49 = vunpack.c.h.b16 %v15
  %v50 = vunpack.c.l.b16 %v16
  %v51 = vunpack.c.h.b16 %v16
  %v52 = vunpack.c.l.b16 %v17
  %v53 = vunpack.c.h.b16 %v17
  %v54 = vunpack.c.l.b16 %v18
  %v55 = vunpack.c.h.b16 %v18
  %v56 = vpack.c.b16 %v50, %v48
  %v57 = vpack.c.b16 %v51, %v49
  %v58 = vpack.c.b16 %v54, %v52
  %v59 = vpack.c.b16 %v55, %v53
  %v80 = vunpack.c.l.b16 %v19
  %v81 = vunpack.c.l.b16 %v20
  %v82 = vunpack.c.l.b16 %v21
  %v83 = vunpack.c.l.b16 %v22
  %v84 = vunpack.c.l.b16 %v23
  %v85 = vunpack.c.l.b16 %v24
  %v86 = vunpack.c.l.b16 %v25
  %v87 = vunpack.c.l.b16 %v26
  %v88 = vunpack.c.l.b16 %v27
  %v89 = vunpack.c.l.b16 %v28
  %v90 = vunpack.c.l.b16 %v29
  %v91 = vunpack.c.l.b16 %v30
  %v92 = vunpack.c.l.b16 %v31
  %v93 = vunpack.c.l.b16 %v32
  %v94 = vunpack.c.l.b16 %v33
  %v95 = vunpack.c.l.b16 %v34
  %v96 = vunpack.c.l.b16 %v35
  %v97 = vunpack.c.l.b16 %v36
  %v98 = vpack.c.b16 %v81, %v80
  %v99 = vpack.c.b16 %v83, %v82
  %v100 = vpack.c.b16 %v85, %v84
  %v101 = vpack.c.b16 %v87, %v86
  %v102 = vpack.c.b16 %v89, %v88
  %v103 = vpack.c.b16 %v91, %v90
  %v104 = vpack.c.b16 %v93, %v92
  %v105 = vpack.c.b16 %v95, %v94
  %v106 = vpack.c.b16 %v97, %v96
  %vm116 = vcmask 130048
  %v118 = vsel %vm116, %v57, 0
  %v121 = vsel %vm116, %v59, 0
  %123 = vmatprep.subr.bf16.mxu0 0
  %124 = vmatpush1.bf16.msra.mxu0 %v98
  %125 = vmatprep.subr.bf16.mxu0 0
  %126 = vmatpush1.bf16.msra.mxu0 %v99
  %127 = vmatprep.subr.bf16.mxu0 0
  %128 = vmatpush1.bf16.msra.mxu0 %v100
  %129 = vmatprep.subr.bf16.mxu0 0
  %130 = vmatpush1.bf16.msra.mxu0 %v101
  %131 = vmatprep.subr.bf16.mxu0 0
  %132 = vmatpush1.bf16.msra.mxu0 %v102
  %133 = vmatprep.subr.bf16.mxu0 0
  %134 = vmatpush1.bf16.msra.mxu0 %v103
  %135 = vmatprep.subr.bf16.mxu0 0
  %136 = vmatpush1.bf16.msra.mxu0 %v104
  %137 = vmatprep.subr.bf16.mxu0 0
  %138 = vmatpush1.bf16.msra.mxu0 %v105
  %139 = vmatprep.subr.bf16.mxu0 0
  %140 = vmatpush1.bf16.msra.mxu0 %v106
  %141 = vmatprep.subr.bf16.mxu0 0
  %142 = vmatpush1.bf16.msra.mxu0 0
  %143 = vmatprep.subr.bf16.mxu0 0
  %144 = vmatpush1.bf16.msra.mxu0 0
  %145 = vmatprep.subr.bf16.mxu0 0
  %146 = vmatpush1.bf16.msra.mxu0 0
  %147 = vmatprep.subr.bf16.mxu0 0
  %148 = vmatpush1.bf16.msra.mxu0 0
  %149 = vmatprep.subr.bf16.mxu0 0
  %150 = vmatpush1.bf16.msra.mxu0 0
  %151 = vmatprep.subr.bf16.mxu0 0
  %152 = vmatpush1.bf16.msra.mxu0 0
  %153 = vmatprep.subr.bf16.mxu0 0
  %154 = vmatpush1.bf16.msra.mxu0 0
  %155 = vmatprep.mubr.bf16.mxu0 %v118
  %156 = vmatmul.mubr.bf16.gmra.mrb[0].mxu0 %v56
  %v157 = vpop.f32.mrb[0].mxu0
  %v158 = vadd.f32 %v42, %v157
  %v159 = vpop.f32.mrb[0].mxu0
  %v160 = vpop.f32.mrb[0].mxu0
  %v161 = vadd.f32 %v42, %v160
  %v162 = vpop.f32.mrb[0].mxu0
  %163 = vmatprep.mubr.bf16.mxu0 %v121
  %164 = vmatmul.mubr.bf16.gmra.mrb[0].mxu0 %v58
  %v165 = vpop.f32.mrb[0].mxu0
  %v166 = vadd.f32 %v42, %v165
  %v167 = vpop.f32.mrb[0].mxu0
  %v168 = vpop.f32.mrb[0].mxu0
  %v169 = vadd.f32 %v42, %v168
  %v170 = vpop.f32.mrb[0].mxu0
  %171 = vdwg.mxu0
  %v172 = vmax.f32 %v158, 0.0
  %v173 = vmax.f32 %v161, 0.0
  %v174 = vmax.f32 %v166, 0.0
  %v175 = vmax.f32 %v169, 0.0
  %176 = vst [vmem:[%s3] sm:$0xff] %v172
  %177 = vst [vmem:[%s3 + $0x8] sm:$0xff] %v173
  %178 = vst [vmem:[%s3 + $0x10] sm:$0xff] %v174
  %179 = vst [vmem:[%s3 + $0x18] sm:$0xff] %v175
  // Predicated region
  $region14: #{onnx_model_forward.7} parent=0 // pred_check
    _
  $region15: #{onnx_model_forward.7} parent=0 // pred_check_branch
    %181 = sbr.rel (0) target = $region17
  $region16: #{onnx_model_forward.7} parent=0 // pred_region
    _
  $region17: #{onnx_model_forward.7} parent=0 // pred_fallthru
    _
  // Predicated region
  $region18: #{onnx_model_forward.7} parent=0 // pred_check
    _
  $region19: #{onnx_model_forward.7} parent=0 // pred_check_branch
    %183 = sbr.rel (0) target = $region21
  $region20: #{onnx_model_forward.7} parent=0 // pred_region
    _
  $region21: #{onnx_model_forward.7} parent=0 // pred_fallthru
    _

// kernel: onnx_model_forward.8
$region0: #{onnx_model_forward.8}
  #allocation0 [shape = 'u32[]', space=smem, size = 0x4, offset = 0x4, fixed_abs, tag = 'smem constant byte address 0x4 - core index']
  #allocation1 [shape = 'u32[144,128]{1,0:T(1,128)}', space=vmem, size = 0x12000, scoped, tag = 'internal scratch']
  %s0 = inlined_call_operand.vmem [shape: bf16[128,16], index: 0, kind: input, shape index: {}]
  %s1 = inlined_call_operand.vmem [shape: bf16[32,32], index: 1, kind: input, shape index: {}]
  %s2 = inlined_call_operand.vmem [shape: bf16[16,128], index: 2, kind: input, shape index: {}]
  %s3 = inlined_call_operand.vmem [shape: f32[1,128], index: 3, kind: input, shape index: {}]
  %s4 = inlined_call_operand.vmem [shape: bf16[32,128], index: 4, kind: input, shape index: {}]
  %s5 = inlined_call_operand.vmem [shape: f32[1,128], index: 5, kind: input, shape index: {}]
  %s6 = inlined_call_operand.vmem [shape: f32[128,128], index: 6, kind: output, shape index: {0}]
  %s7 = inlined_call_operand.vmem [shape: f32[32,128], index: 7, kind: output, shape index: {1}]
  %8 = xla_tuple %s6, %s7
  %s9 = sld [smem:[#allocation0]]
  $region42: #{onnx_model_forward.8} parent=0
    _
  %s11 = ssub.s32 1, %s9
  %s12 = scalar_select 0, %s11, %s9
  // Predicated region
  $region2: #{onnx_model_forward.8} parent=0 // pred_check
    _
  $region3: #{onnx_model_forward.8} parent=0 // pred_check_branch
    %14 = sbr.rel (0) target = $region5
  $region4: #{onnx_model_forward.8} parent=0 // pred_region
    _
  $region5: #{onnx_model_forward.8} parent=0 // pred_fallthru
    _
  // Predicated region
  $region6: #{onnx_model_forward.8} parent=0 // pred_check
    _
  $region7: #{onnx_model_forward.8} parent=0 // pred_check_branch
    %16 = sbr.rel (0) target = $region9
  $region8: #{onnx_model_forward.8} parent=0 // pred_region
    _
  $region9: #{onnx_model_forward.8} parent=0 // pred_fallthru
    _
  // Predicated region
  $region10: #{onnx_model_forward.8} parent=0 // pred_check
    _
  $region11: #{onnx_model_forward.8} parent=0 // pred_check_branch
    %18 = sbr.rel (0) target = $region13
  $region12: #{onnx_model_forward.8} parent=0 // pred_region
    _
  $region13: #{onnx_model_forward.8} parent=0 // pred_fallthru
    _
  // Predicated region
  $region14: #{onnx_model_forward.8} parent=0 // pred_check
    _
  $region15: #{onnx_model_forward.8} parent=0 // pred_check_branch
    %20 = sbr.rel (0) target = $region17
  $region16: #{onnx_model_forward.8} parent=0 // pred_region
    _
  $region17: #{onnx_model_forward.8} parent=0 // pred_fallthru
    _
  // Predicated region
  $region18: #{onnx_model_forward.8} parent=0 // pred_check
    _
  $region19: #{onnx_model_forward.8} parent=0 // pred_check_branch
    %22 = sbr.rel (0) target = $region21
  $region20: #{onnx_model_forward.8} parent=0 // pred_region
    _
  $region21: #{onnx_model_forward.8} parent=0 // pred_fallthru
    _
  // Predicated region
  $region22: #{onnx_model_forward.8} parent=0 // pred_check
    _
  $region23: #{onnx_model_forward.8} parent=0 // pred_check_branch
    %24 = sbr.rel (0) target = $region25
  $region24: #{onnx_model_forward.8} parent=0 // pred_region
    _
  $region25: #{onnx_model_forward.8} parent=0 // pred_fallthru
    _
  %v26 = vld [vmem:[%s0] sm:$0xf]
  %v27 = vld [vmem:[%s0 + $0x4] sm:$0xf]
  %v28 = vld [vmem:[%s0 + $0x8] sm:$0xf]
  %v29 = vld [vmem:[%s0 + $0xc] sm:$0xf]
  %v30 = vld [vmem:[%s0 + $0x10] sm:$0xf]
  %v31 = vld [vmem:[%s0 + $0x14] sm:$0xf]
  %v32 = vld [vmem:[%s0 + $0x18] sm:$0xf]
  %v33 = vld [vmem:[%s0 + $0x1c] sm:$0xf]
  %v34 = vld [vmem:[%s0 + $0x20] sm:$0xf]
  %v35 = vld [vmem:[%s0 + $0x24] sm:$0xf]
  %v36 = vld [vmem:[%s0 + $0x28] sm:$0xf]
  %v37 = vld [vmem:[%s0 + $0x2c] sm:$0xf]
  %v38 = vld [vmem:[%s0 + $0x30] sm:$0xf]
  %v39 = vld [vmem:[%s0 + $0x34] sm:$0xf]
  %v40 = vld [vmem:[%s0 + $0x38] sm:$0xf]
  %v41 = vld [vmem:[%s0 + $0x3c] sm:$0xf]
  %v42 = vld [vmem:[%s2] sm:$0xf]
  %v43 = vld [vmem:[%s2 + $0x4] sm:$0xf]
  %v44 = vld [vmem:[%s3] sm:$0x1]
  %v46 = vlaneseq
  %v47 = vshrl.u32 %v46, 7
  %v48 = vsub.s32 0, %v47
  %v49 = vrot.slane %v44, %v48
  %v67 = vunpack.c.l.b16 %v26
  %v68 = vunpack.c.l.b16 %v27
  %v69 = vunpack.c.l.b16 %v28
  %v70 = vunpack.c.l.b16 %v29
  %v71 = vunpack.c.l.b16 %v30
  %v72 = vunpack.c.l.b16 %v31
  %v73 = vunpack.c.l.b16 %v32
  %v74 = vunpack.c.l.b16 %v33
  %v75 = vunpack.c.l.b16 %v34
  %v76 = vunpack.c.l.b16 %v35
  %v77 = vunpack.c.l.b16 %v36
  %v78 = vunpack.c.l.b16 %v37
  %v79 = vunpack.c.l.b16 %v38
  %v80 = vunpack.c.l.b16 %v39
  %v81 = vunpack.c.l.b16 %v40
  %v82 = vunpack.c.l.b16 %v41
  %v83 = vpack.c.b16 %v68, %v67
  %v84 = vpack.c.b16 %v70, %v69
  %v85 = vpack.c.b16 %v72, %v71
  %v86 = vpack.c.b16 %v74, %v73
  %v87 = vpack.c.b16 %v76, %v75
  %v88 = vpack.c.b16 %v78, %v77
  %v89 = vpack.c.b16 %v80, %v79
  %v90 = vpack.c.b16 %v82, %v81
  %v93 = vunpack.c.l.b16 %v42
  %v94 = vunpack.c.l.b16 %v43
  %v95 = vpack.c.b16 %v94, %v93
  %vm97 = vcmask 130048
  %v99 = vsel %vm97, %v83, 0
  %v102 = vsel %vm97, %v84, 0
  %v105 = vsel %vm97, %v85, 0
  %v108 = vsel %vm97, %v86, 0
  %v111 = vsel %vm97, %v87, 0
  %v114 = vsel %vm97, %v88, 0
  %v117 = vsel %vm97, %v89, 0
  %v120 = vsel %vm97, %v90, 0
  %122 = vmatprep.subr.bf16.mxu0 0
  %123 = vmatpush1.bf16.msra.mxu0 %v95
  %124 = vmatprep.subr.bf16.mxu0 0
  %125 = vmatpush1.bf16.msra.mxu0 0
  %126 = vmatprep.subr.bf16.mxu0 0
  %127 = vmatpush1.bf16.msra.mxu0 0
  %128 = vmatprep.subr.bf16.mxu0 0
  %129 = vmatpush1.bf16.msra.mxu0 0
  %130 = vmatprep.subr.bf16.mxu0 0
  %131 = vmatpush1.bf16.msra.mxu0 0
  %132 = vmatprep.subr.bf16.mxu0 0
  %133 = vmatpush1.bf16.msra.mxu0 0
  %134 = vmatprep.subr.bf16.mxu0 0
  %135 = vmatpush1.bf16.msra.mxu0 0
  %136 = vmatprep.subr.bf16.mxu0 0
  %137 = vmatpush1.bf16.msra.mxu0 0
  %138 = vmatprep.subr.bf16.mxu0 0
  %139 = vmatpush1.bf16.msra.mxu0 0
  %140 = vmatprep.subr.bf16.mxu0 0
  %141 = vmatpush1.bf16.msra.mxu0 0
  %142 = vmatprep.subr.bf16.mxu0 0
  %143 = vmatpush1.bf16.msra.mxu0 0
  %144 = vmatprep.subr.bf16.mxu0 0
  %145 = vmatpush1.bf16.msra.mxu0 0
  %146 = vmatprep.subr.bf16.mxu0 0
  %147 = vmatpush1.bf16.msra.mxu0 0
  %148 = vmatprep.subr.bf16.mxu0 0
  %149 = vmatpush1.bf16.msra.mxu0 0
  %150 = vmatprep.subr.bf16.mxu0 0
  %151 = vmatpush1.bf16.msra.mxu0 0
  %152 = vmatprep.subr.bf16.mxu0 0
  %153 = vmatpush1.bf16.msra.mxu0 0
  %154 = vmatprep.mubr.bf16.mxu0 0
  %155 = vmatmul.mubr.bf16.gmra.mrb[0].mxu0 %v99
  %v156 = vpop.f32.mrb[0].mxu0
  %v157 = vadd.f32 %v49, %v156
  %v158 = vpop.f32.mrb[0].mxu0
  %v159 = vpop.f32.mrb[0].mxu0
  %v160 = vadd.f32 %v49, %v159
  %v161 = vpop.f32.mrb[0].mxu0
  %162 = vmatprep.mubr.bf16.mxu0 0
  %163 = vmatmul.mubr.bf16.gmra.mrb[0].mxu0 %v102
  %v164 = vpop.f32.mrb[0].mxu0
  %v165 = vadd.f32 %v49, %v164
  %v166 = vpop.f32.mrb[0].mxu0
  %v167 = vpop.f32.mrb[0].mxu0
  %v168 = vadd.f32 %v49, %v167
  %v169 = vpop.f32.mrb[0].mxu0
  %170 = vmatprep.mubr.bf16.mxu0 0
  %171 = vmatmul.mubr.bf16.gmra.mrb[0].mxu0 %v105
  %v172 = vpop.f32.mrb[0].mxu0
  %v173 = vadd.f32 %v49, %v172
  %v174 = vpop.f32.mrb[0].mxu0
  %v175 = vpop.f32.mrb[0].mxu0
  %v176 = vadd.f32 %v49, %v175
  %v177 = vpop.f32.mrb[0].mxu0
  %178 = vmatprep.mubr.bf16.mxu0 0
  %179 = vmatmul.mubr.bf16.gmra.mrb[0].mxu0 %v108
  %v180 = vpop.f32.mrb[0].mxu0
  %v181 = vadd.f32 %v49, %v180
  %v182 = vpop.f32.mrb[0].mxu0
  %v183 = vpop.f32.mrb[0].mxu0
  %v184 = vadd.f32 %v49, %v183
  %v185 = vpop.f32.mrb[0].mxu0
  %186 = vmatprep.mubr.bf16.mxu0 0
  %187 = vmatmul.mubr.bf16.gmra.mrb[0].mxu0 %v111
  %v188 = vpop.f32.mrb[0].mxu0
  %v189 = vadd.f32 %v49, %v188
  %v190 = vpop.f32.mrb[0].mxu0
  %v191 = vpop.f32.mrb[0].mxu0
  %v192 = vadd.f32 %v49, %v191
  %v193 = vpop.f32.mrb[0].mxu0
  %194 = vmatprep.mubr.bf16.mxu0 0
  %195 = vmatmul.mubr.bf16.gmra.mrb[0].mxu0 %v114
  %v196 = vpop.f32.mrb[0].mxu0
  %v197 = vadd.f32 %v49, %v196
  %v198 = vpop.f32.mrb[0].mxu0
  %v199 = vpop.f32.mrb[0].mxu0
  %v200 = vadd.f32 %v49, %v199
  %v201 = vpop.f32.mrb[0].mxu0
  %202 = vmatprep.mubr.bf16.mxu0 0
  %203 = vmatmul.mubr.bf16.gmra.mrb[0].mxu0 %v117
  %v204 = vpop.f32.mrb[0].mxu0
  %v205 = vadd.f32 %v49, %v204
  %v206 = vpop.f32.mrb[0].mxu0
  %v207 = vpop.f32.mrb[0].mxu0
  %v208 = vadd.f32 %v49, %v207
  %v209 = vpop.f32.mrb[0].mxu0
  %210 = vmatprep.mubr.bf16.mxu0 0
  %211 = vmatmul.mubr.bf16.gmra.mrb[0].mxu0 %v120
  %v212 = vpop.f32.mrb[0].mxu0
  %v213 = vadd.f32 %v49, %v212
  %v214 = vpop.f32.mrb[0].mxu0
  %v215 = vpop.f32.mrb[0].mxu0
  %v216 = vadd.f32 %v49, %v215
  %v217 = vpop.f32.mrb[0].mxu0
  %218 = vdwg.mxu0
  %219 = vst [vmem:[%s6] sm:$0xff] %v157
  %220 = vst [vmem:[%s6 + $0x8] sm:$0xff] %v160
  %221 = vst [vmem:[%s6 + $0x10] sm:$0xff] %v165
  %222 = vst [vmem:[%s6 + $0x18] sm:$0xff] %v168
  %223 = vst [vmem:[%s6 + $0x20] sm:$0xff] %v173
  %224 = vst [vmem:[%s6 + $0x28] sm:$0xff] %v176
  %225 = vst [vmem:[%s6 + $0x30] sm:$0xff] %v181
  %226 = vst [vmem:[%s6 + $0x38] sm:$0xff] %v184
  %227 = vst [vmem:[%s6 + $0x40] sm:$0xff] %v189
  %228 = vst [vmem:[%s6 + $0x48] sm:$0xff] %v192
  %229 = vst [vmem:[%s6 + $0x50] sm:$0xff] %v197
  %230 = vst [vmem:[%s6 + $0x58] sm:$0xff] %v200
  %231 = vst [vmem:[%s6 + $0x60] sm:$0xff] %v205
  %232 = vst [vmem:[%s6 + $0x68] sm:$0xff] %v208
  %233 = vst [vmem:[%s6 + $0x70] sm:$0xff] %v213
  %234 = vst [vmem:[%s6 + $0x78] sm:$0xff] %v216
  %v235 = vld [vmem:[%s1] sm:$0xf]
  %v236 = vld [vmem:[%s1 + $0x4] sm:$0xf]
  %v237 = vld [vmem:[%s1 + $0x8] sm:$0xf]
  %v238 = vld [vmem:[%s1 + $0xc] sm:$0xf]
  %v239 = vld [vmem:[%s4] sm:$0xf]
  %v240 = vld [vmem:[%s4 + $0x4] sm:$0xf]
  %v241 = vld [vmem:[%s4 + $0x8] sm:$0xf]
  %v242 = vld [vmem:[%s4 + $0xc] sm:$0xf]
  %v243 = vld [vmem:[%s5] sm:$0x1]
  %v245 = vlaneseq
  %v246 = vshrl.u32 %v245, 7
  %v247 = vsub.s32 0, %v246
  %v248 = vrot.slane %v243, %v247
  %v254 = vunpack.c.l.b16 %v235
  %v255 = vunpack.c.l.b16 %v236
  %v256 = vunpack.c.l.b16 %v237
  %v257 = vunpack.c.l.b16 %v238
  %v258 = vpack.c.b16 %v255, %v254
  %v259 = vpack.c.b16 %v257, %v256
  %v264 = vunpack.c.l.b16 %v239
  %v265 = vunpack.c.l.b16 %v240
  %v266 = vunpack.c.l.b16 %v241
  %v267 = vunpack.c.l.b16 %v242
  %v268 = vpack.c.b16 %v265, %v264
  %v269 = vpack.c.b16 %v267, %v266
  %vm272 = vcmask 261120
  %v274 = vsel %vm272, %v258, 0
  %v277 = vsel %vm272, %v259, 0
  %279 = vmatprep.subr.bf16.mxu0 0
  %280 = vmatpush1.bf16.msra.mxu0 %v268
  %281 = vmatprep.subr.bf16.mxu0 0
  %282 = vmatpush1.bf16.msra.mxu0 %v269
  %283 = vmatprep.subr.bf16.mxu0 0
  %284 = vmatpush1.bf16.msra.mxu0 0
  %285 = vmatprep.subr.bf16.mxu0 0
  %286 = vmatpush1.bf16.msra.mxu0 0
  %287 = vmatprep.subr.bf16.mxu0 0
  %288 = vmatpush1.bf16.msra.mxu0 0
  %289 = vmatprep.subr.bf16.mxu0 0
  %290 = vmatpush1.bf16.msra.mxu0 0
  %291 = vmatprep.subr.bf16.mxu0 0
  %292 = vmatpush1.bf16.msra.mxu0 0
  %293 = vmatprep.subr.bf16.mxu0 0
  %294 = vmatpush1.bf16.msra.mxu0 0
  %295 = vmatprep.subr.bf16.mxu0 0
  %296 = vmatpush1.bf16.msra.mxu0 0
  %297 = vmatprep.subr.bf16.mxu0 0
  %298 = vmatpush1.bf16.msra.mxu0 0
  %299 = vmatprep.subr.bf16.mxu0 0
  %300 = vmatpush1.bf16.msra.mxu0 0
  %301 = vmatprep.subr.bf16.mxu0 0
  %302 = vmatpush1.bf16.msra.mxu0 0
  %303 = vmatprep.subr.bf16.mxu0 0
  %304 = vmatpush1.bf16.msra.mxu0 0
  %305 = vmatprep.subr.bf16.mxu0 0
  %306 = vmatpush1.bf16.msra.mxu0 0
  %307 = vmatprep.subr.bf16.mxu0 0
  %308 = vmatpush1.bf16.msra.mxu0 0
  %309 = vmatprep.subr.bf16.mxu0 0
  %310 = vmatpush1.bf16.msra.mxu0 0
  %311 = vmatprep.mubr.bf16.mxu0 0
  %312 = vmatmul.mubr.bf16.gmra.mrb[0].mxu0 %v274
  %v313 = vpop.f32.mrb[0].mxu0
  %v314 = vadd.f32 %v248, %v313
  %v315 = vpop.f32.mrb[0].mxu0
  %v316 = vpop.f32.mrb[0].mxu0
  %v317 = vadd.f32 %v248, %v316
  %v318 = vpop.f32.mrb[0].mxu0
  %319 = vmatprep.mubr.bf16.mxu0 0
  %320 = vmatmul.mubr.bf16.gmra.mrb[0].mxu0 %v277
  %v321 = vpop.f32.mrb[0].mxu0
  %v322 = vadd.f32 %v248, %v321
  %v323 = vpop.f32.mrb[0].mxu0
  %v324 = vpop.f32.mrb[0].mxu0
  %v325 = vadd.f32 %v248, %v324
  %v326 = vpop.f32.mrb[0].mxu0
  %327 = vdwg.mxu0
  %328 = vst [vmem:[%s7] sm:$0xff] %v314
  %329 = vst [vmem:[%s7 + $0x8] sm:$0xff] %v317
  %330 = vst [vmem:[%s7 + $0x10] sm:$0xff] %v322
  %331 = vst [vmem:[%s7 + $0x18] sm:$0xff] %v325
  // Predicated region
  $region26: #{onnx_model_forward.8} parent=0 // pred_check
    _
  $region27: #{onnx_model_forward.8} parent=0 // pred_check_branch
    %333 = sbr.rel (0) target = $region29
  $region28: #{onnx_model_forward.8} parent=0 // pred_region
    _
  $region29: #{onnx_model_forward.8} parent=0 // pred_fallthru
    _
  // Predicated region
  $region30: #{onnx_model_forward.8} parent=0 // pred_check
    _
  $region31: #{onnx_model_forward.8} parent=0 // pred_check_branch
    %335 = sbr.rel (0) target = $region33
  $region32: #{onnx_model_forward.8} parent=0 // pred_region
    _
  $region33: #{onnx_model_forward.8} parent=0 // pred_fallthru
    _
  // Predicated region
  $region34: #{onnx_model_forward.8} parent=0 // pred_check
    _
  $region35: #{onnx_model_forward.8} parent=0 // pred_check_branch
    %337 = sbr.rel (0) target = $region37
  $region36: #{onnx_model_forward.8} parent=0 // pred_region
    _
  $region37: #{onnx_model_forward.8} parent=0 // pred_fallthru
    _
  // Predicated region
  $region38: #{onnx_model_forward.8} parent=0 // pred_check
    _
  $region39: #{onnx_model_forward.8} parent=0 // pred_check_branch
    %339 = sbr.rel (0) target = $region41
  $region40: #{onnx_model_forward.8} parent=0 // pred_region
    _
  $region41: #{onnx_model_forward.8} parent=0 // pred_fallthru
    _

// kernel: onnx_model_forward.9
$region0: #{onnx_model_forward.9}
  #allocation0 [shape = 'u32[]', space=smem, size = 0x4, offset = 0x4, fixed_abs, tag = 'smem constant byte address 0x4 - core index']
  #allocation1 [shape = 'u32[144,128]{1,0:T(1,128)}', space=vmem, size = 0x12000, scoped, tag = 'internal scratch']
  %s0 = inlined_call_operand.vmem [shape: bf16[160,288], index: 0, kind: input, shape index: {}]
  %s1 = inlined_call_operand.vmem [shape: bf16[288,32], index: 1, kind: input, shape index: {}]
  %s2 = inlined_call_operand.vmem [shape: f32[1,32], index: 2, kind: input, shape index: {}]
  %s3 = inlined_call_operand.vmem [shape: bf16[32,128], index: 3, kind: input, shape index: {}]
  %s4 = inlined_call_operand.vmem [shape: f32[1,128], index: 4, kind: input, shape index: {}]
  %s5 = inlined_call_operand.vmem [shape: f32[160,128], index: 5, kind: output, shape index: {0}]
  %s6 = inlined_call_operand.vmem [shape: f32[2,32], index: 6, kind: output, shape index: {1}]
  %7 = xla_tuple %s5, %s6
  %s8 = sld [smem:[#allocation0]]
  $region38: #{onnx_model_forward.9} parent=0
    _
  %s10 = ssub.s32 1, %s8
  %s11 = scalar_select 0, %s10, %s8
  // Predicated region
  $region2: #{onnx_model_forward.9} parent=0 // pred_check
    _
  $region3: #{onnx_model_forward.9} parent=0 // pred_check_branch
    %13 = sbr.rel (0) target = $region5
  $region4: #{onnx_model_forward.9} parent=0 // pred_region
    _
  $region5: #{onnx_model_forward.9} parent=0 // pred_fallthru
    _
  // Predicated region
  $region6: #{onnx_model_forward.9} parent=0 // pred_check
    _
  $region7: #{onnx_model_forward.9} parent=0 // pred_check_branch
    %15 = sbr.rel (0) target = $region9
  $region8: #{onnx_model_forward.9} parent=0 // pred_region
    _
  $region9: #{onnx_model_forward.9} parent=0 // pred_fallthru
    _
  // Predicated region
  $region10: #{onnx_model_forward.9} parent=0 // pred_check
    _
  $region11: #{onnx_model_forward.9} parent=0 // pred_check_branch
    %17 = sbr.rel (0) target = $region13
  $region12: #{onnx_model_forward.9} parent=0 // pred_region
    _
  $region13: #{onnx_model_forward.9} parent=0 // pred_fallthru
    _
  // Predicated region
  $region14: #{onnx_model_forward.9} parent=0 // pred_check
    _
  $region15: #{onnx_model_forward.9} parent=0 // pred_check_branch
    %19 = sbr.rel (0) target = $region17
  $region16: #{onnx_model_forward.9} parent=0 // pred_region
    _
  $region17: #{onnx_model_forward.9} parent=0 // pred_fallthru
    _
  // Predicated region
  $region18: #{onnx_model_forward.9} parent=0 // pred_check
    _
  $region19: #{onnx_model_forward.9} parent=0 // pred_check_branch
    %21 = sbr.rel (0) target = $region21
  $region20: #{onnx_model_forward.9} parent=0 // pred_region
    _
  $region21: #{onnx_model_forward.9} parent=0 // pred_fallthru
    _
  %v23 = vld [vmem:[%s0] sm:$0xff]
  %v24 = vld [vmem:[%s0 + $0x8] sm:$0xf]
  %v25 = vld [vmem:[%s0 + $0xc] sm:$0xff]
  %v26 = vld [vmem:[%s0 + $0x14] sm:$0xf]
  %v27 = vld [vmem:[%s0 + $0x18] sm:$0xff]
  %v28 = vld [vmem:[%s0 + $0x20] sm:$0xf]
  %v29 = vld [vmem:[%s0 + $0x24] sm:$0xff]
  %v30 = vld [vmem:[%s0 + $0x2c] sm:$0xf]
  %v31 = vld [vmem:[%s0 + $0x30] sm:$0xff]
  %v32 = vld [vmem:[%s0 + $0x38] sm:$0xf]
  %v33 = vld [vmem:[%s0 + $0x3c] sm:$0xff]
  %v34 = vld [vmem:[%s0 + $0x44] sm:$0xf]
  %v35 = vld [vmem:[%s0 + $0x48] sm:$0xff]
  %v36 = vld [vmem:[%s0 + $0x50] sm:$0xf]
  %v37 = vld [vmem:[%s0 + $0x54] sm:$0xff]
  %v38 = vld [vmem:[%s0 + $0x5c] sm:$0xf]
  %v39 = vld [vmem:[%s0 + $0x60] sm:$0xff]
  %v40 = vld [vmem:[%s0 + $0x68] sm:$0xf]
  %v41 = vld [vmem:[%s0 + $0x6c] sm:$0xff]
  %v42 = vld [vmem:[%s0 + $0x74] sm:$0xf]
  %v43 = vld [vmem:[%s0 + $0x78] sm:$0xff]
  %v44 = vld [vmem:[%s0 + $0x80] sm:$0xf]
  %v45 = vld [vmem:[%s0 + $0x84] sm:$0xff]
  %v46 = vld [vmem:[%s0 + $0x8c] sm:$0xf]
  %v47 = vld [vmem:[%s0 + $0x90] sm:$0xff]
  %v48 = vld [vmem:[%s0 + $0x98] sm:$0xf]
  %v49 = vld [vmem:[%s0 + $0x9c] sm:$0xff]
  %v50 = vld [vmem:[%s0 + $0xa4] sm:$0xf]
  %v51 = vld [vmem:[%s0 + $0xa8] sm:$0xff]
  %v52 = vld [vmem:[%s0 + $0xb0] sm:$0xf]
  %v53 = vld [vmem:[%s0 + $0xb4] sm:$0xff]
  %v54 = vld [vmem:[%s0 + $0xbc] sm:$0xf]
  %v55 = vld [vmem:[%s0 + $0xc0] sm:$0xff]
  %v56 = vld [vmem:[%s0 + $0xc8] sm:$0xf]
  %v57 = vld [vmem:[%s0 + $0xcc] sm:$0xff]
  %v58 = vld [vmem:[%s0 + $0xd4] sm:$0xf]
  %v59 = vld [vmem:[%s0 + $0xd8] sm:$0xff]
  %v60 = vld [vmem:[%s0 + $0xe0] sm:$0xf]
  %v61 = vld [vmem:[%s0 + $0xe4] sm:$0xff]
  %v62 = vld [vmem:[%s0 + $0xec] sm:$0xf]
  %v63 = vld [vmem:[%s1] sm:$0xf]
  %v64 = vld [vmem:[%s1 + $0x4] sm:$0xf]
  %v65 = vld [vmem:[%s1 + $0x8] sm:$0xf]
  %v66 = vld [vmem:[%s1 + $0xc] sm:$0xf]
  %v67 = vld [vmem:[%s1 + $0x10] sm:$0xf]
  %v68 = vld [vmem:[%s1 + $0x14] sm:$0xf]
  %v69 = vld [vmem:[%s1 + $0x18] sm:$0xf]
  %v70 = vld [vmem:[%s1 + $0x1c] sm:$0xf]
  %v71 = vld [vmem:[%s1 + $0x20] sm:$0xf]
  %v72 = vld [vmem:[%s1 + $0x24] sm:$0xf]
  %v73 = vld [vmem:[%s1 + $0x28] sm:$0xf]
  %v74 = vld [vmem:[%s1 + $0x2c] sm:$0xf]
  %v75 = vld [vmem:[%s1 + $0x30] sm:$0xf]
  %v76 = vld [vmem:[%s1 + $0x34] sm:$0xf]
  %v77 = vld [vmem:[%s1 + $0x38] sm:$0xf]
  %v78 = vld [vmem:[%s1 + $0x3c] sm:$0xf]
  %v79 = vld [vmem:[%s1 + $0x40] sm:$0xf]
  %v80 = vld [vmem:[%s1 + $0x44] sm:$0xf]
  %v81 = vld [vmem:[%s1 + $0x48] sm:$0xf]
  %v82 = vld [vmem:[%s1 + $0x4c] sm:$0xf]
  %v83 = vld [vmem:[%s1 + $0x50] sm:$0xf]
  %v84 = vld [vmem:[%s1 + $0x54] sm:$0xf]
  %v85 = vld [vmem:[%s1 + $0x58] sm:$0xf]
  %v86 = vld [vmem:[%s1 + $0x5c] sm:$0xf]
  %v87 = vld [vmem:[%s1 + $0x60] sm:$0xf]
  %v88 = vld [vmem:[%s1 + $0x64] sm:$0xf]
  %v89 = vld [vmem:[%s1 + $0x68] sm:$0xf]
  %v90 = vld [vmem:[%s1 + $0x6c] sm:$0xf]
  %v91 = vld [vmem:[%s1 + $0x70] sm:$0xf]
  %v92 = vld [vmem:[%s1 + $0x74] sm:$0xf]
  %v93 = vld [vmem:[%s1 + $0x78] sm:$0xf]
  %v94 = vld [vmem:[%s1 + $0x7c] sm:$0xf]
  %v95 = vld [vmem:[%s1 + $0x80] sm:$0xf]
  %v96 = vld [vmem:[%s1 + $0x84] sm:$0xf]
  %v97 = vld [vmem:[%s1 + $0x88] sm:$0xf]
  %v98 = vld [vmem:[%s1 + $0x8c] sm:$0xf]
  %v99 = vld [vmem:[%s2] sm:$0x1]
  %v101 = vlaneseq
  %v102 = vshrl.u32 %v101, 7
  %v103 = vsub.s32 0, %v102
  %v104 = vrot.slane %v99, %v103
  %v146 = vunpack.c.l.b16 %v23
  %v147 = vunpack.c.h.b16 %v23
  %v148 = vunpack.c.l.b16 %v24
  %v149 = vunpack.c.l.b16 %v25
  %v150 = vunpack.c.h.b16 %v25
  %v151 = vunpack.c.l.b16 %v26
  %v152 = vunpack.c.l.b16 %v27
  %v153 = vunpack.c.h.b16 %v27
  %v154 = vunpack.c.l.b16 %v28
  %v155 = vunpack.c.l.b16 %v29
  %v156 = vunpack.c.h.b16 %v29
  %v157 = vunpack.c.l.b16 %v30
  %v158 = vunpack.c.l.b16 %v31
  %v159 = vunpack.c.h.b16 %v31
  %v160 = vunpack.c.l.b16 %v32
  %v161 = vunpack.c.l.b16 %v33
  %v162 = vunpack.c.h.b16 %v33
  %v163 = vunpack.c.l.b16 %v34
  %v164 = vunpack.c.l.b16 %v35
  %v165 = vunpack.c.h.b16 %v35
  %v166 = vunpack.c.l.b16 %v36
  %v167 = vunpack.c.l.b16 %v37
  %v168 = vunpack.c.h.b16 %v37
  %v169 = vunpack.c.l.b16 %v38
  %v170 = vunpack.c.l.b16 %v39
  %v171 = vunpack.c.h.b16 %v39
  %v172 = vunpack.c.l.b16 %v40
  %v173 = vunpack.c.l.b16 %v41
  %v174 = vunpack.c.h.b16 %v41
  %v175 = vunpack.c.l.b16 %v42
  %v176 = vunpack.c.l.b16 %v43
  %v177 = vunpack.c.h.b16 %v43
  %v178 = vunpack.c.l.b16 %v44
  %v179 = vunpack.c.l.b16 %v45
  %v180 = vunpack.c.h.b16 %v45
  %v181 = vunpack.c.l.b16 %v46
  %v182 = vunpack.c.l.b16 %v47
  %v183 = vunpack.c.h.b16 %v47
  %v184 = vunpack.c.l.b16 %v48
  %v185 = vunpack.c.l.b16 %v49
  %v186 = vunpack.c.h.b16 %v49
  %v187 = vunpack.c.l.b16 %v50
  %v188 = vunpack.c.l.b16 %v51
  %v189 = vunpack.c.h.b16 %v51
  %v190 = vunpack.c.l.b16 %v52
  %v191 = vunpack.c.l.b16 %v53
  %v192 = vunpack.c.h.b16 %v53
  %v193 = vunpack.c.l.b16 %v54
  %v194 = vunpack.c.l.b16 %v55
  %v195 = vunpack.c.h.b16 %v55
  %v196 = vunpack.c.l.b16 %v56
  %v197 = vunpack.c.l.b16 %v57
  %v198 = vunpack.c.h.b16 %v57
  %v199 = vunpack.c.l.b16 %v58
  %v200 = vunpack.c.l.b16 %v59
  %v201 = vunpack.c.h.b16 %v59
  %v202 = vunpack.c.l.b16 %v60
  %v203 = vunpack.c.l.b16 %v61
  %v204 = vunpack.c.h.b16 %v61
  %v205 = vunpack.c.l.b16 %v62
  %v206 = vpack.c.b16 %v149, %v146
  %v207 = vpack.c.b16 %v150, %v147
  %v208 = vpack.c.b16 %v151, %v148
  %v209 = vpack.c.b16 %v155, %v152
  %v210 = vpack.c.b16 %v156, %v153
  %v211 = vpack.c.b16 %v157, %v154
  %v212 = vpack.c.b16 %v161, %v158
  %v213 = vpack.c.b16 %v162, %v159
  %v214 = vpack.c.b16 %v163, %v160
  %v215 = vpack.c.b16 %v167, %v164
  %v216 = vpack.c.b16 %v168, %v165
  %v217 = vpack.c.b16 %v169, %v166
  %v218 = vpack.c.b16 %v173, %v170
  %v219 = vpack.c.b16 %v174, %v171
  %v220 = vpack.c.b16 %v175, %v172
  %v221 = vpack.c.b16 %v179, %v176
  %v222 = vpack.c.b16 %v180, %v177
  %v223 = vpack.c.b16 %v181, %v178
  %v224 = vpack.c.b16 %v185, %v182
  %v225 = vpack.c.b16 %v186, %v183
  %v226 = vpack.c.b16 %v187, %v184
  %v227 = vpack.c.b16 %v191, %v188
  %v228 = vpack.c.b16 %v192, %v189
  %v229 = vpack.c.b16 %v193, %v190
  %v230 = vpack.c.b16 %v197, %v194
  %v231 = vpack.c.b16 %v198, %v195
  %v232 = vpack.c.b16 %v199, %v196
  %v233 = vpack.c.b16 %v203, %v200
  %v234 = vpack.c.b16 %v204, %v201
  %v235 = vpack.c.b16 %v205, %v202
  %v292 = vunpack.c.l.b16 %v63
  %v293 = vunpack.c.l.b16 %v64
  %v294 = vunpack.c.l.b16 %v65
  %v295 = vunpack.c.l.b16 %v66
  %v296 = vunpack.c.l.b16 %v67
  %v297 = vunpack.c.l.b16 %v68
  %v298 = vunpack.c.l.b16 %v69
  %v299 = vunpack.c.l.b16 %v70
  %v300 = vunpack.c.l.b16 %v71
  %v301 = vunpack.c.l.b16 %v72
  %v302 = vunpack.c.l.b16 %v73
  %v303 = vunpack.c.l.b16 %v74
  %v304 = vunpack.c.l.b16 %v75
  %v305 = vunpack.c.l.b16 %v76
  %v306 = vunpack.c.l.b16 %v77
  %v307 = vunpack.c.l.b16 %v78
  %v308 = vunpack.c.l.b16 %v79
  %v309 = vunpack.c.l.b16 %v80
  %v310 = vunpack.c.l.b16 %v81
  %v311 = vunpack.c.l.b16 %v82
  %v312 = vunpack.c.l.b16 %v83
  %v313 = vunpack.c.l.b16 %v84
  %v314 = vunpack.c.l.b16 %v85
  %v315 = vunpack.c.l.b16 %v86
  %v316 = vunpack.c.l.b16 %v87
  %v317 = vunpack.c.l.b16 %v88
  %v318 = vunpack.c.l.b16 %v89
  %v319 = vunpack.c.l.b16 %v90
  %v320 = vunpack.c.l.b16 %v91
  %v321 = vunpack.c.l.b16 %v92
  %v322 = vunpack.c.l.b16 %v93
  %v323 = vunpack.c.l.b16 %v94
  %v324 = vunpack.c.l.b16 %v95
  %v325 = vunpack.c.l.b16 %v96
  %v326 = vunpack.c.l.b16 %v97
  %v327 = vunpack.c.l.b16 %v98
  %v328 = vpack.c.b16 %v293, %v292
  %v329 = vpack.c.b16 %v295, %v294
  %v330 = vpack.c.b16 %v297, %v296
  %v331 = vpack.c.b16 %v299, %v298
  %v332 = vpack.c.b16 %v301, %v300
  %v333 = vpack.c.b16 %v303, %v302
  %v334 = vpack.c.b16 %v305, %v304
  %v335 = vpack.c.b16 %v307, %v306
  %v336 = vpack.c.b16 %v309, %v308
  %v337 = vpack.c.b16 %v311, %v310
  %v338 = vpack.c.b16 %v313, %v312
  %v339 = vpack.c.b16 %v315, %v314
  %v340 = vpack.c.b16 %v317, %v316
  %v341 = vpack.c.b16 %v319, %v318
  %v342 = vpack.c.b16 %v321, %v320
  %v343 = vpack.c.b16 %v323, %v322
  %v344 = vpack.c.b16 %v325, %v324
  %v345 = vpack.c.b16 %v327, %v326
  %vm364 = vcmask 261120
  %v366 = vsel %vm364, %v208, 0
  %v369 = vsel %vm364, %v211, 0
  %v372 = vsel %vm364, %v214, 0
  %v375 = vsel %vm364, %v217, 0
  %v378 = vsel %vm364, %v220, 0
  %v381 = vsel %vm364, %v223, 0
  %v384 = vsel %vm364, %v226, 0
  %v387 = vsel %vm364, %v229, 0
  %v390 = vsel %vm364, %v232, 0
  %v393 = vsel %vm364, %v235, 0
  %395 = vmatprep.subr.bf16.mxu0 0
  %396 = vmatpush1.bf16.msra.mxu0 %v328
  %397 = vmatprep.subr.bf16.mxu0 0
  %398 = vmatpush1.bf16.msra.mxu0 %v329
  %399 = vmatprep.subr.bf16.mxu0 0
  %400 = vmatpush1.bf16.msra.mxu0 %v330
  %401 = vmatprep.subr.bf16.mxu0 0
  %402 = vmatpush1.bf16.msra.mxu0 %v331
  %403 = vmatprep.subr.bf16.mxu0 0
  %404 = vmatpush1.bf16.msra.mxu0 %v332
  %405 = vmatprep.subr.bf16.mxu0 0
  %406 = vmatpush1.bf16.msra.mxu0 %v333
  %407 = vmatprep.subr.bf16.mxu0 0
  %408 = vmatpush1.bf16.msra.mxu0 %v334
  %409 = vmatprep.subr.bf16.mxu0 0
  %410 = vmatpush1.bf16.msra.mxu0 %v335
  %411 = vmatprep.subr.bf16.mxu0 0
  %412 = vmatpush1.bf16.msra.mxu0 %v336
  %413 = vmatprep.subr.bf16.mxu0 0
  %414 = vmatpush1.bf16.msra.mxu0 %v337
  %415 = vmatprep.subr.bf16.mxu0 0
  %416 = vmatpush1.bf16.msra.mxu0 %v338
  %417 = vmatprep.subr.bf16.mxu0 0
  %418 = vmatpush1.bf16.msra.mxu0 %v339
  %419 = vmatprep.subr.bf16.mxu0 0
  %420 = vmatpush1.bf16.msra.mxu0 %v340
  %421 = vmatprep.subr.bf16.mxu0 0
  %422 = vmatpush1.bf16.msra.mxu0 %v341
  %423 = vmatprep.subr.bf16.mxu0 0
  %424 = vmatpush1.bf16.msra.mxu0 %v342
  %425 = vmatprep.subr.bf16.mxu0 0
  %426 = vmatpush1.bf16.msra.mxu0 %v343
  %427 = vmatprep.mubr.bf16.mxu0 %v207
  %428 = vmatmul.mubr.bf16.gmra.mrb[0].mxu0 %v206
  %v429 = vpop.f32.mrb[0].mxu0
  %v430 = vadd.f32 %v104, %v429
  %v431 = vpop.f32.mrb[0].mxu0
  %v432 = vpop.f32.mrb[0].mxu0
  %v433 = vadd.f32 %v104, %v432
  %v434 = vpop.f32.mrb[0].mxu0
  %435 = vmatprep.mubr.bf16.mxu0 %v210
  %436 = vmatmul.mubr.bf16.gmra.mrb[0].mxu0 %v209
  %v437 = vpop.f32.mrb[0].mxu0
  %v438 = vadd.f32 %v104, %v437
  %v439 = vpop.f32.mrb[0].mxu0
  %v440 = vpop.f32.mrb[0].mxu0
  %v441 = vadd.f32 %v104, %v440
  %v442 = vpop.f32.mrb[0].mxu0
  %443 = vmatprep.mubr.bf16.mxu0 %v213
  %444 = vmatmul.mubr.bf16.gmra.mrb[0].mxu0 %v212
  %v445 = vpop.f32.mrb[0].mxu0
  %v446 = vadd.f32 %v104, %v445
  %v447 = vpop.f32.mrb[0].mxu0
  %v448 = vpop.f32.mrb[0].mxu0
  %v449 = vadd.f32 %v104, %v448
  %v450 = vpop.f32.mrb[0].mxu0
  %451 = vmatprep.mubr.bf16.mxu0 %v216
  %452 = vmatmul.mubr.bf16.gmra.mrb[0].mxu0 %v215
  %v453 = vpop.f32.mrb[0].mxu0
  %v454 = vadd.f32 %v104, %v453
  %v455 = vpop.f32.mrb[0].mxu0
  %v456 = vpop.f32.mrb[0].mxu0
  %v457 = vadd.f32 %v104, %v456
  %v458 = vpop.f32.mrb[0].mxu0
  %459 = vmatprep.mubr.bf16.mxu0 %v219
  %460 = vmatmul.mubr.bf16.gmra.mrb[0].mxu0 %v218
  %v461 = vpop.f32.mrb[0].mxu0
  %v462 = vadd.f32 %v104, %v461
  %v463 = vpop.f32.mrb[0].mxu0
  %v464 = vpop.f32.mrb[0].mxu0
  %v465 = vadd.f32 %v104, %v464
  %v466 = vpop.f32.mrb[0].mxu0
  %467 = vmatprep.mubr.bf16.mxu0 %v222
  %468 = vmatmul.mubr.bf16.gmra.mrb[0].mxu0 %v221
  %v469 = vpop.f32.mrb[0].mxu0
  %v470 = vadd.f32 %v104, %v469
  %v471 = vpop.f32.mrb[0].mxu0
  %v472 = vpop.f32.mrb[0].mxu0
  %v473 = vadd.f32 %v104, %v472
  %v474 = vpop.f32.mrb[0].mxu0
  %475 = vmatprep.mubr.bf16.mxu0 %v225
  %476 = vmatmul.mubr.bf16.gmra.mrb[0].mxu0 %v224
  %v477 = vpop.f32.mrb[0].mxu0
  %v478 = vadd.f32 %v104, %v477
  %v479 = vpop.f32.mrb[0].mxu0
  %v480 = vpop.f32.mrb[0].mxu0
  %v481 = vadd.f32 %v104, %v480
  %v482 = vpop.f32.mrb[0].mxu0
  %483 = vmatprep.mubr.bf16.mxu0 %v228
  %484 = vmatmul.mubr.bf16.gmra.mrb[0].mxu0 %v227
  %v485 = vpop.f32.mrb[0].mxu0
  %v486 = vadd.f32 %v104, %v485
  %v487 = vpop.f32.mrb[0].mxu0
  %v488 = vpop.f32.mrb[0].mxu0
  %v489 = vadd.f32 %v104, %v488
  %v490 = vpop.f32.mrb[0].mxu0
  %491 = vmatprep.mubr.bf16.mxu0 %v231
  %492 = vmatmul.mubr.bf16.gmra.mrb[0].mxu0 %v230
  %v493 = vpop.f32.mrb[0].mxu0
  %v494 = vadd.f32 %v104, %v493
  %v495 = vpop.f32.mrb[0].mxu0
  %v496 = vpop.f32.mrb[0].mxu0
  %v497 = vadd.f32 %v104, %v496
  %v498 = vpop.f32.mrb[0].mxu0
  %499 = vmatprep.mubr.bf16.mxu0 %v234
  %500 = vmatmul.mubr.bf16.gmra.mrb[0].mxu0 %v233
  %v501 = vpop.f32.mrb[0].mxu0
  %v502 = vadd.f32 %v104, %v501
  %v503 = vpop.f32.mrb[0].mxu0
  %v504 = vpop.f32.mrb[0].mxu0
  %v505 = vadd.f32 %v104, %v504
  %v506 = vpop.f32.mrb[0].mxu0
  %507 = vdwg.mxu0
  %508 = vmatprep.subr.bf16.mxu0 0
  %509 = vmatpush1.bf16.msra.mxu0 %v344
  %510 = vmatprep.subr.bf16.mxu0 0
  %511 = vmatpush1.bf16.msra.mxu0 %v345
  %512 = vmatprep.subr.bf16.mxu0 0
  %513 = vmatpush1.bf16.msra.mxu0 0
  %514 = vmatprep.subr.bf16.mxu0 0
  %515 = vmatpush1.bf16.msra.mxu0 0
  %516 = vmatprep.subr.bf16.mxu0 0
  %517 = vmatpush1.bf16.msra.mxu0 0
  %518 = vmatprep.subr.bf16.mxu0 0
  %519 = vmatpush1.bf16.msra.mxu0 0
  %520 = vmatprep.subr.bf16.mxu0 0
  %521 = vmatpush1.bf16.msra.mxu0 0
  %522 = vmatprep.subr.bf16.mxu0 0
  %523 = vmatpush1.bf16.msra.mxu0 0
  %524 = vmatprep.subr.bf16.mxu0 0
  %525 = vmatpush1.bf16.msra.mxu0 0
  %526 = vmatprep.subr.bf16.mxu0 0
  %527 = vmatpush1.bf16.msra.mxu0 0
  %528 = vmatprep.subr.bf16.mxu0 0
  %529 = vmatpush1.bf16.msra.mxu0 0
  %530 = vmatprep.subr.bf16.mxu0 0
  %531 = vmatpush1.bf16.msra.mxu0 0
  %532 = vmatprep.subr.bf16.mxu0 0
  %533 = vmatpush1.bf16.msra.mxu0 0
  %534 = vmatprep.subr.bf16.mxu0 0
  %535 = vmatpush1.bf16.msra.mxu0 0
  %536 = vmatprep.subr.bf16.mxu0 0
  %537 = vmatpush1.bf16.msra.mxu0 0
  %538 = vmatprep.subr.bf16.mxu0 0
  %539 = vmatpush1.bf16.msra.mxu0 0
  %540 = vmatprep.mubr.bf16.mxu0 0
  %541 = vmatmul.mubr.bf16.gmra.mrb[0].mxu0 %v366
  %v542 = vpop.f32.mrb[0].mxu0
  %v543 = vadd.f32 %v430, %v542
  %v544 = vpop.f32.mrb[0].mxu0
  %v545 = vpop.f32.mrb[0].mxu0
  %v546 = vadd.f32 %v433, %v545
  %v547 = vpop.f32.mrb[0].mxu0
  %548 = vmatprep.mubr.bf16.mxu0 0
  %549 = vmatmul.mubr.bf16.gmra.mrb[0].mxu0 %v369
  %v550 = vpop.f32.mrb[0].mxu0
  %v551 = vadd.f32 %v438, %v550
  %v552 = vpop.f32.mrb[0].mxu0
  %v553 = vpop.f32.mrb[0].mxu0
  %v554 = vadd.f32 %v441, %v553
  %v555 = vpop.f32.mrb[0].mxu0
  %556 = vmatprep.mubr.bf16.mxu0 0
  %557 = vmatmul.mubr.bf16.gmra.mrb[0].mxu0 %v372
  %v558 = vpop.f32.mrb[0].mxu0
  %v559 = vadd.f32 %v446, %v558
  %v560 = vpop.f32.mrb[0].mxu0
  %v561 = vpop.f32.mrb[0].mxu0
  %v562 = vadd.f32 %v449, %v561
  %v563 = vpop.f32.mrb[0].mxu0
  %564 = vmatprep.mubr.bf16.mxu0 0
  %565 = vmatmul.mubr.bf16.gmra.mrb[0].mxu0 %v375
  %v566 = vpop.f32.mrb[0].mxu0
  %v567 = vadd.f32 %v454, %v566
  %v568 = vpop.f32.mrb[0].mxu0
  %v569 = vpop.f32.mrb[0].mxu0
  %v570 = vadd.f32 %v457, %v569
  %v571 = vpop.f32.mrb[0].mxu0
  %572 = vmatprep.mubr.bf16.mxu0 0
  %573 = vmatmul.mubr.bf16.gmra.mrb[0].mxu0 %v378
  %v574 = vpop.f32.mrb[0].mxu0
  %v575 = vadd.f32 %v462, %v574
  %v576 = vpop.f32.mrb[0].mxu0
  %v577 = vpop.f32.mrb[0].mxu0
  %v578 = vadd.f32 %v465, %v577
  %v579 = vpop.f32.mrb[0].mxu0
  %580 = vmatprep.mubr.bf16.mxu0 0
  %581 = vmatmul.mubr.bf16.gmra.mrb[0].mxu0 %v381
  %v582 = vpop.f32.mrb[0].mxu0
  %v583 = vadd.f32 %v470, %v582
  %v584 = vpop.f32.mrb[0].mxu0
  %v585 = vpop.f32.mrb[0].mxu0
  %v586 = vadd.f32 %v473, %v585
  %v587 = vpop.f32.mrb[0].mxu0
  %588 = vmatprep.mubr.bf16.mxu0 0
  %589 = vmatmul.mubr.bf16.gmra.mrb[0].mxu0 %v384
  %v590 = vpop.f32.mrb[0].mxu0
  %v591 = vadd.f32 %v478, %v590
  %v592 = vpop.f32.mrb[0].mxu0
  %v593 = vpop.f32.mrb[0].mxu0
  %v594 = vadd.f32 %v481, %v593
  %v595 = vpop.f32.mrb[0].mxu0
  %596 = vmatprep.mubr.bf16.mxu0 0
  %597 = vmatmul.mubr.bf16.gmra.mrb[0].mxu0 %v387
  %v598 = vpop.f32.mrb[0].mxu0
  %v599 = vadd.f32 %v486, %v598
  %v600 = vpop.f32.mrb[0].mxu0
  %v601 = vpop.f32.mrb[0].mxu0
  %v602 = vadd.f32 %v489, %v601
  %v603 = vpop.f32.mrb[0].mxu0
  %604 = vmatprep.mubr.bf16.mxu0 0
  %605 = vmatmul.mubr.bf16.gmra.mrb[0].mxu0 %v390
  %v606 = vpop.f32.mrb[0].mxu0
  %v607 = vadd.f32 %v494, %v606
  %v608 = vpop.f32.mrb[0].mxu0
  %v609 = vpop.f32.mrb[0].mxu0
  %v610 = vadd.f32 %v497, %v609
  %v611 = vpop.f32.mrb[0].mxu0
  %612 = vmatprep.mubr.bf16.mxu0 0
  %613 = vmatmul.mubr.bf16.gmra.mrb[0].mxu0 %v393
  %v614 = vpop.f32.mrb[0].mxu0
  %v615 = vadd.f32 %v502, %v614
  %v616 = vpop.f32.mrb[0].mxu0
  %v617 = vpop.f32.mrb[0].mxu0
  %v618 = vadd.f32 %v505, %v617
  %v619 = vpop.f32.mrb[0].mxu0
  %620 = vdwg.mxu0
  %v621 = vmax.f32 %v543, 0.0
  %v622 = vmax.f32 %v546, 0.0
  %v623 = vmax.f32 %v551, 0.0
  %v624 = vmax.f32 %v554, 0.0
  %v625 = vmax.f32 %v559, 0.0
  %v626 = vmax.f32 %v562, 0.0
  %v627 = vmax.f32 %v567, 0.0
  %v628 = vmax.f32 %v570, 0.0
  %v629 = vmax.f32 %v575, 0.0
  %v630 = vmax.f32 %v578, 0.0
  %v631 = vmax.f32 %v583, 0.0
  %v632 = vmax.f32 %v586, 0.0
  %v633 = vmax.f32 %v591, 0.0
  %v634 = vmax.f32 %v594, 0.0
  %v635 = vmax.f32 %v599, 0.0
  %v636 = vmax.f32 %v602, 0.0
  %v637 = vmax.f32 %v607, 0.0
  %v638 = vmax.f32 %v610, 0.0
  %v639 = vmax.f32 %v615, 0.0
  %v640 = vmax.f32 %v618, 0.0
  %v641 = vpack.c.bf16 %v622, %v621
  %v642 = vpack.c.bf16 %v624, %v623
  %v643 = vpack.c.bf16 %v626, %v625
  %v644 = vpack.c.bf16 %v628, %v627
  %v645 = vpack.c.bf16 %v630, %v629
  %v646 = vpack.c.bf16 %v632, %v631
  %v647 = vpack.c.bf16 %v634, %v633
  %v648 = vpack.c.bf16 %v636, %v635
  %v649 = vpack.c.bf16 %v638, %v637
  %v650 = vpack.c.bf16 %v640, %v639
  %v651 = vld [vmem:[%s3] sm:$0xf]
  %v652 = vld [vmem:[%s3 + $0x4] sm:$0xf]
  %v653 = vld [vmem:[%s3 + $0x8] sm:$0xf]
  %v654 = vld [vmem:[%s3 + $0xc] sm:$0xf]
  %v655 = vld [vmem:[%s4] sm:$0x1]
  %v657 = vlaneseq
  %v658 = vshrl.u32 %v657, 7
  %v659 = vsub.s32 0, %v658
  %v660 = vrot.slane %v655, %v659
  %v666 = vunpack.c.l.b16 %v651
  %v667 = vunpack.c.l.b16 %v652
  %v668 = vunpack.c.l.b16 %v653
  %v669 = vunpack.c.l.b16 %v654
  %v670 = vpack.c.b16 %v667, %v666
  %v671 = vpack.c.b16 %v669, %v668
  %v675 = vsel %vm364, %v641, 0
  %v678 = vsel %vm364, %v642, 0
  %v681 = vsel %vm364, %v643, 0
  %v684 = vsel %vm364, %v644, 0
  %v687 = vsel %vm364, %v645, 0
  %v690 = vsel %vm364, %v646, 0
  %v693 = vsel %vm364, %v647, 0
  %v696 = vsel %vm364, %v648, 0
  %v699 = vsel %vm364, %v649, 0
  %v702 = vsel %vm364, %v650, 0
  %704 = vmatprep.subr.bf16.mxu0 0
  %705 = vmatpush1.bf16.msra.mxu0 %v670
  %706 = vmatprep.subr.bf16.mxu0 0
  %707 = vmatpush1.bf16.msra.mxu0 %v671
  %708 = vmatprep.subr.bf16.mxu0 0
  %709 = vmatpush1.bf16.msra.mxu0 0
  %710 = vmatprep.subr.bf16.mxu0 0
  %711 = vmatpush1.bf16.msra.mxu0 0
  %712 = vmatprep.subr.bf16.mxu0 0
  %713 = vmatpush1.bf16.msra.mxu0 0
  %714 = vmatprep.subr.bf16.mxu0 0
  %715 = vmatpush1.bf16.msra.mxu0 0
  %716 = vmatprep.subr.bf16.mxu0 0
  %717 = vmatpush1.bf16.msra.mxu0 0
  %718 = vmatprep.subr.bf16.mxu0 0
  %719 = vmatpush1.bf16.msra.mxu0 0
  %720 = vmatprep.subr.bf16.mxu0 0
  %721 = vmatpush1.bf16.msra.mxu0 0
  %722 = vmatprep.subr.bf16.mxu0 0
  %723 = vmatpush1.bf16.msra.mxu0 0
  %724 = vmatprep.subr.bf16.mxu0 0
  %725 = vmatpush1.bf16.msra.mxu0 0
  %726 = vmatprep.subr.bf16.mxu0 0
  %727 = vmatpush1.bf16.msra.mxu0 0
  %728 = vmatprep.subr.bf16.mxu0 0
  %729 = vmatpush1.bf16.msra.mxu0 0
  %730 = vmatprep.subr.bf16.mxu0 0
  %731 = vmatpush1.bf16.msra.mxu0 0
  %732 = vmatprep.subr.bf16.mxu0 0
  %733 = vmatpush1.bf16.msra.mxu0 0
  %734 = vmatprep.subr.bf16.mxu0 0
  %735 = vmatpush1.bf16.msra.mxu0 0
  %736 = vmatprep.mubr.bf16.mxu0 0
  %737 = vmatmul.mubr.bf16.gmra.mrb[0].mxu0 %v675
  %v738 = vpop.f32.mrb[0].mxu0
  %v739 = vadd.f32 %v660, %v738
  %v740 = vpop.f32.mrb[0].mxu0
  %v741 = vpop.f32.mrb[0].mxu0
  %v742 = vadd.f32 %v660, %v741
  %v743 = vpop.f32.mrb[0].mxu0
  %744 = vmatprep.mubr.bf16.mxu0 0
  %745 = vmatmul.mubr.bf16.gmra.mrb[0].mxu0 %v678
  %v746 = vpop.f32.mrb[0].mxu0
  %v747 = vadd.f32 %v660, %v746
  %v748 = vpop.f32.mrb[0].mxu0
  %v749 = vpop.f32.mrb[0].mxu0
  %v750 = vadd.f32 %v660, %v749
  %v751 = vpop.f32.mrb[0].mxu0
  %752 = vmatprep.mubr.bf16.mxu0 0
  %753 = vmatmul.mubr.bf16.gmra.mrb[0].mxu0 %v681
  %v754 = vpop.f32.mrb[0].mxu0
  %v755 = vadd.f32 %v660, %v754
  %v756 = vpop.f32.mrb[0].mxu0
  %v757 = vpop.f32.mrb[0].mxu0
  %v758 = vadd.f32 %v660, %v757
  %v759 = vpop.f32.mrb[0].mxu0
  %760 = vmatprep.mubr.bf16.mxu0 0
  %761 = vmatmul.mubr.bf16.gmra.mrb[0].mxu0 %v684
  %v762 = vpop.f32.mrb[0].mxu0
  %v763 = vadd.f32 %v660, %v762
  %v764 = vpop.f32.mrb[0].mxu0
  %v765 = vpop.f32.mrb[0].mxu0
  %v766 = vadd.f32 %v660, %v765
  %v767 = vpop.f32.mrb[0].mxu0
  %768 = vmatprep.mubr.bf16.mxu0 0
  %769 = vmatmul.mubr.bf16.gmra.mrb[0].mxu0 %v687
  %v770 = vpop.f32.mrb[0].mxu0
  %v771 = vadd.f32 %v660, %v770
  %v772 = vpop.f32.mrb[0].mxu0
  %v773 = vpop.f32.mrb[0].mxu0
  %v774 = vadd.f32 %v660, %v773
  %v775 = vpop.f32.mrb[0].mxu0
  %776 = vmatprep.mubr.bf16.mxu0 0
  %777 = vmatmul.mubr.bf16.gmra.mrb[0].mxu0 %v690
  %v778 = vpop.f32.mrb[0].mxu0
  %v779 = vadd.f32 %v660, %v778
  %v780 = vpop.f32.mrb[0].mxu0
  %v781 = vpop.f32.mrb[0].mxu0
  %v782 = vadd.f32 %v660, %v781
  %v783 = vpop.f32.mrb[0].mxu0
  %784 = vmatprep.mubr.bf16.mxu0 0
  %785 = vmatmul.mubr.bf16.gmra.mrb[0].mxu0 %v693
  %v786 = vpop.f32.mrb[0].mxu0
  %v787 = vadd.f32 %v660, %v786
  %v788 = vpop.f32.mrb[0].mxu0
  %v789 = vpop.f32.mrb[0].mxu0
  %v790 = vadd.f32 %v660, %v789
  %v791 = vpop.f32.mrb[0].mxu0
  %792 = vmatprep.mubr.bf16.mxu0 0
  %793 = vmatmul.mubr.bf16.gmra.mrb[0].mxu0 %v696
  %v794 = vpop.f32.mrb[0].mxu0
  %v795 = vadd.f32 %v660, %v794
  %v796 = vpop.f32.mrb[0].mxu0
  %v797 = vpop.f32.mrb[0].mxu0
  %v798 = vadd.f32 %v660, %v797
  %v799 = vpop.f32.mrb[0].mxu0
  %800 = vmatprep.mubr.bf16.mxu0 0
  %801 = vmatmul.mubr.bf16.gmra.mrb[0].mxu0 %v699
  %v802 = vpop.f32.mrb[0].mxu0
  %v803 = vadd.f32 %v660, %v802
  %v804 = vpop.f32.mrb[0].mxu0
  %v805 = vpop.f32.mrb[0].mxu0
  %v806 = vadd.f32 %v660, %v805
  %v807 = vpop.f32.mrb[0].mxu0
  %808 = vmatprep.mubr.bf16.mxu0 0
  %809 = vmatmul.mubr.bf16.gmra.mrb[0].mxu0 %v702
  %v810 = vpop.f32.mrb[0].mxu0
  %v811 = vadd.f32 %v660, %v810
  %v812 = vpop.f32.mrb[0].mxu0
  %v813 = vpop.f32.mrb[0].mxu0
  %v814 = vadd.f32 %v660, %v813
  %v815 = vpop.f32.mrb[0].mxu0
  %816 = vdwg.mxu0
  %817 = vst [vmem:[%s5] sm:$0xff] %v739
  %818 = vst [vmem:[%s5 + $0x8] sm:$0xff] %v742
  %819 = vst [vmem:[%s5 + $0x10] sm:$0xff] %v747
  %820 = vst [vmem:[%s5 + $0x18] sm:$0xff] %v750
  %821 = vst [vmem:[%s5 + $0x20] sm:$0xff] %v755
  %822 = vst [vmem:[%s5 + $0x28] sm:$0xff] %v758
  %823 = vst [vmem:[%s5 + $0x30] sm:$0xff] %v763
  %824 = vst [vmem:[%s5 + $0x38] sm:$0xff] %v766
  %825 = vst [vmem:[%s5 + $0x40] sm:$0xff] %v771
  %826 = vst [vmem:[%s5 + $0x48] sm:$0xff] %v774
  %827 = vst [vmem:[%s5 + $0x50] sm:$0xff] %v779
  %828 = vst [vmem:[%s5 + $0x58] sm:$0xff] %v782
  %829 = vst [vmem:[%s5 + $0x60] sm:$0xff] %v787
  %830 = vst [vmem:[%s5 + $0x68] sm:$0xff] %v790
  %831 = vst [vmem:[%s5 + $0x70] sm:$0xff] %v795
  %832 = vst [vmem:[%s5 + $0x78] sm:$0xff] %v798
  %833 = vst [vmem:[%s5 + $0x80] sm:$0xff] %v803
  %834 = vst [vmem:[%s5 + $0x88] sm:$0xff] %v806
  %835 = vst [vmem:[%s5 + $0x90] sm:$0xff] %v811
  %836 = vst [vmem:[%s5 + $0x98] sm:$0xff] %v814
  %v837 = vsel %vm364, %v621, 0.0
  %v838 = vsel %vm364, %v622, 0.0
  %v839 = vadd.f32 %v837, %v838
  %v840 = vsel %vm364, %v623, 0.0
  %v841 = vadd.f32 %v839, %v840
  %v842 = vsel %vm364, %v624, 0.0
  %v843 = vadd.f32 %v841, %v842
  %v844 = vsel %vm364, %v625, 0.0
  %v845 = vadd.f32 %v843, %v844
  %v846 = vsel %vm364, %v626, 0.0
  %v847 = vadd.f32 %v845, %v846
  %v848 = vsel %vm364, %v627, 0.0
  %v849 = vadd.f32 %v847, %v848
  %v850 = vsel %vm364, %v628, 0.0
  %v851 = vadd.f32 %v849, %v850
  %v852 = vrot.slane %v851, 4
  %v853 = vadd.f32 %v851, %v852
  %v854 = vrot.slane %v853, 2
  %v855 = vadd.f32 %v853, %v854
  %v856 = vrot.slane %v855, 1
  %v857 = vadd.f32 %v855, %v856
  %v858 = vrcp.pop 64.0
  %v859 = vmul.f32 %v857, %v858
  %v860 = vsel %vm364, %v629, 0.0
  %v861 = vsel %vm364, %v630, 0.0
  %v862 = vadd.f32 %v860, %v861
  %v863 = vsel %vm364, %v631, 0.0
  %v864 = vadd.f32 %v862, %v863
  %v865 = vsel %vm364, %v632, 0.0
  %v866 = vadd.f32 %v864, %v865
  %v867 = vsel %vm364, %v633, 0.0
  %v868 = vadd.f32 %v866, %v867
  %v869 = vsel %vm364, %v634, 0.0
  %v870 = vadd.f32 %v868, %v869
  %v871 = vsel %vm364, %v635, 0.0
  %v872 = vadd.f32 %v870, %v871
  %v873 = vsel %vm364, %v636, 0.0
  %v874 = vadd.f32 %v872, %v873
  %v875 = vrot.slane %v874, 4
  %v876 = vadd.f32 %v874, %v875
  %v877 = vrot.slane %v876, 2
  %v878 = vadd.f32 %v876, %v877
  %v879 = vrot.slane %v878, 1
  %v880 = vadd.f32 %v878, %v879
  %v881 = vmul.f32 %v880, %v858
  %vm882 = vcmask 1040384
  %v883 = vsel %vm882, %v859, %v881
  %vm884 = vcmask 254976
  %885 = vst.msk [vmem:[%s6] sm:$0x3] %vm884, %v883
  // Predicated region
  $region22: #{onnx_model_forward.9} parent=0 // pred_check
    _
  $region23: #{onnx_model_forward.9} parent=0 // pred_check_branch
    %887 = sbr.rel (0) target = $region25
  $region24: #{onnx_model_forward.9} parent=0 // pred_region
    _
  $region25: #{onnx_model_forward.9} parent=0 // pred_fallthru
    _
  // Predicated region
  $region26: #{onnx_model_forward.9} parent=0 // pred_check
    _
  $region27: #{onnx_model_forward.9} parent=0 // pred_check_branch
    %889 = sbr.rel (0) target = $region29
  $region28: #{onnx_model_forward.9} parent=0 // pred_region
    _
  $region29: #{onnx_model_forward.9} parent=0 // pred_fallthru
    _
  // Predicated region
  $region30: #{onnx_model_forward.9} parent=0 // pred_check
    _
  $region31: #{onnx_model_forward.9} parent=0 // pred_check_branch
    %891 = sbr.rel (0) target = $region33
  $region32: #{onnx_model_forward.9} parent=0 // pred_region
    _
  $region33: #{onnx_model_forward.9} parent=0 // pred_fallthru
    _
  // Predicated region
  $region34: #{onnx_model_forward.9} parent=0 // pred_check
    _
  $region35: #{onnx_model_forward.9} parent=0 // pred_check_branch
    %893 = sbr.rel (0) target = $region37
  $region36: #{onnx_model_forward.9} parent=0 // pred_region
    _
  $region37: #{onnx_model_forward.9} parent=0 // pred_fallthru
    _

// kernel: onnx_model_forward.10
$region0: #{onnx_model_forward.10}
  #allocation0 [shape = 'u32[]', space=smem, size = 0x4, offset = 0x4, fixed_abs, tag = 'smem constant byte address 0x4 - core index']
  #allocation1 [shape = 'u32[144,128]{1,0:T(1,128)}', space=vmem, size = 0x12000, scoped, tag = 'internal scratch']
  %s0 = inlined_call_operand.vmem [shape: f32[4,32], index: 0, kind: input, shape index: {}]
  %s1 = inlined_call_operand.vmem [shape: f32[4,32], index: 1, kind: input, shape index: {}]
  %s2 = inlined_call_operand.vmem [shape: f32[4,32], index: 2, kind: output, shape index: {}]
  %s3 = sld [smem:[#allocation0]]
  $region18: #{onnx_model_forward.10} parent=0
    _
  %s5 = ssub.s32 1, %s3
  %s6 = scalar_select 0, %s5, %s3
  // Predicated region
  $region2: #{onnx_model_forward.10} parent=0 // pred_check
    _
  $region3: #{onnx_model_forward.10} parent=0 // pred_check_branch
    %8 = sbr.rel (0) target = $region5
  $region4: #{onnx_model_forward.10} parent=0 // pred_region
    _
  $region5: #{onnx_model_forward.10} parent=0 // pred_fallthru
    _
  // Predicated region
  $region6: #{onnx_model_forward.10} parent=0 // pred_check
    _
  $region7: #{onnx_model_forward.10} parent=0 // pred_check_branch
    %10 = sbr.rel (0) target = $region9
  $region8: #{onnx_model_forward.10} parent=0 // pred_region
    _
  $region9: #{onnx_model_forward.10} parent=0 // pred_fallthru
    _
  %v11 = vld [vmem:[%s0] sm:$0xf]
  %v12 = vld [vmem:[%s1] sm:$0xf]
  %v13 = vmax.f32 %v12, -4.1351666
  %v14 = vmin.f32 %v13, 4.1351666
  %v16 = vrot.slane %v11, 2
  %v18 = vadd.f32 %v11, %v16
  %v19 = vmul.f32 %v18, 0.5
  %v20 = vrot.slane %v11, 6
  %v22 = vsub.f32 %v11, %v20
  %v23 = vadd.f32 %v22, 1.0
  %v24 = vmul.f32 %v14, 1.442695
  %v25 = vpow.pop %v24
  %v26 = vmul.f32 %v23, %v25
  %v28 = vrot.slane %v12, 6
  %v30 = vmul.f32 %v23, %v28
  %v32 = vrot.slane %v30, 2
  %v34 = vadd.f32 %v19, %v32
  %v35 = vsub.f32 %v26, 1.0
  %v36 = vmul.f32 %v35, 0.5
  %v38 = vrot.slane %v36, 2
  %v40 = vsub.f32 %v34, %v38
  %v41 = vmax.f32 %v40, 0.0
  %v42 = vmin.f32 %v41, 15.0
  %v43 = vadd.f32 %v34, %v38
  %v44 = vmax.f32 %v43, 0.0
  %v45 = vmin.f32 %v44, 15.0
  %v47 = vrot.slane %v45, 6
  %vm49 = vcmask 1041408
  %v50 = vsel %vm49, %v42, %v47
  %vm51 = vcmask 1042432
  %v52 = vsel %vm51, %v50, %v47
  %vm53 = vcmask 257024
  %54 = vst.msk [vmem:[%s2] sm:$0xf] %vm53, %v52
  // Predicated region
  $region10: #{onnx_model_forward.10} parent=0 // pred_check
    _
  $region11: #{onnx_model_forward.10} parent=0 // pred_check_branch
    %56 = sbr.rel (0) target = $region13
  $region12: #{onnx_model_forward.10} parent=0 // pred_region
    _
  $region13: #{onnx_model_forward.10} parent=0 // pred_fallthru
    _
  // Predicated region
  $region14: #{onnx_model_forward.10} parent=0 // pred_check
    _
  $region15: #{onnx_model_forward.10} parent=0 // pred_check_branch
    %58 = sbr.rel (0) target = $region17
  $region16: #{onnx_model_forward.10} parent=0 // pred_region
    _
  $region17: #{onnx_model_forward.10} parent=0 // pred_fallthru
    _

// kernel: onnx_model_forward.11
$region0: #{onnx_model_forward.11}
  #allocation0 [shape = 'u32[]', space=smem, size = 0x4, offset = 0x4, fixed_abs, tag = 'smem constant byte address 0x4 - core index']
  #allocation1 [shape = 'u32[144,128]{1,0:T(1,128)}', space=vmem, size = 0x12000, scoped, tag = 'internal scratch']
  %s0 = inlined_call_operand.vmem [shape: bf16[32,1568], index: 0, kind: input, shape index: {}]
  %s1 = inlined_call_operand.vmem [shape: bf16[1,32], index: 1, kind: input, shape index: {}]
  %s2 = inlined_call_operand.vmem [shape: f32[32,5], index: 2, kind: input, shape index: {}]
  %s3 = inlined_call_operand.vmem [shape: bf16[1568,128], index: 3, kind: input, shape index: {}]
  %s4 = inlined_call_operand.vmem [shape: f32[1,128], index: 4, kind: input, shape index: {}]
  %s5 = inlined_call_operand.vmem [shape: bf16[32,32], index: 5, kind: input, shape index: {}]
  %s6 = inlined_call_operand.vmem [shape: f32[1,32], index: 6, kind: input, shape index: {}]
  %s7 = inlined_call_operand.vmem [shape: bf16[32,128], index: 7, kind: input, shape index: {}]
  %s8 = inlined_call_operand.vmem [shape: f32[1,128], index: 8, kind: input, shape index: {}]
  %s9 = inlined_call_operand.vmem [shape: bf16[128,128], index: 9, kind: input, shape index: {}]
  %s10 = inlined_call_operand.vmem [shape: f32[1,128], index: 10, kind: input, shape index: {}]
  %s11 = inlined_call_operand.vmem [shape: bf16[128,128], index: 11, kind: input, shape index: {}]
  %s12 = inlined_call_operand.vmem [shape: f32[1,128], index: 12, kind: input, shape index: {}]
  %s13 = inlined_call_operand.vmem [shape: f32[32,8], index: 13, kind: output, shape index: {}]
  %s14 = sld [smem:[#allocation0]]
  $region62: #{onnx_model_forward.11} parent=0
    _
  %s16 = ssub.s32 1, %s14
  %s17 = scalar_select 0, %s16, %s14
  // Predicated region
  $region2: #{onnx_model_forward.11} parent=0 // pred_check
    _
  $region3: #{onnx_model_forward.11} parent=0 // pred_check_branch
    %19 = sbr.rel (0) target = $region5
  $region4: #{onnx_model_forward.11} parent=0 // pred_region
    _
  $region5: #{onnx_model_forward.11} parent=0 // pred_fallthru
    _
  // Predicated region
  $region6: #{onnx_model_forward.11} parent=0 // pred_check
    _
  $region7: #{onnx_model_forward.11} parent=0 // pred_check_branch
    %21 = sbr.rel (0) target = $region9
  $region8: #{onnx_model_forward.11} parent=0 // pred_region
    _
  $region9: #{onnx_model_forward.11} parent=0 // pred_fallthru
    _
  // Predicated region
  $region10: #{onnx_model_forward.11} parent=0 // pred_check
    _
  $region11: #{onnx_model_forward.11} parent=0 // pred_check_branch
    %23 = sbr.rel (0) target = $region13
  $region12: #{onnx_model_forward.11} parent=0 // pred_region
    _
  $region13: #{onnx_model_forward.11} parent=0 // pred_fallthru
    _
  // Predicated region
  $region14: #{onnx_model_forward.11} parent=0 // pred_check
    _
  $region15: #{onnx_model_forward.11} parent=0 // pred_check_branch
    %25 = sbr.rel (0) target = $region17
  $region16: #{onnx_model_forward.11} parent=0 // pred_region
    _
  $region17: #{onnx_model_forward.11} parent=0 // pred_fallthru
    _
  // Predicated region
  $region18: #{onnx_model_forward.11} parent=0 // pred_check
    _
  $region19: #{onnx_model_forward.11} parent=0 // pred_check_branch
    %27 = sbr.rel (0) target = $region21
  $region20: #{onnx_model_forward.11} parent=0 // pred_region
    _
  $region21: #{onnx_model_forward.11} parent=0 // pred_fallthru
    _
  // Predicated region
  $region22: #{onnx_model_forward.11} parent=0 // pred_check
    _
  $region23: #{onnx_model_forward.11} parent=0 // pred_check_branch
    %29 = sbr.rel (0) target = $region25
  $region24: #{onnx_model_forward.11} parent=0 // pred_region
    _
  $region25: #{onnx_model_forward.11} parent=0 // pred_fallthru
    _
  // Predicated region
  $region26: #{onnx_model_forward.11} parent=0 // pred_check
    _
  $region27: #{onnx_model_forward.11} parent=0 // pred_check_branch
    %31 = sbr.rel (0) target = $region29
  $region28: #{onnx_model_forward.11} parent=0 // pred_region
    _
  $region29: #{onnx_model_forward.11} parent=0 // pred_fallthru
    _
  // Predicated region
  $region30: #{onnx_model_forward.11} parent=0 // pred_check
    _
  $region31: #{onnx_model_forward.11} parent=0 // pred_check_branch
    %33 = sbr.rel (0) target = $region33
  $region32: #{onnx_model_forward.11} parent=0 // pred_region
    _
  $region33: #{onnx_model_forward.11} parent=0 // pred_fallthru
    _
  // Predicated region
  $region34: #{onnx_model_forward.11} parent=0 // pred_check
    _
  $region35: #{onnx_model_forward.11} parent=0 // pred_check_branch
    %35 = sbr.rel (0) target = $region37
  $region36: #{onnx_model_forward.11} parent=0 // pred_region
    _
  $region37: #{onnx_model_forward.11} parent=0 // pred_fallthru
    _
  // Predicated region
  $region38: #{onnx_model_forward.11} parent=0 // pred_check
    _
  $region39: #{onnx_model_forward.11} parent=0 // pred_check_branch
    %37 = sbr.rel (0) target = $region41
  $region40: #{onnx_model_forward.11} parent=0 // pred_region
    _
  $region41: #{onnx_model_forward.11} parent=0 // pred_fallthru
    _
  // Predicated region
  $region42: #{onnx_model_forward.11} parent=0 // pred_check
    _
  $region43: #{onnx_model_forward.11} parent=0 // pred_check_branch
    %39 = sbr.rel (0) target = $region45
  $region44: #{onnx_model_forward.11} parent=0 // pred_region
    _
  $region45: #{onnx_model_forward.11} parent=0 // pred_fallthru
    _
  // Predicated region
  $region46: #{onnx_model_forward.11} parent=0 // pred_check
    _
  $region47: #{onnx_model_forward.11} parent=0 // pred_check_branch
    %41 = sbr.rel (0) target = $region49
  $region48: #{onnx_model_forward.11} parent=0 // pred_region
    _
  $region49: #{onnx_model_forward.11} parent=0 // pred_fallthru
    _
  // Predicated region
  $region50: #{onnx_model_forward.11} parent=0 // pred_check
    _
  $region51: #{onnx_model_forward.11} parent=0 // pred_check_branch
    %43 = sbr.rel (0) target = $region53
  $region52: #{onnx_model_forward.11} parent=0 // pred_region
    _
  $region53: #{onnx_model_forward.11} parent=0 // pred_fallthru
    _
  %v45 = vld [vmem:[%s0] sm:$0xff]
  %v46 = vld [vmem:[%s0 + $0x8] sm:$0xff]
  %v47 = vld [vmem:[%s0 + $0x10] sm:$0xff]
  %v48 = vld [vmem:[%s0 + $0x18] sm:$0xff]
  %v49 = vld [vmem:[%s0 + $0x20] sm:$0xff]
  %v50 = vld [vmem:[%s0 + $0x28] sm:$0xff]
  %v51 = vld [vmem:[%s0 + $0x30] sm:$0xf]
  %v52 = vld [vmem:[%s0 + $0x34] sm:$0xff]
  %v53 = vld [vmem:[%s0 + $0x3c] sm:$0xff]
  %v54 = vld [vmem:[%s0 + $0x44] sm:$0xff]
  %v55 = vld [vmem:[%s0 + $0x4c] sm:$0xff]
  %v56 = vld [vmem:[%s0 + $0x54] sm:$0xff]
  %v57 = vld [vmem:[%s0 + $0x5c] sm:$0xff]
  %v58 = vld [vmem:[%s0 + $0x64] sm:$0xf]
  %v59 = vld [vmem:[%s0 + $0x68] sm:$0xff]
  %v60 = vld [vmem:[%s0 + $0x70] sm:$0xff]
  %v61 = vld [vmem:[%s0 + $0x78] sm:$0xff]
  %v62 = vld [vmem:[%s0 + $0x80] sm:$0xff]
  %v63 = vld [vmem:[%s0 + $0x88] sm:$0xff]
  %v64 = vld [vmem:[%s0 + $0x90] sm:$0xff]
  %v65 = vld [vmem:[%s0 + $0x98] sm:$0xf]
  %v66 = vld [vmem:[%s0 + $0x9c] sm:$0xff]
  %v67 = vld [vmem:[%s0 + $0xa4] sm:$0xff]
  %v68 = vld [vmem:[%s0 + $0xac] sm:$0xff]
  %v69 = vld [vmem:[%s0 + $0xb4] sm:$0xff]
  %v70 = vld [vmem:[%s0 + $0xbc] sm:$0xff]
  %v71 = vld [vmem:[%s0 + $0xc4] sm:$0xff]
  %v72 = vld [vmem:[%s0 + $0xcc] sm:$0xf]
  %v73 = vld [vmem:[%s3] sm:$0xf]
  %v74 = vld [vmem:[%s3 + $0x4] sm:$0xf]
  %v75 = vld [vmem:[%s3 + $0x8] sm:$0xf]
  %v76 = vld [vmem:[%s3 + $0xc] sm:$0xf]
  %v77 = vld [vmem:[%s3 + $0x10] sm:$0xf]
  %v78 = vld [vmem:[%s3 + $0x14] sm:$0xf]
  %v79 = vld [vmem:[%s3 + $0x18] sm:$0xf]
  %v80 = vld [vmem:[%s3 + $0x1c] sm:$0xf]
  %v81 = vld [vmem:[%s3 + $0x20] sm:$0xf]
  %v82 = vld [vmem:[%s3 + $0x24] sm:$0xf]
  %v83 = vld [vmem:[%s3 + $0x28] sm:$0xf]
  %v84 = vld [vmem:[%s3 + $0x2c] sm:$0xf]
  %v85 = vld [vmem:[%s3 + $0x30] sm:$0xf]
  %v86 = vld [vmem:[%s3 + $0x34] sm:$0xf]
  %v87 = vld [vmem:[%s3 + $0x38] sm:$0xf]
  %v88 = vld [vmem:[%s3 + $0x3c] sm:$0xf]
  %v89 = vld [vmem:[%s3 + $0x40] sm:$0xf]
  %v90 = vld [vmem:[%s3 + $0x44] sm:$0xf]
  %v91 = vld [vmem:[%s3 + $0x48] sm:$0xf]
  %v92 = vld [vmem:[%s3 + $0x4c] sm:$0xf]
  %v93 = vld [vmem:[%s3 + $0x50] sm:$0xf]
  %v94 = vld [vmem:[%s3 + $0x54] sm:$0xf]
  %v95 = vld [vmem:[%s3 + $0x58] sm:$0xf]
  %v96 = vld [vmem:[%s3 + $0x5c] sm:$0xf]
  %v97 = vld [vmem:[%s3 + $0x60] sm:$0xf]
  %v98 = vld [vmem:[%s3 + $0x64] sm:$0xf]
  %v99 = vld [vmem:[%s3 + $0x68] sm:$0xf]
  %v100 = vld [vmem:[%s3 + $0x6c] sm:$0xf]
  %v101 = vld [vmem:[%s3 + $0x70] sm:$0xf]
  %v102 = vld [vmem:[%s3 + $0x74] sm:$0xf]
  %v103 = vld [vmem:[%s3 + $0x78] sm:$0xf]
  %v104 = vld [vmem:[%s3 + $0x7c] sm:$0xf]
  %v105 = vld [vmem:[%s3 + $0x80] sm:$0xf]
  %v106 = vld [vmem:[%s3 + $0x84] sm:$0xf]
  %v107 = vld [vmem:[%s3 + $0x88] sm:$0xf]
  %v108 = vld [vmem:[%s3 + $0x8c] sm:$0xf]
  %v109 = vld [vmem:[%s3 + $0x90] sm:$0xf]
  %v110 = vld [vmem:[%s3 + $0x94] sm:$0xf]
  %v111 = vld [vmem:[%s3 + $0x98] sm:$0xf]
  %v112 = vld [vmem:[%s3 + $0x9c] sm:$0xf]
  %v113 = vld [vmem:[%s3 + $0xa0] sm:$0xf]
  %v114 = vld [vmem:[%s3 + $0xa4] sm:$0xf]
  %v115 = vld [vmem:[%s3 + $0xa8] sm:$0xf]
  %v116 = vld [vmem:[%s3 + $0xac] sm:$0xf]
  %v117 = vld [vmem:[%s3 + $0xb0] sm:$0xf]
  %v118 = vld [vmem:[%s3 + $0xb4] sm:$0xf]
  %v119 = vld [vmem:[%s3 + $0xb8] sm:$0xf]
  %v120 = vld [vmem:[%s3 + $0xbc] sm:$0xf]
  %v121 = vld [vmem:[%s3 + $0xc0] sm:$0xf]
  %v122 = vld [vmem:[%s3 + $0xc4] sm:$0xf]
  %v123 = vld [vmem:[%s3 + $0xc8] sm:$0xf]
  %v124 = vld [vmem:[%s3 + $0xcc] sm:$0xf]
  %v125 = vld [vmem:[%s3 + $0xd0] sm:$0xf]
  %v126 = vld [vmem:[%s3 + $0xd4] sm:$0xf]
  %v127 = vld [vmem:[%s3 + $0xd8] sm:$0xf]
  %v128 = vld [vmem:[%s3 + $0xdc] sm:$0xf]
  %v129 = vld [vmem:[%s3 + $0xe0] sm:$0xf]
  %v130 = vld [vmem:[%s3 + $0xe4] sm:$0xf]
  %v131 = vld [vmem:[%s3 + $0xe8] sm:$0xf]
  %v132 = vld [vmem:[%s3 + $0xec] sm:$0xf]
  %v133 = vld [vmem:[%s3 + $0xf0] sm:$0xf]
  %v134 = vld [vmem:[%s3 + $0xf4] sm:$0xf]
  %v135 = vld [vmem:[%s3 + $0xf8] sm:$0xf]
  %v136 = vld [vmem:[%s3 + $0xfc] sm:$0xf]
  %v137 = vld [vmem:[%s3 + $0x100] sm:$0xf]
  %v138 = vld [vmem:[%s3 + $0x104] sm:$0xf]
  %v139 = vld [vmem:[%s3 + $0x108] sm:$0xf]
  %v140 = vld [vmem:[%s3 + $0x10c] sm:$0xf]
  %v141 = vld [vmem:[%s3 + $0x110] sm:$0xf]
  %v142 = vld [vmem:[%s3 + $0x114] sm:$0xf]
  %v143 = vld [vmem:[%s3 + $0x118] sm:$0xf]
  %v144 = vld [vmem:[%s3 + $0x11c] sm:$0xf]
  %v145 = vld [vmem:[%s3 + $0x120] sm:$0xf]
  %v146 = vld [vmem:[%s3 + $0x124] sm:$0xf]
  %v147 = vld [vmem:[%s3 + $0x128] sm:$0xf]
  %v148 = vld [vmem:[%s3 + $0x12c] sm:$0xf]
  %v149 = vld [vmem:[%s3 + $0x130] sm:$0xf]
  %v150 = vld [vmem:[%s3 + $0x134] sm:$0xf]
  %v151 = vld [vmem:[%s3 + $0x138] sm:$0xf]
  %v152 = vld [vmem:[%s3 + $0x13c] sm:$0xf]
  %v153 = vld [vmem:[%s3 + $0x140] sm:$0xf]
  %v154 = vld [vmem:[%s3 + $0x144] sm:$0xf]
  %v155 = vld [vmem:[%s3 + $0x148] sm:$0xf]
  %v156 = vld [vmem:[%s3 + $0x14c] sm:$0xf]
  %v157 = vld [vmem:[%s3 + $0x150] sm:$0xf]
  %v158 = vld [vmem:[%s3 + $0x154] sm:$0xf]
  %v159 = vld [vmem:[%s3 + $0x158] sm:$0xf]
  %v160 = vld [vmem:[%s3 + $0x15c] sm:$0xf]
  %v161 = vld [vmem:[%s3 + $0x160] sm:$0xf]
  %v162 = vld [vmem:[%s3 + $0x164] sm:$0xf]
  %v163 = vld [vmem:[%s3 + $0x168] sm:$0xf]
  %v164 = vld [vmem:[%s3 + $0x16c] sm:$0xf]
  %v165 = vld [vmem:[%s3 + $0x170] sm:$0xf]
  %v166 = vld [vmem:[%s3 + $0x174] sm:$0xf]
  %v167 = vld [vmem:[%s3 + $0x178] sm:$0xf]
  %v168 = vld [vmem:[%s3 + $0x17c] sm:$0xf]
  %v169 = vld [vmem:[%s3 + $0x180] sm:$0xf]
  %v170 = vld [vmem:[%s3 + $0x184] sm:$0xf]
  %v171 = vld [vmem:[%s3 + $0x188] sm:$0xf]
  %v172 = vld [vmem:[%s3 + $0x18c] sm:$0xf]
  %v173 = vld [vmem:[%s3 + $0x190] sm:$0xf]
  %v174 = vld [vmem:[%s3 + $0x194] sm:$0xf]
  %v175 = vld [vmem:[%s3 + $0x198] sm:$0xf]
  %v176 = vld [vmem:[%s3 + $0x19c] sm:$0xf]
  %v177 = vld [vmem:[%s3 + $0x1a0] sm:$0xf]
  %v178 = vld [vmem:[%s3 + $0x1a4] sm:$0xf]
  %v179 = vld [vmem:[%s3 + $0x1a8] sm:$0xf]
  %v180 = vld [vmem:[%s3 + $0x1ac] sm:$0xf]
  %v181 = vld [vmem:[%s3 + $0x1b0] sm:$0xf]
  %v182 = vld [vmem:[%s3 + $0x1b4] sm:$0xf]
  %v183 = vld [vmem:[%s3 + $0x1b8] sm:$0xf]
  %v184 = vld [vmem:[%s3 + $0x1bc] sm:$0xf]
  %v185 = vld [vmem:[%s3 + $0x1c0] sm:$0xf]
  %v186 = vld [vmem:[%s3 + $0x1c4] sm:$0xf]
  %v187 = vld [vmem:[%s3 + $0x1c8] sm:$0xf]
  %v188 = vld [vmem:[%s3 + $0x1cc] sm:$0xf]
  %v189 = vld [vmem:[%s3 + $0x1d0] sm:$0xf]
  %v190 = vld [vmem:[%s3 + $0x1d4] sm:$0xf]
  %v191 = vld [vmem:[%s3 + $0x1d8] sm:$0xf]
  %v192 = vld [vmem:[%s3 + $0x1dc] sm:$0xf]
  %v193 = vld [vmem:[%s3 + $0x1e0] sm:$0xf]
  %v194 = vld [vmem:[%s3 + $0x1e4] sm:$0xf]
  %v195 = vld [vmem:[%s3 + $0x1e8] sm:$0xf]
  %v196 = vld [vmem:[%s3 + $0x1ec] sm:$0xf]
  %v197 = vld [vmem:[%s3 + $0x1f0] sm:$0xf]
  %v198 = vld [vmem:[%s3 + $0x1f4] sm:$0xf]
  %v199 = vld [vmem:[%s3 + $0x1f8] sm:$0xf]
  %v200 = vld [vmem:[%s3 + $0x1fc] sm:$0xf]
  %v201 = vld [vmem:[%s3 + $0x200] sm:$0xf]
  %v202 = vld [vmem:[%s3 + $0x204] sm:$0xf]
  %v203 = vld [vmem:[%s3 + $0x208] sm:$0xf]
  %v204 = vld [vmem:[%s3 + $0x20c] sm:$0xf]
  %v205 = vld [vmem:[%s3 + $0x210] sm:$0xf]
  %v206 = vld [vmem:[%s3 + $0x214] sm:$0xf]
  %v207 = vld [vmem:[%s3 + $0x218] sm:$0xf]
  %v208 = vld [vmem:[%s3 + $0x21c] sm:$0xf]
  %v209 = vld [vmem:[%s3 + $0x220] sm:$0xf]
  %v210 = vld [vmem:[%s3 + $0x224] sm:$0xf]
  %v211 = vld [vmem:[%s3 + $0x228] sm:$0xf]
  %v212 = vld [vmem:[%s3 + $0x22c] sm:$0xf]
  %v213 = vld [vmem:[%s3 + $0x230] sm:$0xf]
  %v214 = vld [vmem:[%s3 + $0x234] sm:$0xf]
  %v215 = vld [vmem:[%s3 + $0x238] sm:$0xf]
  %v216 = vld [vmem:[%s3 + $0x23c] sm:$0xf]
  %v217 = vld [vmem:[%s3 + $0x240] sm:$0xf]
  %v218 = vld [vmem:[%s3 + $0x244] sm:$0xf]
  %v219 = vld [vmem:[%s3 + $0x248] sm:$0xf]
  %v220 = vld [vmem:[%s3 + $0x24c] sm:$0xf]
  %v221 = vld [vmem:[%s3 + $0x250] sm:$0xf]
  %v222 = vld [vmem:[%s3 + $0x254] sm:$0xf]
  %v223 = vld [vmem:[%s3 + $0x258] sm:$0xf]
  %v224 = vld [vmem:[%s3 + $0x25c] sm:$0xf]
  %v225 = vld [vmem:[%s3 + $0x260] sm:$0xf]
  %v226 = vld [vmem:[%s3 + $0x264] sm:$0xf]
  %v227 = vld [vmem:[%s3 + $0x268] sm:$0xf]
  %v228 = vld [vmem:[%s3 + $0x26c] sm:$0xf]
  %v229 = vld [vmem:[%s3 + $0x270] sm:$0xf]
  %v230 = vld [vmem:[%s3 + $0x274] sm:$0xf]
  %v231 = vld [vmem:[%s3 + $0x278] sm:$0xf]
  %v232 = vld [vmem:[%s3 + $0x27c] sm:$0xf]
  %v233 = vld [vmem:[%s3 + $0x280] sm:$0xf]
  %v234 = vld [vmem:[%s3 + $0x284] sm:$0xf]
  %v235 = vld [vmem:[%s3 + $0x288] sm:$0xf]
  %v236 = vld [vmem:[%s3 + $0x28c] sm:$0xf]
  %v237 = vld [vmem:[%s3 + $0x290] sm:$0xf]
  %v238 = vld [vmem:[%s3 + $0x294] sm:$0xf]
  %v239 = vld [vmem:[%s3 + $0x298] sm:$0xf]
  %v240 = vld [vmem:[%s3 + $0x29c] sm:$0xf]
  %v241 = vld [vmem:[%s3 + $0x2a0] sm:$0xf]
  %v242 = vld [vmem:[%s3 + $0x2a4] sm:$0xf]
  %v243 = vld [vmem:[%s3 + $0x2a8] sm:$0xf]
  %v244 = vld [vmem:[%s3 + $0x2ac] sm:$0xf]
  %v245 = vld [vmem:[%s3 + $0x2b0] sm:$0xf]
  %v246 = vld [vmem:[%s3 + $0x2b4] sm:$0xf]
  %v247 = vld [vmem:[%s3 + $0x2b8] sm:$0xf]
  %v248 = vld [vmem:[%s3 + $0x2bc] sm:$0xf]
  %v249 = vld [vmem:[%s3 + $0x2c0] sm:$0xf]
  %v250 = vld [vmem:[%s3 + $0x2c4] sm:$0xf]
  %v251 = vld [vmem:[%s3 + $0x2c8] sm:$0xf]
  %v252 = vld [vmem:[%s3 + $0x2cc] sm:$0xf]
  %v253 = vld [vmem:[%s3 + $0x2d0] sm:$0xf]
  %v254 = vld [vmem:[%s3 + $0x2d4] sm:$0xf]
  %v255 = vld [vmem:[%s3 + $0x2d8] sm:$0xf]
  %v256 = vld [vmem:[%s3 + $0x2dc] sm:$0xf]
  %v257 = vld [vmem:[%s3 + $0x2e0] sm:$0xf]
  %v258 = vld [vmem:[%s3 + $0x2e4] sm:$0xf]
  %v259 = vld [vmem:[%s3 + $0x2e8] sm:$0xf]
  %v260 = vld [vmem:[%s3 + $0x2ec] sm:$0xf]
  %v261 = vld [vmem:[%s3 + $0x2f0] sm:$0xf]
  %v262 = vld [vmem:[%s3 + $0x2f4] sm:$0xf]
  %v263 = vld [vmem:[%s3 + $0x2f8] sm:$0xf]
  %v264 = vld [vmem:[%s3 + $0x2fc] sm:$0xf]
  %v265 = vld [vmem:[%s3 + $0x300] sm:$0xf]
  %v266 = vld [vmem:[%s3 + $0x304] sm:$0xf]
  %v267 = vld [vmem:[%s3 + $0x308] sm:$0xf]
  %v268 = vld [vmem:[%s3 + $0x30c] sm:$0xf]
  %v269 = vld [vmem:[%s4] sm:$0x1]
  %v271 = vlaneseq
  %v272 = vshrl.u32 %v271, 7
  %v273 = vsub.s32 0, %v272
  %v274 = vrot.slane %v269, %v273
  %v304 = vunpack.c.l.b16 %v45
  %v305 = vunpack.c.h.b16 %v45
  %v306 = vunpack.c.l.b16 %v46
  %v307 = vunpack.c.h.b16 %v46
  %v308 = vunpack.c.l.b16 %v47
  %v309 = vunpack.c.h.b16 %v47
  %v310 = vunpack.c.l.b16 %v48
  %v311 = vunpack.c.h.b16 %v48
  %v312 = vunpack.c.l.b16 %v49
  %v313 = vunpack.c.h.b16 %v49
  %v314 = vunpack.c.l.b16 %v50
  %v315 = vunpack.c.h.b16 %v50
  %v316 = vunpack.c.l.b16 %v51
  %v317 = vunpack.c.l.b16 %v52
  %v318 = vunpack.c.h.b16 %v52
  %v319 = vunpack.c.l.b16 %v53
  %v320 = vunpack.c.h.b16 %v53
  %v321 = vunpack.c.l.b16 %v54
  %v322 = vunpack.c.h.b16 %v54
  %v323 = vunpack.c.l.b16 %v55
  %v324 = vunpack.c.h.b16 %v55
  %v325 = vunpack.c.l.b16 %v56
  %v326 = vunpack.c.h.b16 %v56
  %v327 = vunpack.c.l.b16 %v57
  %v328 = vunpack.c.h.b16 %v57
  %v329 = vunpack.c.l.b16 %v58
  %v330 = vunpack.c.l.b16 %v59
  %v331 = vunpack.c.h.b16 %v59
  %v332 = vunpack.c.l.b16 %v60
  %v333 = vunpack.c.h.b16 %v60
  %v334 = vunpack.c.l.b16 %v61
  %v335 = vunpack.c.h.b16 %v61
  %v336 = vunpack.c.l.b16 %v62
  %v337 = vunpack.c.h.b16 %v62
  %v338 = vunpack.c.l.b16 %v63
  %v339 = vunpack.c.h.b16 %v63
  %v340 = vunpack.c.l.b16 %v64
  %v341 = vunpack.c.h.b16 %v64
  %v342 = vunpack.c.l.b16 %v65
  %v343 = vunpack.c.l.b16 %v66
  %v344 = vunpack.c.h.b16 %v66
  %v345 = vunpack.c.l.b16 %v67
  %v346 = vunpack.c.h.b16 %v67
  %v347 = vunpack.c.l.b16 %v68
  %v348 = vunpack.c.h.b16 %v68
  %v349 = vunpack.c.l.b16 %v69
  %v350 = vunpack.c.h.b16 %v69
  %v351 = vunpack.c.l.b16 %v70
  %v352 = vunpack.c.h.b16 %v70
  %v353 = vunpack.c.l.b16 %v71
  %v354 = vunpack.c.h.b16 %v71
  %v355 = vunpack.c.l.b16 %v72
  %v356 = vpack.c.b16 %v317, %v304
  %v357 = vpack.c.b16 %v318, %v305
  %v358 = vpack.c.b16 %v319, %v306
  %v359 = vpack.c.b16 %v320, %v307
  %v360 = vpack.c.b16 %v321, %v308
  %v361 = vpack.c.b16 %v322, %v309
  %v362 = vpack.c.b16 %v323, %v310
  %v363 = vpack.c.b16 %v324, %v311
  %v364 = vpack.c.b16 %v325, %v312
  %v365 = vpack.c.b16 %v326, %v313
  %v366 = vpack.c.b16 %v327, %v314
  %v367 = vpack.c.b16 %v328, %v315
  %v368 = vpack.c.b16 %v329, %v316
  %v369 = vpack.c.b16 %v343, %v330
  %v370 = vpack.c.b16 %v344, %v331
  %v371 = vpack.c.b16 %v345, %v332
  %v372 = vpack.c.b16 %v346, %v333
  %v373 = vpack.c.b16 %v347, %v334
  %v374 = vpack.c.b16 %v348, %v335
  %v375 = vpack.c.b16 %v349, %v336
  %v376 = vpack.c.b16 %v350, %v337
  %v377 = vpack.c.b16 %v351, %v338
  %v378 = vpack.c.b16 %v352, %v339
  %v379 = vpack.c.b16 %v353, %v340
  %v380 = vpack.c.b16 %v354, %v341
  %v381 = vpack.c.b16 %v355, %v342
  %v602 = vunpack.c.l.b16 %v73
  %v603 = vunpack.c.l.b16 %v74
  %v604 = vunpack.c.l.b16 %v75
  %v605 = vunpack.c.l.b16 %v76
  %v606 = vunpack.c.l.b16 %v77
  %v607 = vunpack.c.l.b16 %v78
  %v608 = vunpack.c.l.b16 %v79
  %v609 = vunpack.c.l.b16 %v80
  %v610 = vunpack.c.l.b16 %v81
  %v611 = vunpack.c.l.b16 %v82
  %v612 = vunpack.c.l.b16 %v83
  %v613 = vunpack.c.l.b16 %v84
  %v614 = vunpack.c.l.b16 %v85
  %v615 = vunpack.c.l.b16 %v86
  %v616 = vunpack.c.l.b16 %v87
  %v617 = vunpack.c.l.b16 %v88
  %v618 = vunpack.c.l.b16 %v89
  %v619 = vunpack.c.l.b16 %v90
  %v620 = vunpack.c.l.b16 %v91
  %v621 = vunpack.c.l.b16 %v92
  %v622 = vunpack.c.l.b16 %v93
  %v623 = vunpack.c.l.b16 %v94
  %v624 = vunpack.c.l.b16 %v95
  %v625 = vunpack.c.l.b16 %v96
  %v626 = vunpack.c.l.b16 %v97
  %v627 = vunpack.c.l.b16 %v98
  %v628 = vunpack.c.l.b16 %v99
  %v629 = vunpack.c.l.b16 %v100
  %v630 = vunpack.c.l.b16 %v101
  %v631 = vunpack.c.l.b16 %v102
  %v632 = vunpack.c.l.b16 %v103
  %v633 = vunpack.c.l.b16 %v104
  %v634 = vunpack.c.l.b16 %v105
  %v635 = vunpack.c.l.b16 %v106
  %v636 = vunpack.c.l.b16 %v107
  %v637 = vunpack.c.l.b16 %v108
  %v638 = vunpack.c.l.b16 %v109
  %v639 = vunpack.c.l.b16 %v110
  %v640 = vunpack.c.l.b16 %v111
  %v641 = vunpack.c.l.b16 %v112
  %v642 = vunpack.c.l.b16 %v113
  %v643 = vunpack.c.l.b16 %v114
  %v644 = vunpack.c.l.b16 %v115
  %v645 = vunpack.c.l.b16 %v116
  %v646 = vunpack.c.l.b16 %v117
  %v647 = vunpack.c.l.b16 %v118
  %v648 = vunpack.c.l.b16 %v119
  %v649 = vunpack.c.l.b16 %v120
  %v650 = vunpack.c.l.b16 %v121
  %v651 = vunpack.c.l.b16 %v122
  %v652 = vunpack.c.l.b16 %v123
  %v653 = vunpack.c.l.b16 %v124
  %v654 = vunpack.c.l.b16 %v125
  %v655 = vunpack.c.l.b16 %v126
  %v656 = vunpack.c.l.b16 %v127
  %v657 = vunpack.c.l.b16 %v128
  %v658 = vunpack.c.l.b16 %v129
  %v659 = vunpack.c.l.b16 %v130
  %v660 = vunpack.c.l.b16 %v131
  %v661 = vunpack.c.l.b16 %v132
  %v662 = vunpack.c.l.b16 %v133
  %v663 = vunpack.c.l.b16 %v134
  %v664 = vunpack.c.l.b16 %v135
  %v665 = vunpack.c.l.b16 %v136
  %v666 = vunpack.c.l.b16 %v137
  %v667 = vunpack.c.l.b16 %v138
  %v668 = vunpack.c.l.b16 %v139
  %v669 = vunpack.c.l.b16 %v140
  %v670 = vunpack.c.l.b16 %v141
  %v671 = vunpack.c.l.b16 %v142
  %v672 = vunpack.c.l.b16 %v143
  %v673 = vunpack.c.l.b16 %v144
  %v674 = vunpack.c.l.b16 %v145
  %v675 = vunpack.c.l.b16 %v146
  %v676 = vunpack.c.l.b16 %v147
  %v677 = vunpack.c.l.b16 %v148
  %v678 = vunpack.c.l.b16 %v149
  %v679 = vunpack.c.l.b16 %v150
  %v680 = vunpack.c.l.b16 %v151
  %v681 = vunpack.c.l.b16 %v152
  %v682 = vunpack.c.l.b16 %v153
  %v683 = vunpack.c.l.b16 %v154
  %v684 = vunpack.c.l.b16 %v155
  %v685 = vunpack.c.l.b16 %v156
  %v686 = vunpack.c.l.b16 %v157
  %v687 = vunpack.c.l.b16 %v158
  %v688 = vunpack.c.l.b16 %v159
  %v689 = vunpack.c.l.b16 %v160
  %v690 = vunpack.c.l.b16 %v161
  %v691 = vunpack.c.l.b16 %v162
  %v692 = vunpack.c.l.b16 %v163
  %v693 = vunpack.c.l.b16 %v164
  %v694 = vunpack.c.l.b16 %v165
  %v695 = vunpack.c.l.b16 %v166
  %v696 = vunpack.c.l.b16 %v167
  %v697 = vunpack.c.l.b16 %v168
  %v698 = vunpack.c.l.b16 %v169
  %v699 = vunpack.c.l.b16 %v170
  %v700 = vunpack.c.l.b16 %v171
  %v701 = vunpack.c.l.b16 %v172
  %v702 = vunpack.c.l.b16 %v173
  %v703 = vunpack.c.l.b16 %v174
  %v704 = vunpack.c.l.b16 %v175
  %v705 = vunpack.c.l.b16 %v176
  %v706 = vunpack.c.l.b16 %v177
  %v707 = vunpack.c.l.b16 %v178
  %v708 = vunpack.c.l.b16 %v179
  %v709 = vunpack.c.l.b16 %v180
  %v710 = vunpack.c.l.b16 %v181
  %v711 = vunpack.c.l.b16 %v182
  %v712 = vunpack.c.l.b16 %v183
  %v713 = vunpack.c.l.b16 %v184
  %v714 = vunpack.c.l.b16 %v185
  %v715 = vunpack.c.l.b16 %v186
  %v716 = vunpack.c.l.b16 %v187
  %v717 = vunpack.c.l.b16 %v188
  %v718 = vunpack.c.l.b16 %v189
  %v719 = vunpack.c.l.b16 %v190
  %v720 = vunpack.c.l.b16 %v191
  %v721 = vunpack.c.l.b16 %v192
  %v722 = vunpack.c.l.b16 %v193
  %v723 = vunpack.c.l.b16 %v194
  %v724 = vunpack.c.l.b16 %v195
  %v725 = vunpack.c.l.b16 %v196
  %v726 = vunpack.c.l.b16 %v197
  %v727 = vunpack.c.l.b16 %v198
  %v728 = vunpack.c.l.b16 %v199
  %v729 = vunpack.c.l.b16 %v200
  %v730 = vunpack.c.l.b16 %v201
  %v731 = vunpack.c.l.b16 %v202
  %v732 = vunpack.c.l.b16 %v203
  %v733 = vunpack.c.l.b16 %v204
  %v734 = vunpack.c.l.b16 %v205
  %v735 = vunpack.c.l.b16 %v206
  %v736 = vunpack.c.l.b16 %v207
  %v737 = vunpack.c.l.b16 %v208
  %v738 = vunpack.c.l.b16 %v209
  %v739 = vunpack.c.l.b16 %v210
  %v740 = vunpack.c.l.b16 %v211
  %v741 = vunpack.c.l.b16 %v212
  %v742 = vunpack.c.l.b16 %v213
  %v743 = vunpack.c.l.b16 %v214
  %v744 = vunpack.c.l.b16 %v215
  %v745 = vunpack.c.l.b16 %v216
  %v746 = vunpack.c.l.b16 %v217
  %v747 = vunpack.c.l.b16 %v218
  %v748 = vunpack.c.l.b16 %v219
  %v749 = vunpack.c.l.b16 %v220
  %v750 = vunpack.c.l.b16 %v221
  %v751 = vunpack.c.l.b16 %v222
  %v752 = vunpack.c.l.b16 %v223
  %v753 = vunpack.c.l.b16 %v224
  %v754 = vunpack.c.l.b16 %v225
  %v755 = vunpack.c.l.b16 %v226
  %v756 = vunpack.c.l.b16 %v227
  %v757 = vunpack.c.l.b16 %v228
  %v758 = vunpack.c.l.b16 %v229
  %v759 = vunpack.c.l.b16 %v230
  %v760 = vunpack.c.l.b16 %v231
  %v761 = vunpack.c.l.b16 %v232
  %v762 = vunpack.c.l.b16 %v233
  %v763 = vunpack.c.l.b16 %v234
  %v764 = vunpack.c.l.b16 %v235
  %v765 = vunpack.c.l.b16 %v236
  %v766 = vunpack.c.l.b16 %v237
  %v767 = vunpack.c.l.b16 %v238
  %v768 = vunpack.c.l.b16 %v239
  %v769 = vunpack.c.l.b16 %v240
  %v770 = vunpack.c.l.b16 %v241
  %v771 = vunpack.c.l.b16 %v242
  %v772 = vunpack.c.l.b16 %v243
  %v773 = vunpack.c.l.b16 %v244
  %v774 = vunpack.c.l.b16 %v245
  %v775 = vunpack.c.l.b16 %v246
  %v776 = vunpack.c.l.b16 %v247
  %v777 = vunpack.c.l.b16 %v248
  %v778 = vunpack.c.l.b16 %v249
  %v779 = vunpack.c.l.b16 %v250
  %v780 = vunpack.c.l.b16 %v251
  %v781 = vunpack.c.l.b16 %v252
  %v782 = vunpack.c.l.b16 %v253
  %v783 = vunpack.c.l.b16 %v254
  %v784 = vunpack.c.l.b16 %v255
  %v785 = vunpack.c.l.b16 %v256
  %v786 = vunpack.c.l.b16 %v257
  %v787 = vunpack.c.l.b16 %v258
  %v788 = vunpack.c.l.b16 %v259
  %v789 = vunpack.c.l.b16 %v260
  %v790 = vunpack.c.l.b16 %v261
  %v791 = vunpack.c.l.b16 %v262
  %v792 = vunpack.c.l.b16 %v263
  %v793 = vunpack.c.l.b16 %v264
  %v794 = vunpack.c.l.b16 %v265
  %v795 = vunpack.c.l.b16 %v266
  %v796 = vunpack.c.l.b16 %v267
  %v797 = vunpack.c.l.b16 %v268
  %v798 = vpack.c.b16 %v603, %v602
  %v799 = vpack.c.b16 %v605, %v604
  %v800 = vpack.c.b16 %v607, %v606
  %v801 = vpack.c.b16 %v609, %v608
  %v802 = vpack.c.b16 %v611, %v610
  %v803 = vpack.c.b16 %v613, %v612
  %v804 = vpack.c.b16 %v615, %v614
  %v805 = vpack.c.b16 %v617, %v616
  %v806 = vpack.c.b16 %v619, %v618
  %v807 = vpack.c.b16 %v621, %v620
  %v808 = vpack.c.b16 %v623, %v622
  %v809 = vpack.c.b16 %v625, %v624
  %v810 = vpack.c.b16 %v627, %v626
  %v811 = vpack.c.b16 %v629, %v628
  %v812 = vpack.c.b16 %v631, %v630
  %v813 = vpack.c.b16 %v633, %v632
  %v814 = vpack.c.b16 %v635, %v634
  %v815 = vpack.c.b16 %v637, %v636
  %v816 = vpack.c.b16 %v639, %v638
  %v817 = vpack.c.b16 %v641, %v640
  %v818 = vpack.c.b16 %v643, %v642
  %v819 = vpack.c.b16 %v645, %v644
  %v820 = vpack.c.b16 %v647, %v646
  %v821 = vpack.c.b16 %v649, %v648
  %v822 = vpack.c.b16 %v651, %v650
  %v823 = vpack.c.b16 %v653, %v652
  %v824 = vpack.c.b16 %v655, %v654
  %v825 = vpack.c.b16 %v657, %v656
  %v826 = vpack.c.b16 %v659, %v658
  %v827 = vpack.c.b16 %v661, %v660
  %v828 = vpack.c.b16 %v663, %v662
  %v829 = vpack.c.b16 %v665, %v664
  %v830 = vpack.c.b16 %v667, %v666
  %v831 = vpack.c.b16 %v669, %v668
  %v832 = vpack.c.b16 %v671, %v670
  %v833 = vpack.c.b16 %v673, %v672
  %v834 = vpack.c.b16 %v675, %v674
  %v835 = vpack.c.b16 %v677, %v676
  %v836 = vpack.c.b16 %v679, %v678
  %v837 = vpack.c.b16 %v681, %v680
  %v838 = vpack.c.b16 %v683, %v682
  %v839 = vpack.c.b16 %v685, %v684
  %v840 = vpack.c.b16 %v687, %v686
  %v841 = vpack.c.b16 %v689, %v688
  %v842 = vpack.c.b16 %v691, %v690
  %v843 = vpack.c.b16 %v693, %v692
  %v844 = vpack.c.b16 %v695, %v694
  %v845 = vpack.c.b16 %v697, %v696
  %v846 = vpack.c.b16 %v699, %v698
  %v847 = vpack.c.b16 %v701, %v700
  %v848 = vpack.c.b16 %v703, %v702
  %v849 = vpack.c.b16 %v705, %v704
  %v850 = vpack.c.b16 %v707, %v706
  %v851 = vpack.c.b16 %v709, %v708
  %v852 = vpack.c.b16 %v711, %v710
  %v853 = vpack.c.b16 %v713, %v712
  %v854 = vpack.c.b16 %v715, %v714
  %v855 = vpack.c.b16 %v717, %v716
  %v856 = vpack.c.b16 %v719, %v718
  %v857 = vpack.c.b16 %v721, %v720
  %v858 = vpack.c.b16 %v723, %v722
  %v859 = vpack.c.b16 %v725, %v724
  %v860 = vpack.c.b16 %v727, %v726
  %v861 = vpack.c.b16 %v729, %v728
  %v862 = vpack.c.b16 %v731, %v730
  %v863 = vpack.c.b16 %v733, %v732
  %v864 = vpack.c.b16 %v735, %v734
  %v865 = vpack.c.b16 %v737, %v736
  %v866 = vpack.c.b16 %v739, %v738
  %v867 = vpack.c.b16 %v741, %v740
  %v868 = vpack.c.b16 %v743, %v742
  %v869 = vpack.c.b16 %v745, %v744
  %v870 = vpack.c.b16 %v747, %v746
  %v871 = vpack.c.b16 %v749, %v748
  %v872 = vpack.c.b16 %v751, %v750
  %v873 = vpack.c.b16 %v753, %v752
  %v874 = vpack.c.b16 %v755, %v754
  %v875 = vpack.c.b16 %v757, %v756
  %v876 = vpack.c.b16 %v759, %v758
  %v877 = vpack.c.b16 %v761, %v760
  %v878 = vpack.c.b16 %v763, %v762
  %v879 = vpack.c.b16 %v765, %v764
  %v880 = vpack.c.b16 %v767, %v766
  %v881 = vpack.c.b16 %v769, %v768
  %v882 = vpack.c.b16 %v771, %v770
  %v883 = vpack.c.b16 %v773, %v772
  %v884 = vpack.c.b16 %v775, %v774
  %v885 = vpack.c.b16 %v777, %v776
  %v886 = vpack.c.b16 %v779, %v778
  %v887 = vpack.c.b16 %v781, %v780
  %v888 = vpack.c.b16 %v783, %v782
  %v889 = vpack.c.b16 %v785, %v784
  %v890 = vpack.c.b16 %v787, %v786
  %v891 = vpack.c.b16 %v789, %v788
  %v892 = vpack.c.b16 %v791, %v790
  %v893 = vpack.c.b16 %v793, %v792
  %v894 = vpack.c.b16 %v795, %v794
  %v895 = vpack.c.b16 %v797, %v796
  %vm994 = vcmask 261120
  %v996 = vsel %vm994, %v368, 0
  %v999 = vsel %vm994, %v381, 0
  %1001 = vmatprep.subr.bf16.mxu0 0
  %1002 = vmatpush1.bf16.msra.mxu0 %v798
  %1003 = vmatprep.subr.bf16.mxu0 0
  %1004 = vmatpush1.bf16.msra.mxu0 %v799
  %1005 = vmatprep.subr.bf16.mxu0 0
  %1006 = vmatpush1.bf16.msra.mxu0 %v800
  %1007 = vmatprep.subr.bf16.mxu0 0
  %1008 = vmatpush1.bf16.msra.mxu0 %v801
  %1009 = vmatprep.subr.bf16.mxu0 0
  %1010 = vmatpush1.bf16.msra.mxu0 %v802
  %1011 = vmatprep.subr.bf16.mxu0 0
  %1012 = vmatpush1.bf16.msra.mxu0 %v803
  %1013 = vmatprep.subr.bf16.mxu0 0
  %1014 = vmatpush1.bf16.msra.mxu0 %v804
  %1015 = vmatprep.subr.bf16.mxu0 0
  %1016 = vmatpush1.bf16.msra.mxu0 %v805
  %1017 = vmatprep.subr.bf16.mxu0 0
  %1018 = vmatpush1.bf16.msra.mxu0 %v806
  %1019 = vmatprep.subr.bf16.mxu0 0
  %1020 = vmatpush1.bf16.msra.mxu0 %v807
  %1021 = vmatprep.subr.bf16.mxu0 0
  %1022 = vmatpush1.bf16.msra.mxu0 %v808
  %1023 = vmatprep.subr.bf16.mxu0 0
  %1024 = vmatpush1.bf16.msra.mxu0 %v809
  %1025 = vmatprep.subr.bf16.mxu0 0
  %1026 = vmatpush1.bf16.msra.mxu0 %v810
  %1027 = vmatprep.subr.bf16.mxu0 0
  %1028 = vmatpush1.bf16.msra.mxu0 %v811
  %1029 = vmatprep.subr.bf16.mxu0 0
  %1030 = vmatpush1.bf16.msra.mxu0 %v812
  %1031 = vmatprep.subr.bf16.mxu0 0
  %1032 = vmatpush1.bf16.msra.mxu0 %v813
  %1033 = vmatprep.mubr.bf16.mxu0 %v357
  %1034 = vmatmul.mubr.bf16.gmra.mrb[0].mxu0 %v356
  %v1035 = vpop.f32.mrb[0].mxu0
  %v1036 = vadd.f32 %v274, %v1035
  %v1037 = vpop.f32.mrb[0].mxu0
  %v1038 = vpop.f32.mrb[0].mxu0
  %v1039 = vadd.f32 %v274, %v1038
  %v1040 = vpop.f32.mrb[0].mxu0
  %1041 = vmatprep.mubr.bf16.mxu0 %v370
  %1042 = vmatmul.mubr.bf16.gmra.mrb[0].mxu0 %v369
  %v1043 = vpop.f32.mrb[0].mxu0
  %v1044 = vadd.f32 %v274, %v1043
  %v1045 = vpop.f32.mrb[0].mxu0
  %v1046 = vpop.f32.mrb[0].mxu0
  %v1047 = vadd.f32 %v274, %v1046
  %v1048 = vpop.f32.mrb[0].mxu0
  %1049 = vdwg.mxu0
  %1050 = vmatprep.subr.bf16.mxu0 0
  %1051 = vmatpush1.bf16.msra.mxu0 %v814
  %1052 = vmatprep.subr.bf16.mxu0 0
  %1053 = vmatpush1.bf16.msra.mxu0 %v815
  %1054 = vmatprep.subr.bf16.mxu0 0
  %1055 = vmatpush1.bf16.msra.mxu0 %v816
  %1056 = vmatprep.subr.bf16.mxu0 0
  %1057 = vmatpush1.bf16.msra.mxu0 %v817
  %1058 = vmatprep.subr.bf16.mxu0 0
  %1059 = vmatpush1.bf16.msra.mxu0 %v818
  %1060 = vmatprep.subr.bf16.mxu0 0
  %1061 = vmatpush1.bf16.msra.mxu0 %v819
  %1062 = vmatprep.subr.bf16.mxu0 0
  %1063 = vmatpush1.bf16.msra.mxu0 %v820
  %1064 = vmatprep.subr.bf16.mxu0 0
  %1065 = vmatpush1.bf16.msra.mxu0 %v821
  %1066 = vmatprep.subr.bf16.mxu0 0
  %1067 = vmatpush1.bf16.msra.mxu0 %v822
  %1068 = vmatprep.subr.bf16.mxu0 0
  %1069 = vmatpush1.bf16.msra.mxu0 %v823
  %1070 = vmatprep.subr.bf16.mxu0 0
  %1071 = vmatpush1.bf16.msra.mxu0 %v824
  %1072 = vmatprep.subr.bf16.mxu0 0
  %1073 = vmatpush1.bf16.msra.mxu0 %v825
  %1074 = vmatprep.subr.bf16.mxu0 0
  %1075 = vmatpush1.bf16.msra.mxu0 %v826
  %1076 = vmatprep.subr.bf16.mxu0 0
  %1077 = vmatpush1.bf16.msra.mxu0 %v827
  %1078 = vmatprep.subr.bf16.mxu0 0
  %1079 = vmatpush1.bf16.msra.mxu0 %v828
  %1080 = vmatprep.subr.bf16.mxu0 0
  %1081 = vmatpush1.bf16.msra.mxu0 %v829
  %1082 = vmatprep.mubr.bf16.mxu0 %v359
  %1083 = vmatmul.mubr.bf16.gmra.mrb[0].mxu0 %v358
  %v1084 = vpop.f32.mrb[0].mxu0
  %v1085 = vadd.f32 %v1036, %v1084
  %v1086 = vpop.f32.mrb[0].mxu0
  %v1087 = vpop.f32.mrb[0].mxu0
  %v1088 = vadd.f32 %v1039, %v1087
  %v1089 = vpop.f32.mrb[0].mxu0
  %1090 = vmatprep.mubr.bf16.mxu0 %v372
  %1091 = vmatmul.mubr.bf16.gmra.mrb[0].mxu0 %v371
  %v1092 = vpop.f32.mrb[0].mxu0
  %v1093 = vadd.f32 %v1044, %v1092
  %v1094 = vpop.f32.mrb[0].mxu0
  %v1095 = vpop.f32.mrb[0].mxu0
  %v1096 = vadd.f32 %v1047, %v1095
  %v1097 = vpop.f32.mrb[0].mxu0
  %1098 = vdwg.mxu0
  %1099 = vmatprep.subr.bf16.mxu0 0
  %1100 = vmatpush1.bf16.msra.mxu0 %v830
  %1101 = vmatprep.subr.bf16.mxu0 0
  %1102 = vmatpush1.bf16.msra.mxu0 %v831
  %1103 = vmatprep.subr.bf16.mxu0 0
  %1104 = vmatpush1.bf16.msra.mxu0 %v832
  %1105 = vmatprep.subr.bf16.mxu0 0
  %1106 = vmatpush1.bf16.msra.mxu0 %v833
  %1107 = vmatprep.subr.bf16.mxu0 0
  %1108 = vmatpush1.bf16.msra.mxu0 %v834
  %1109 = vmatprep.subr.bf16.mxu0 0
  %1110 = vmatpush1.bf16.msra.mxu0 %v835
  %1111 = vmatprep.subr.bf16.mxu0 0
  %1112 = vmatpush1.bf16.msra.mxu0 %v836
  %1113 = vmatprep.subr.bf16.mxu0 0
  %1114 = vmatpush1.bf16.msra.mxu0 %v837
  %1115 = vmatprep.subr.bf16.mxu0 0
  %1116 = vmatpush1.bf16.msra.mxu0 %v838
  %1117 = vmatprep.subr.bf16.mxu0 0
  %1118 = vmatpush1.bf16.msra.mxu0 %v839
  %1119 = vmatprep.subr.bf16.mxu0 0
  %1120 = vmatpush1.bf16.msra.mxu0 %v840
  %1121 = vmatprep.subr.bf16.mxu0 0
  %1122 = vmatpush1.bf16.msra.mxu0 %v841
  %1123 = vmatprep.subr.bf16.mxu0 0
  %1124 = vmatpush1.bf16.msra.mxu0 %v842
  %1125 = vmatprep.subr.bf16.mxu0 0
  %1126 = vmatpush1.bf16.msra.mxu0 %v843
  %1127 = vmatprep.subr.bf16.mxu0 0
  %1128 = vmatpush1.bf16.msra.mxu0 %v844
  %1129 = vmatprep.subr.bf16.mxu0 0
  %1130 = vmatpush1.bf16.msra.mxu0 %v845
  %1131 = vmatprep.mubr.bf16.mxu0 %v361
  %1132 = vmatmul.mubr.bf16.gmra.mrb[0].mxu0 %v360
  %v1133 = vpop.f32.mrb[0].mxu0
  %v1134 = vadd.f32 %v1085, %v1133
  %v1135 = vpop.f32.mrb[0].mxu0
  %v1136 = vpop.f32.mrb[0].mxu0
  %v1137 = vadd.f32 %v1088, %v1136
  %v1138 = vpop.f32.mrb[0].mxu0
  %1139 = vmatprep.mubr.bf16.mxu0 %v374
  %1140 = vmatmul.mubr.bf16.gmra.mrb[0].mxu0 %v373
  %v1141 = vpop.f32.mrb[0].mxu0
  %v1142 = vadd.f32 %v1093, %v1141
  %v1143 = vpop.f32.mrb[0].mxu0
  %v1144 = vpop.f32.mrb[0].mxu0
  %v1145 = vadd.f32 %v1096, %v1144
  %v1146 = vpop.f32.mrb[0].mxu0
  %1147 = vdwg.mxu0
  %1148 = vmatprep.subr.bf16.mxu0 0
  %1149 = vmatpush1.bf16.msra.mxu0 %v846
  %1150 = vmatprep.subr.bf16.mxu0 0
  %1151 = vmatpush1.bf16.msra.mxu0 %v847
  %1152 = vmatprep.subr.bf16.mxu0 0
  %1153 = vmatpush1.bf16.msra.mxu0 %v848
  %1154 = vmatprep.subr.bf16.mxu0 0
  %1155 = vmatpush1.bf16.msra.mxu0 %v849
  %1156 = vmatprep.subr.bf16.mxu0 0
  %1157 = vmatpush1.bf16.msra.mxu0 %v850
  %1158 = vmatprep.subr.bf16.mxu0 0
  %1159 = vmatpush1.bf16.msra.mxu0 %v851
  %1160 = vmatprep.subr.bf16.mxu0 0
  %1161 = vmatpush1.bf16.msra.mxu0 %v852
  %1162 = vmatprep.subr.bf16.mxu0 0
  %1163 = vmatpush1.bf16.msra.mxu0 %v853
  %1164 = vmatprep.subr.bf16.mxu0 0
  %1165 = vmatpush1.bf16.msra.mxu0 %v854
  %1166 = vmatprep.subr.bf16.mxu0 0
  %1167 = vmatpush1.bf16.msra.mxu0 %v855
  %1168 = vmatprep.subr.bf16.mxu0 0
  %1169 = vmatpush1.bf16.msra.mxu0 %v856
  %1170 = vmatprep.subr.bf16.mxu0 0
  %1171 = vmatpush1.bf16.msra.mxu0 %v857
  %1172 = vmatprep.subr.bf16.mxu0 0
  %1173 = vmatpush1.bf16.msra.mxu0 %v858
  %1174 = vmatprep.subr.bf16.mxu0 0
  %1175 = vmatpush1.bf16.msra.mxu0 %v859
  %1176 = vmatprep.subr.bf16.mxu0 0
  %1177 = vmatpush1.bf16.msra.mxu0 %v860
  %1178 = vmatprep.subr.bf16.mxu0 0
  %1179 = vmatpush1.bf16.msra.mxu0 %v861
  %1180 = vmatprep.mubr.bf16.mxu0 %v363
  %1181 = vmatmul.mubr.bf16.gmra.mrb[0].mxu0 %v362
  %v1182 = vpop.f32.mrb[0].mxu0
  %v1183 = vadd.f32 %v1134, %v1182
  %v1184 = vpop.f32.mrb[0].mxu0
  %v1185 = vpop.f32.mrb[0].mxu0
  %v1186 = vadd.f32 %v1137, %v1185
  %v1187 = vpop.f32.mrb[0].mxu0
  %1188 = vmatprep.mubr.bf16.mxu0 %v376
  %1189 = vmatmul.mubr.bf16.gmra.mrb[0].mxu0 %v375
  %v1190 = vpop.f32.mrb[0].mxu0
  %v1191 = vadd.f32 %v1142, %v1190
  %v1192 = vpop.f32.mrb[0].mxu0
  %v1193 = vpop.f32.mrb[0].mxu0
  %v1194 = vadd.f32 %v1145, %v1193
  %v1195 = vpop.f32.mrb[0].mxu0
  %1196 = vdwg.mxu0
  %1197 = vmatprep.subr.bf16.mxu0 0
  %1198 = vmatpush1.bf16.msra.mxu0 %v862
  %1199 = vmatprep.subr.bf16.mxu0 0
  %1200 = vmatpush1.bf16.msra.mxu0 %v863
  %1201 = vmatprep.subr.bf16.mxu0 0
  %1202 = vmatpush1.bf16.msra.mxu0 %v864
  %1203 = vmatprep.subr.bf16.mxu0 0
  %1204 = vmatpush1.bf16.msra.mxu0 %v865
  %1205 = vmatprep.subr.bf16.mxu0 0
  %1206 = vmatpush1.bf16.msra.mxu0 %v866
  %1207 = vmatprep.subr.bf16.mxu0 0
  %1208 = vmatpush1.bf16.msra.mxu0 %v867
  %1209 = vmatprep.subr.bf16.mxu0 0
  %1210 = vmatpush1.bf16.msra.mxu0 %v868
  %1211 = vmatprep.subr.bf16.mxu0 0
  %1212 = vmatpush1.bf16.msra.mxu0 %v869
  %1213 = vmatprep.subr.bf16.mxu0 0
  %1214 = vmatpush1.bf16.msra.mxu0 %v870
  %1215 = vmatprep.subr.bf16.mxu0 0
  %1216 = vmatpush1.bf16.msra.mxu0 %v871
  %1217 = vmatprep.subr.bf16.mxu0 0
  %1218 = vmatpush1.bf16.msra.mxu0 %v872
  %1219 = vmatprep.subr.bf16.mxu0 0
  %1220 = vmatpush1.bf16.msra.mxu0 %v873
  %1221 = vmatprep.subr.bf16.mxu0 0
  %1222 = vmatpush1.bf16.msra.mxu0 %v874
  %1223 = vmatprep.subr.bf16.mxu0 0
  %1224 = vmatpush1.bf16.msra.mxu0 %v875
  %1225 = vmatprep.subr.bf16.mxu0 0
  %1226 = vmatpush1.bf16.msra.mxu0 %v876
  %1227 = vmatprep.subr.bf16.mxu0 0
  %1228 = vmatpush1.bf16.msra.mxu0 %v877
  %1229 = vmatprep.mubr.bf16.mxu0 %v365
  %1230 = vmatmul.mubr.bf16.gmra.mrb[0].mxu0 %v364
  %v1231 = vpop.f32.mrb[0].mxu0
  %v1232 = vadd.f32 %v1183, %v1231
  %v1233 = vpop.f32.mrb[0].mxu0
  %v1234 = vpop.f32.mrb[0].mxu0
  %v1235 = vadd.f32 %v1186, %v1234
  %v1236 = vpop.f32.mrb[0].mxu0
  %1237 = vmatprep.mubr.bf16.mxu0 %v378
  %1238 = vmatmul.mubr.bf16.gmra.mrb[0].mxu0 %v377
  %v1239 = vpop.f32.mrb[0].mxu0
  %v1240 = vadd.f32 %v1191, %v1239
  %v1241 = vpop.f32.mrb[0].mxu0
  %v1242 = vpop.f32.mrb[0].mxu0
  %v1243 = vadd.f32 %v1194, %v1242
  %v1244 = vpop.f32.mrb[0].mxu0
  %1245 = vdwg.mxu0
  %1246 = vmatprep.subr.bf16.mxu0 0
  %1247 = vmatpush1.bf16.msra.mxu0 %v878
  %1248 = vmatprep.subr.bf16.mxu0 0
  %1249 = vmatpush1.bf16.msra.mxu0 %v879
  %1250 = vmatprep.subr.bf16.mxu0 0
  %1251 = vmatpush1.bf16.msra.mxu0 %v880
  %1252 = vmatprep.subr.bf16.mxu0 0
  %1253 = vmatpush1.bf16.msra.mxu0 %v881
  %1254 = vmatprep.subr.bf16.mxu0 0
  %1255 = vmatpush1.bf16.msra.mxu0 %v882
  %1256 = vmatprep.subr.bf16.mxu0 0
  %1257 = vmatpush1.bf16.msra.mxu0 %v883
  %1258 = vmatprep.subr.bf16.mxu0 0
  %1259 = vmatpush1.bf16.msra.mxu0 %v884
  %1260 = vmatprep.subr.bf16.mxu0 0
  %1261 = vmatpush1.bf16.msra.mxu0 %v885
  %1262 = vmatprep.subr.bf16.mxu0 0
  %1263 = vmatpush1.bf16.msra.mxu0 %v886
  %1264 = vmatprep.subr.bf16.mxu0 0
  %1265 = vmatpush1.bf16.msra.mxu0 %v887
  %1266 = vmatprep.subr.bf16.mxu0 0
  %1267 = vmatpush1.bf16.msra.mxu0 %v888
  %1268 = vmatprep.subr.bf16.mxu0 0
  %1269 = vmatpush1.bf16.msra.mxu0 %v889
  %1270 = vmatprep.subr.bf16.mxu0 0
  %1271 = vmatpush1.bf16.msra.mxu0 %v890
  %1272 = vmatprep.subr.bf16.mxu0 0
  %1273 = vmatpush1.bf16.msra.mxu0 %v891
  %1274 = vmatprep.subr.bf16.mxu0 0
  %1275 = vmatpush1.bf16.msra.mxu0 %v892
  %1276 = vmatprep.subr.bf16.mxu0 0
  %1277 = vmatpush1.bf16.msra.mxu0 %v893
  %1278 = vmatprep.mubr.bf16.mxu0 %v367
  %1279 = vmatmul.mubr.bf16.gmra.mrb[0].mxu0 %v366
  %v1280 = vpop.f32.mrb[0].mxu0
  %v1281 = vadd.f32 %v1232, %v1280
  %v1282 = vpop.f32.mrb[0].mxu0
  %v1283 = vpop.f32.mrb[0].mxu0
  %v1284 = vadd.f32 %v1235, %v1283
  %v1285 = vpop.f32.mrb[0].mxu0
  %1286 = vmatprep.mubr.bf16.mxu0 %v380
  %1287 = vmatmul.mubr.bf16.gmra.mrb[0].mxu0 %v379
  %v1288 = vpop.f32.mrb[0].mxu0
  %v1289 = vadd.f32 %v1240, %v1288
  %v1290 = vpop.f32.mrb[0].mxu0
  %v1291 = vpop.f32.mrb[0].mxu0
  %v1292 = vadd.f32 %v1243, %v1291
  %v1293 = vpop.f32.mrb[0].mxu0
  %1294 = vdwg.mxu0
  %1295 = vmatprep.subr.bf16.mxu0 0
  %1296 = vmatpush1.bf16.msra.mxu0 %v894
  %1297 = vmatprep.subr.bf16.mxu0 0
  %1298 = vmatpush1.bf16.msra.mxu0 %v895
  %1299 = vmatprep.subr.bf16.mxu0 0
  %1300 = vmatpush1.bf16.msra.mxu0 0
  %1301 = vmatprep.subr.bf16.mxu0 0
  %1302 = vmatpush1.bf16.msra.mxu0 0
  %1303 = vmatprep.subr.bf16.mxu0 0
  %1304 = vmatpush1.bf16.msra.mxu0 0
  %1305 = vmatprep.subr.bf16.mxu0 0
  %1306 = vmatpush1.bf16.msra.mxu0 0
  %1307 = vmatprep.subr.bf16.mxu0 0
  %1308 = vmatpush1.bf16.msra.mxu0 0
  %1309 = vmatprep.subr.bf16.mxu0 0
  %1310 = vmatpush1.bf16.msra.mxu0 0
  %1311 = vmatprep.subr.bf16.mxu0 0
  %1312 = vmatpush1.bf16.msra.mxu0 0
  %1313 = vmatprep.subr.bf16.mxu0 0
  %1314 = vmatpush1.bf16.msra.mxu0 0
  %1315 = vmatprep.subr.bf16.mxu0 0
  %1316 = vmatpush1.bf16.msra.mxu0 0
  %1317 = vmatprep.subr.bf16.mxu0 0
  %1318 = vmatpush1.bf16.msra.mxu0 0
  %1319 = vmatprep.subr.bf16.mxu0 0
  %1320 = vmatpush1.bf16.msra.mxu0 0
  %1321 = vmatprep.subr.bf16.mxu0 0
  %1322 = vmatpush1.bf16.msra.mxu0 0
  %1323 = vmatprep.subr.bf16.mxu0 0
  %1324 = vmatpush1.bf16.msra.mxu0 0
  %1325 = vmatprep.subr.bf16.mxu0 0
  %1326 = vmatpush1.bf16.msra.mxu0 0
  %1327 = vmatprep.mubr.bf16.mxu0 0
  %1328 = vmatmul.mubr.bf16.gmra.mrb[0].mxu0 %v996
  %v1329 = vpop.f32.mrb[0].mxu0
  %v1330 = vadd.f32 %v1281, %v1329
  %v1331 = vpop.f32.mrb[0].mxu0
  %v1332 = vpop.f32.mrb[0].mxu0
  %v1333 = vadd.f32 %v1284, %v1332
  %v1334 = vpop.f32.mrb[0].mxu0
  %1335 = vmatprep.mubr.bf16.mxu0 0
  %1336 = vmatmul.mubr.bf16.gmra.mrb[0].mxu0 %v999
  %v1337 = vpop.f32.mrb[0].mxu0
  %v1338 = vadd.f32 %v1289, %v1337
  %v1339 = vpop.f32.mrb[0].mxu0
  %v1340 = vpop.f32.mrb[0].mxu0
  %v1341 = vadd.f32 %v1292, %v1340
  %v1342 = vpop.f32.mrb[0].mxu0
  %1343 = vdwg.mxu0
  %v1344 = vld [vmem:[%s1] sm:$0x1]
  %v1345 = vld [vmem:[%s5] sm:$0xf]
  %v1346 = vld [vmem:[%s5 + $0x4] sm:$0xf]
  %v1347 = vld [vmem:[%s5 + $0x8] sm:$0xf]
  %v1348 = vld [vmem:[%s5 + $0xc] sm:$0xf]
  %v1349 = vld [vmem:[%s6] sm:$0x1]
  %v1354 = vunpack.c.l.b16 %v1345
  %v1355 = vunpack.c.l.b16 %v1346
  %v1356 = vunpack.c.l.b16 %v1347
  %v1357 = vunpack.c.l.b16 %v1348
  %v1358 = vpack.c.b16 %v1355, %v1354
  %v1359 = vpack.c.b16 %v1357, %v1356
  %v1363 = vsel %vm994, %v1344, 0
  %1365 = vmatprep.subr.bf16.mxu0 0
  %1366 = vmatpush1.bf16.msra.mxu0 %v1358
  %1367 = vmatprep.subr.bf16.mxu0 0
  %1368 = vmatpush1.bf16.msra.mxu0 %v1359
  %1369 = vmatprep.subr.bf16.mxu0 0
  %1370 = vmatpush1.bf16.msra.mxu0 0
  %1371 = vmatprep.subr.bf16.mxu0 0
  %1372 = vmatpush1.bf16.msra.mxu0 0
  %1373 = vmatprep.subr.bf16.mxu0 0
  %1374 = vmatpush1.bf16.msra.mxu0 0
  %1375 = vmatprep.subr.bf16.mxu0 0
  %1376 = vmatpush1.bf16.msra.mxu0 0
  %1377 = vmatprep.subr.bf16.mxu0 0
  %1378 = vmatpush1.bf16.msra.mxu0 0
  %1379 = vmatprep.subr.bf16.mxu0 0
  %1380 = vmatpush1.bf16.msra.mxu0 0
  %1381 = vmatprep.subr.bf16.mxu0 0
  %1382 = vmatpush1.bf16.msra.mxu0 0
  %1383 = vmatprep.subr.bf16.mxu0 0
  %1384 = vmatpush1.bf16.msra.mxu0 0
  %1385 = vmatprep.subr.bf16.mxu0 0
  %1386 = vmatpush1.bf16.msra.mxu0 0
  %1387 = vmatprep.subr.bf16.mxu0 0
  %1388 = vmatpush1.bf16.msra.mxu0 0
  %1389 = vmatprep.subr.bf16.mxu0 0
  %1390 = vmatpush1.bf16.msra.mxu0 0
  %1391 = vmatprep.subr.bf16.mxu0 0
  %1392 = vmatpush1.bf16.msra.mxu0 0
  %1393 = vmatprep.subr.bf16.mxu0 0
  %1394 = vmatpush1.bf16.msra.mxu0 0
  %1395 = vmatprep.subr.bf16.mxu0 0
  %1396 = vmatpush1.bf16.msra.mxu0 0
  %1397 = vmatprep.mubr.bf16.mxu0 0
  %1398 = vmatmul.mubr.bf16.gmra.mrb[0].mxu0 %v1363
  %v1399 = vpop.f32.mrb[0].mxu0
  %v1400 = vadd.f32 %v1349, %v1399
  %v1401 = vpop.f32.mrb[0].mxu0
  %v1402 = vpop.f32.mrb[0].mxu0
  %v1403 = vpop.f32.mrb[0].mxu0
  %1404 = vdwg.mxu0
  %v1405 = vmax.f32 %v1400, 0.0
  %v1406 = vpack.c.bf16 %v1405, %v1405
  %v1407 = vld [vmem:[%s7] sm:$0xf]
  %v1408 = vld [vmem:[%s7 + $0x4] sm:$0xf]
  %v1409 = vld [vmem:[%s7 + $0x8] sm:$0xf]
  %v1410 = vld [vmem:[%s7 + $0xc] sm:$0xf]
  %v1411 = vld [vmem:[%s8] sm:$0x1]
  %v1416 = vunpack.c.l.b16 %v1407
  %v1417 = vunpack.c.l.b16 %v1408
  %v1418 = vunpack.c.l.b16 %v1409
  %v1419 = vunpack.c.l.b16 %v1410
  %v1420 = vpack.c.b16 %v1417, %v1416
  %v1421 = vpack.c.b16 %v1419, %v1418
  %v1425 = vsel %vm994, %v1406, 0
  %1427 = vmatprep.subr.bf16.mxu0 0
  %1428 = vmatpush1.bf16.msra.mxu0 %v1420
  %1429 = vmatprep.subr.bf16.mxu0 0
  %1430 = vmatpush1.bf16.msra.mxu0 %v1421
  %1431 = vmatprep.subr.bf16.mxu0 0
  %1432 = vmatpush1.bf16.msra.mxu0 0
  %1433 = vmatprep.subr.bf16.mxu0 0
  %1434 = vmatpush1.bf16.msra.mxu0 0
  %1435 = vmatprep.subr.bf16.mxu0 0
  %1436 = vmatpush1.bf16.msra.mxu0 0
  %1437 = vmatprep.subr.bf16.mxu0 0
  %1438 = vmatpush1.bf16.msra.mxu0 0
  %1439 = vmatprep.subr.bf16.mxu0 0
  %1440 = vmatpush1.bf16.msra.mxu0 0
  %1441 = vmatprep.subr.bf16.mxu0 0
  %1442 = vmatpush1.bf16.msra.mxu0 0
  %1443 = vmatprep.subr.bf16.mxu0 0
  %1444 = vmatpush1.bf16.msra.mxu0 0
  %1445 = vmatprep.subr.bf16.mxu0 0
  %1446 = vmatpush1.bf16.msra.mxu0 0
  %1447 = vmatprep.subr.bf16.mxu0 0
  %1448 = vmatpush1.bf16.msra.mxu0 0
  %1449 = vmatprep.subr.bf16.mxu0 0
  %1450 = vmatpush1.bf16.msra.mxu0 0
  %1451 = vmatprep.subr.bf16.mxu0 0
  %1452 = vmatpush1.bf16.msra.mxu0 0
  %1453 = vmatprep.subr.bf16.mxu0 0
  %1454 = vmatpush1.bf16.msra.mxu0 0
  %1455 = vmatprep.subr.bf16.mxu0 0
  %1456 = vmatpush1.bf16.msra.mxu0 0
  %1457 = vmatprep.subr.bf16.mxu0 0
  %1458 = vmatpush1.bf16.msra.mxu0 0
  %1459 = vmatprep.mubr.bf16.mxu0 0
  %1460 = vmatmul.mubr.bf16.gmra.mrb[0].mxu0 %v1425
  %v1461 = vpop.f32.mrb[0].mxu0
  %v1462 = vadd.f32 %v1411, %v1461
  %v1463 = vpop.f32.mrb[0].mxu0
  %v1464 = vpop.f32.mrb[0].mxu0
  %v1465 = vpop.f32.mrb[0].mxu0
  %1466 = vdwg.mxu0
  %v1467 = vlaneseq
  %v1468 = vshrl.u32 %v1467, 7
  %v1469 = vsub.s32 0, %v1468
  %v1470 = vrot.slane %v1462, %v1469
  %v1471 = vadd.f32 %v1330, %v1470
  %v1472 = vadd.f32 %v1333, %v1470
  %v1473 = vadd.f32 %v1338, %v1470
  %v1474 = vadd.f32 %v1341, %v1470
  %v1475 = vmax.f32 %v1471, 0.0
  %v1476 = vmax.f32 %v1472, 0.0
  %v1477 = vmax.f32 %v1473, 0.0
  %v1478 = vmax.f32 %v1474, 0.0
  %v1479 = vpack.c.bf16 %v1476, %v1475
  %v1480 = vpack.c.bf16 %v1478, %v1477
  %v1481 = vld [vmem:[%s9] sm:$0xf]
  %v1482 = vld [vmem:[%s9 + $0x4] sm:$0xf]
  %v1483 = vld [vmem:[%s9 + $0x8] sm:$0xf]
  %v1484 = vld [vmem:[%s9 + $0xc] sm:$0xf]
  %v1485 = vld [vmem:[%s9 + $0x10] sm:$0xf]
  %v1486 = vld [vmem:[%s9 + $0x14] sm:$0xf]
  %v1487 = vld [vmem:[%s9 + $0x18] sm:$0xf]
  %v1488 = vld [vmem:[%s9 + $0x1c] sm:$0xf]
  %v1489 = vld [vmem:[%s9 + $0x20] sm:$0xf]
  %v1490 = vld [vmem:[%s9 + $0x24] sm:$0xf]
  %v1491 = vld [vmem:[%s9 + $0x28] sm:$0xf]
  %v1492 = vld [vmem:[%s9 + $0x2c] sm:$0xf]
  %v1493 = vld [vmem:[%s9 + $0x30] sm:$0xf]
  %v1494 = vld [vmem:[%s9 + $0x34] sm:$0xf]
  %v1495 = vld [vmem:[%s9 + $0x38] sm:$0xf]
  %v1496 = vld [vmem:[%s9 + $0x3c] sm:$0xf]
  %v1497 = vld [vmem:[%s10] sm:$0x1]
  %v1499 = vlaneseq
  %v1500 = vshrl.u32 %v1499, 7
  %v1501 = vsub.s32 0, %v1500
  %v1502 = vrot.slane %v1497, %v1501
  %v1520 = vunpack.c.l.b16 %v1481
  %v1521 = vunpack.c.l.b16 %v1482
  %v1522 = vunpack.c.l.b16 %v1483
  %v1523 = vunpack.c.l.b16 %v1484
  %v1524 = vunpack.c.l.b16 %v1485
  %v1525 = vunpack.c.l.b16 %v1486
  %v1526 = vunpack.c.l.b16 %v1487
  %v1527 = vunpack.c.l.b16 %v1488
  %v1528 = vunpack.c.l.b16 %v1489
  %v1529 = vunpack.c.l.b16 %v1490
  %v1530 = vunpack.c.l.b16 %v1491
  %v1531 = vunpack.c.l.b16 %v1492
  %v1532 = vunpack.c.l.b16 %v1493
  %v1533 = vunpack.c.l.b16 %v1494
  %v1534 = vunpack.c.l.b16 %v1495
  %v1535 = vunpack.c.l.b16 %v1496
  %v1536 = vpack.c.b16 %v1521, %v1520
  %v1537 = vpack.c.b16 %v1523, %v1522
  %v1538 = vpack.c.b16 %v1525, %v1524
  %v1539 = vpack.c.b16 %v1527, %v1526
  %v1540 = vpack.c.b16 %v1529, %v1528
  %v1541 = vpack.c.b16 %v1531, %v1530
  %v1542 = vpack.c.b16 %v1533, %v1532
  %v1543 = vpack.c.b16 %v1535, %v1534
  %1552 = vmatprep.subr.bf16.mxu0 0
  %1553 = vmatpush1.bf16.msra.mxu0 %v1536
  %1554 = vmatprep.subr.bf16.mxu0 0
  %1555 = vmatpush1.bf16.msra.mxu0 %v1537
  %1556 = vmatprep.subr.bf16.mxu0 0
  %1557 = vmatpush1.bf16.msra.mxu0 %v1538
  %1558 = vmatprep.subr.bf16.mxu0 0
  %1559 = vmatpush1.bf16.msra.mxu0 %v1539
  %1560 = vmatprep.subr.bf16.mxu0 0
  %1561 = vmatpush1.bf16.msra.mxu0 %v1540
  %1562 = vmatprep.subr.bf16.mxu0 0
  %1563 = vmatpush1.bf16.msra.mxu0 %v1541
  %1564 = vmatprep.subr.bf16.mxu0 0
  %1565 = vmatpush1.bf16.msra.mxu0 %v1542
  %1566 = vmatprep.subr.bf16.mxu0 0
  %1567 = vmatpush1.bf16.msra.mxu0 %v1543
  %1568 = vmatprep.subr.bf16.mxu0 0
  %1569 = vmatpush1.bf16.msra.mxu0 0
  %1570 = vmatprep.subr.bf16.mxu0 0
  %1571 = vmatpush1.bf16.msra.mxu0 0
  %1572 = vmatprep.subr.bf16.mxu0 0
  %1573 = vmatpush1.bf16.msra.mxu0 0
  %1574 = vmatprep.subr.bf16.mxu0 0
  %1575 = vmatpush1.bf16.msra.mxu0 0
  %1576 = vmatprep.subr.bf16.mxu0 0
  %1577 = vmatpush1.bf16.msra.mxu0 0
  %1578 = vmatprep.subr.bf16.mxu0 0
  %1579 = vmatpush1.bf16.msra.mxu0 0
  %1580 = vmatprep.subr.bf16.mxu0 0
  %1581 = vmatpush1.bf16.msra.mxu0 0
  %1582 = vmatprep.subr.bf16.mxu0 0
  %1583 = vmatpush1.bf16.msra.mxu0 0
  %1584 = vmatprep.mubr.bf16.mxu0 0
  %1585 = vmatmul.mubr.bf16.gmra.mrb[0].mxu0 %v1479
  %v1586 = vpop.f32.mrb[0].mxu0
  %v1587 = vadd.f32 %v1502, %v1586
  %v1588 = vpop.f32.mrb[0].mxu0
  %v1589 = vpop.f32.mrb[0].mxu0
  %v1590 = vadd.f32 %v1502, %v1589
  %v1591 = vpop.f32.mrb[0].mxu0
  %1592 = vmatprep.mubr.bf16.mxu0 0
  %1593 = vmatmul.mubr.bf16.gmra.mrb[0].mxu0 %v1480
  %v1594 = vpop.f32.mrb[0].mxu0
  %v1595 = vadd.f32 %v1502, %v1594
  %v1596 = vpop.f32.mrb[0].mxu0
  %v1597 = vpop.f32.mrb[0].mxu0
  %v1598 = vadd.f32 %v1502, %v1597
  %v1599 = vpop.f32.mrb[0].mxu0
  %1600 = vdwg.mxu0
  %v1601 = vmax.f32 %v1587, 0.0
  %v1602 = vmax.f32 %v1590, 0.0
  %v1603 = vmax.f32 %v1595, 0.0
  %v1604 = vmax.f32 %v1598, 0.0
  %v1605 = vpack.c.bf16 %v1602, %v1601
  %v1606 = vpack.c.bf16 %v1604, %v1603
  %v1607 = vld [vmem:[%s11] sm:$0xf]
  %v1608 = vld [vmem:[%s11 + $0x4] sm:$0xf]
  %v1609 = vld [vmem:[%s11 + $0x8] sm:$0xf]
  %v1610 = vld [vmem:[%s11 + $0xc] sm:$0xf]
  %v1611 = vld [vmem:[%s11 + $0x10] sm:$0xf]
  %v1612 = vld [vmem:[%s11 + $0x14] sm:$0xf]
  %v1613 = vld [vmem:[%s11 + $0x18] sm:$0xf]
  %v1614 = vld [vmem:[%s11 + $0x1c] sm:$0xf]
  %v1615 = vld [vmem:[%s11 + $0x20] sm:$0xf]
  %v1616 = vld [vmem:[%s11 + $0x24] sm:$0xf]
  %v1617 = vld [vmem:[%s11 + $0x28] sm:$0xf]
  %v1618 = vld [vmem:[%s11 + $0x2c] sm:$0xf]
  %v1619 = vld [vmem:[%s11 + $0x30] sm:$0xf]
  %v1620 = vld [vmem:[%s11 + $0x34] sm:$0xf]
  %v1621 = vld [vmem:[%s11 + $0x38] sm:$0xf]
  %v1622 = vld [vmem:[%s11 + $0x3c] sm:$0xf]
  %v1623 = vld [vmem:[%s12] sm:$0x1]
  %v1625 = vlaneseq
  %v1626 = vshrl.u32 %v1625, 7
  %v1627 = vsub.s32 0, %v1626
  %v1628 = vrot.slane %v1623, %v1627
  %v1646 = vunpack.c.l.b16 %v1607
  %v1647 = vunpack.c.l.b16 %v1608
  %v1648 = vunpack.c.l.b16 %v1609
  %v1649 = vunpack.c.l.b16 %v1610
  %v1650 = vunpack.c.l.b16 %v1611
  %v1651 = vunpack.c.l.b16 %v1612
  %v1652 = vunpack.c.l.b16 %v1613
  %v1653 = vunpack.c.l.b16 %v1614
  %v1654 = vunpack.c.l.b16 %v1615
  %v1655 = vunpack.c.l.b16 %v1616
  %v1656 = vunpack.c.l.b16 %v1617
  %v1657 = vunpack.c.l.b16 %v1618
  %v1658 = vunpack.c.l.b16 %v1619
  %v1659 = vunpack.c.l.b16 %v1620
  %v1660 = vunpack.c.l.b16 %v1621
  %v1661 = vunpack.c.l.b16 %v1622
  %v1662 = vpack.c.b16 %v1647, %v1646
  %v1663 = vpack.c.b16 %v1649, %v1648
  %v1664 = vpack.c.b16 %v1651, %v1650
  %v1665 = vpack.c.b16 %v1653, %v1652
  %v1666 = vpack.c.b16 %v1655, %v1654
  %v1667 = vpack.c.b16 %v1657, %v1656
  %v1668 = vpack.c.b16 %v1659, %v1658
  %v1669 = vpack.c.b16 %v1661, %v1660
  %1678 = vmatprep.subr.bf16.mxu0 0
  %1679 = vmatpush1.bf16.msra.mxu0 %v1662
  %1680 = vmatprep.subr.bf16.mxu0 0
  %1681 = vmatpush1.bf16.msra.mxu0 %v1663
  %1682 = vmatprep.subr.bf16.mxu0 0
  %1683 = vmatpush1.bf16.msra.mxu0 %v1664
  %1684 = vmatprep.subr.bf16.mxu0 0
  %1685 = vmatpush1.bf16.msra.mxu0 %v1665
  %1686 = vmatprep.subr.bf16.mxu0 0
  %1687 = vmatpush1.bf16.msra.mxu0 %v1666
  %1688 = vmatprep.subr.bf16.mxu0 0
  %1689 = vmatpush1.bf16.msra.mxu0 %v1667
  %1690 = vmatprep.subr.bf16.mxu0 0
  %1691 = vmatpush1.bf16.msra.mxu0 %v1668
  %1692 = vmatprep.subr.bf16.mxu0 0
  %1693 = vmatpush1.bf16.msra.mxu0 %v1669
  %1694 = vmatprep.subr.bf16.mxu0 0
  %1695 = vmatpush1.bf16.msra.mxu0 0
  %1696 = vmatprep.subr.bf16.mxu0 0
  %1697 = vmatpush1.bf16.msra.mxu0 0
  %1698 = vmatprep.subr.bf16.mxu0 0
  %1699 = vmatpush1.bf16.msra.mxu0 0
  %1700 = vmatprep.subr.bf16.mxu0 0
  %1701 = vmatpush1.bf16.msra.mxu0 0
  %1702 = vmatprep.subr.bf16.mxu0 0
  %1703 = vmatpush1.bf16.msra.mxu0 0
  %1704 = vmatprep.subr.bf16.mxu0 0
  %1705 = vmatpush1.bf16.msra.mxu0 0
  %1706 = vmatprep.subr.bf16.mxu0 0
  %1707 = vmatpush1.bf16.msra.mxu0 0
  %1708 = vmatprep.subr.bf16.mxu0 0
  %1709 = vmatpush1.bf16.msra.mxu0 0
  %1710 = vmatprep.mubr.bf16.mxu0 0
  %1711 = vmatmul.mubr.bf16.gmra.mrb[0].mxu0 %v1605
  %v1712 = vpop.f32.mrb[0].mxu0
  %v1713 = vadd.f32 %v1628, %v1712
  %v1714 = vpop.f32.mrb[0].mxu0
  %v1715 = vpop.f32.mrb[0].mxu0
  %v1716 = vadd.f32 %v1628, %v1715
  %v1717 = vpop.f32.mrb[0].mxu0
  %1718 = vmatprep.mubr.bf16.mxu0 0
  %1719 = vmatmul.mubr.bf16.gmra.mrb[0].mxu0 %v1606
  %v1720 = vpop.f32.mrb[0].mxu0
  %v1721 = vadd.f32 %v1628, %v1720
  %v1722 = vpop.f32.mrb[0].mxu0
  %v1723 = vpop.f32.mrb[0].mxu0
  %v1724 = vadd.f32 %v1628, %v1723
  %v1725 = vpop.f32.mrb[0].mxu0
  %1726 = vdwg.mxu0
  %vm1727 = vcmask 39936
  %v1728 = vsel %vm1727, %v1713, -inf
  %1729 = vmax.xlane.f32.xlu0 %v1728
  %v1730 = vpop.xlane.xlu0 %1729
  %v1731 = vsel %vm1727, %v1716, -inf
  %1732 = vmax.xlane.f32.xlu0 %v1731
  %v1733 = vpop.xlane.xlu0 %1732
  %v1734 = vsel %vm1727, %v1721, -inf
  %1735 = vmax.xlane.f32.xlu0 %v1734
  %v1736 = vpop.xlane.xlu0 %1735
  %v1737 = vsel %vm1727, %v1724, -inf
  %1738 = vmax.xlane.f32.xlu0 %v1737
  %v1739 = vpop.xlane.xlu0 %1738
  %v1740 = vsub.f32 %v1713, %v1730
  %v1741 = vsub.f32 %v1716, %v1733
  %v1742 = vsub.f32 %v1721, %v1736
  %v1743 = vsub.f32 %v1724, %v1739
  %v1744 = vmul.f32 %v1740, 1.442695
  %v1745 = vpow.pop %v1744
  %v1746 = vmul.f32 %v1741, 1.442695
  %v1747 = vpow.pop %v1746
  %v1748 = vmul.f32 %v1742, 1.442695
  %v1749 = vpow.pop %v1748
  %v1750 = vmul.f32 %v1743, 1.442695
  %v1751 = vpow.pop %v1750
  %v1752 = vsel %vm1727, %v1745, 0.0
  %1753 = vadd.xlane.f32.xlu0 %v1752
  %v1754 = vpop.xlane.xlu0 %1753
  %v1755 = vsel %vm1727, %v1747, 0.0
  %1756 = vadd.xlane.f32.xlu0 %v1755
  %v1757 = vpop.xlane.xlu0 %1756
  %v1758 = vsel %vm1727, %v1749, 0.0
  %1759 = vadd.xlane.f32.xlu0 %v1758
  %v1760 = vpop.xlane.xlu0 %1759
  %v1761 = vsel %vm1727, %v1751, 0.0
  %1762 = vadd.xlane.f32.xlu0 %v1761
  %v1763 = vpop.xlane.xlu0 %1762
  %v1764 = vrcp.pop %v1754
  %v1765 = vrcp.pop %v1757
  %v1766 = vrcp.pop %v1760
  %v1767 = vrcp.pop %v1763
  %v1768 = vmul.f32 %v1745, %v1764
  %v1769 = vmul.f32 %v1747, %v1765
  %v1770 = vmul.f32 %v1749, %v1766
  %v1771 = vmul.f32 %v1751, %v1767
  %vm1772 = vcmask 39944
  %v1773 = vsel %vm1772, %v1768, -inf
  %1774 = vmax.xlane.f32.xlu0 %v1773
  %v1775 = vpop.xlane.xlu0 %1774
  %v1776 = vsel %vm1772, %v1769, -inf
  %1777 = vmax.xlane.f32.xlu0 %v1776
  %v1778 = vpop.xlane.xlu0 %1777
  %v1779 = vsel %vm1772, %v1770, -inf
  %1780 = vmax.xlane.f32.xlu0 %v1779
  %v1781 = vpop.xlane.xlu0 %1780
  %v1782 = vsel %vm1772, %v1771, -inf
  %1783 = vmax.xlane.f32.xlu0 %v1782
  %v1784 = vpop.xlane.xlu0 %1783
  %v1785 = vlaneseq
  %v1786 = vand.u32 %v1785, 127
  %v1787 = vcvt.s32.f32 %v1786
  %vm1788 = vcmp.ge.f32.partialorder %v1768, %v1775
  %vm1789 = vcmp.ge.f32.partialorder %v1769, %v1778
  %vm1790 = vcmp.ge.f32.partialorder %v1770, %v1781
  %vm1791 = vcmp.ge.f32.partialorder %v1771, %v1784
  %1793 = vrot.lane.b32.xlu0 %v1787, 1
  %v1794 = vpop.permute.xlu0 %1793
  %v1796 = vsel %vm1788, %v1794, 4.0
  %v1797 = vsel %vm1789, %v1794, 4.0
  %v1798 = vsel %vm1790, %v1794, 4.0
  %v1799 = vsel %vm1791, %v1794, 4.0
  %v1800 = vsel %vm1772, %v1796, inf
  %1801 = vmin.xlane.f32.xlu0 %v1800
  %v1802 = vpop.xlane.xlu0 %1801
  %v1803 = vsel %vm1772, %v1797, inf
  %1804 = vmin.xlane.f32.xlu0 %v1803
  %v1805 = vpop.xlane.xlu0 %1804
  %v1806 = vsel %vm1772, %v1798, inf
  %1807 = vmin.xlane.f32.xlu0 %v1806
  %v1808 = vpop.xlane.xlu0 %1807
  %v1809 = vsel %vm1772, %v1799, inf
  %1810 = vmin.xlane.f32.xlu0 %v1809
  %v1811 = vpop.xlane.xlu0 %1810
  %v1812 = vld [vmem:[%s2] sm:$0xff]
  %v1813 = vld [vmem:[%s2 + $0x8] sm:$0xff]
  %v1814 = vld [vmem:[%s2 + $0x10] sm:$0xff]
  %v1815 = vld [vmem:[%s2 + $0x18] sm:$0xff]
  %v1816 = vmax.f32 %v1713, -4.1351666
  %v1817 = vmax.f32 %v1716, -4.1351666
  %v1818 = vmax.f32 %v1721, -4.1351666
  %v1819 = vmax.f32 %v1724, -4.1351666
  %v1820 = vmin.f32 %v1816, 4.1351666
  %v1821 = vmin.f32 %v1817, 4.1351666
  %v1822 = vmin.f32 %v1818, 4.1351666
  %v1823 = vmin.f32 %v1819, 4.1351666
  %1828 = vrot.lane.b32.xlu0 %v1812, 126
  %v1829 = vpop.permute.xlu0 %1828
  %1830 = vrot.lane.b32.xlu0 %v1813, 126
  %v1831 = vpop.permute.xlu0 %1830
  %1832 = vrot.lane.b32.xlu0 %v1814, 126
  %v1833 = vpop.permute.xlu0 %1832
  %1834 = vrot.lane.b32.xlu0 %v1815, 126
  %v1835 = vpop.permute.xlu0 %1834
  %v1840 = vadd.f32 %v1812, %v1829
  %v1841 = vadd.f32 %v1813, %v1831
  %v1842 = vadd.f32 %v1814, %v1833
  %v1843 = vadd.f32 %v1815, %v1835
  %v1844 = vmul.f32 %v1840, 0.5
  %v1845 = vmul.f32 %v1841, 0.5
  %v1846 = vmul.f32 %v1842, 0.5
  %v1847 = vmul.f32 %v1843, 0.5
  %1848 = vrot.lane.b32.xlu0 %v1812, 2
  %v1849 = vpop.permute.xlu0 %1848
  %1850 = vrot.lane.b32.xlu0 %v1813, 2
  %v1851 = vpop.permute.xlu0 %1850
  %1852 = vrot.lane.b32.xlu0 %v1814, 2
  %v1853 = vpop.permute.xlu0 %1852
  %1854 = vrot.lane.b32.xlu0 %v1815, 2
  %v1855 = vpop.permute.xlu0 %1854
  %v1860 = vsub.f32 %v1812, %v1849
  %v1861 = vsub.f32 %v1813, %v1851
  %v1862 = vsub.f32 %v1814, %v1853
  %v1863 = vsub.f32 %v1815, %v1855
  %v1864 = vadd.f32 %v1860, 1.0
  %v1865 = vadd.f32 %v1861, 1.0
  %v1866 = vadd.f32 %v1862, 1.0
  %v1867 = vadd.f32 %v1863, 1.0
  %v1868 = vmul.f32 %v1820, 1.442695
  %v1869 = vpow.pop %v1868
  %v1870 = vmul.f32 %v1821, 1.442695
  %v1871 = vpow.pop %v1870
  %v1872 = vmul.f32 %v1822, 1.442695
  %v1873 = vpow.pop %v1872
  %v1874 = vmul.f32 %v1823, 1.442695
  %v1875 = vpow.pop %v1874
  %1880 = vrot.lane.b32.xlu0 %v1869, 124
  %v1881 = vpop.permute.xlu0 %1880
  %1882 = vrot.lane.b32.xlu0 %v1871, 124
  %v1883 = vpop.permute.xlu0 %1882
  %1884 = vrot.lane.b32.xlu0 %v1873, 124
  %v1885 = vpop.permute.xlu0 %1884
  %1886 = vrot.lane.b32.xlu0 %v1875, 124
  %v1887 = vpop.permute.xlu0 %1886
  %v1892 = vmul.f32 %v1864, %v1881
  %v1893 = vmul.f32 %v1865, %v1883
  %v1894 = vmul.f32 %v1866, %v1885
  %v1895 = vmul.f32 %v1867, %v1887
  %1900 = vrot.lane.b32.xlu0 %v1713, 126
  %v1901 = vpop.permute.xlu0 %1900
  %1902 = vrot.lane.b32.xlu0 %v1716, 126
  %v1903 = vpop.permute.xlu0 %1902
  %1904 = vrot.lane.b32.xlu0 %v1721, 126
  %v1905 = vpop.permute.xlu0 %1904
  %1906 = vrot.lane.b32.xlu0 %v1724, 126
  %v1907 = vpop.permute.xlu0 %1906
  %v1912 = vmul.f32 %v1864, %v1901
  %v1913 = vmul.f32 %v1865, %v1903
  %v1914 = vmul.f32 %v1866, %v1905
  %v1915 = vmul.f32 %v1867, %v1907
  %1920 = vrot.lane.b32.xlu0 %v1912, 126
  %v1921 = vpop.permute.xlu0 %1920
  %1922 = vrot.lane.b32.xlu0 %v1913, 126
  %v1923 = vpop.permute.xlu0 %1922
  %1924 = vrot.lane.b32.xlu0 %v1914, 126
  %v1925 = vpop.permute.xlu0 %1924
  %1926 = vrot.lane.b32.xlu0 %v1915, 126
  %v1927 = vpop.permute.xlu0 %1926
  %v1932 = vadd.f32 %v1844, %v1921
  %v1933 = vadd.f32 %v1845, %v1923
  %v1934 = vadd.f32 %v1846, %v1925
  %v1935 = vadd.f32 %v1847, %v1927
  %v1936 = vsub.f32 %v1892, 1.0
  %v1937 = vsub.f32 %v1893, 1.0
  %v1938 = vsub.f32 %v1894, 1.0
  %v1939 = vsub.f32 %v1895, 1.0
  %v1940 = vmul.f32 %v1936, 0.5
  %v1941 = vmul.f32 %v1937, 0.5
  %v1942 = vmul.f32 %v1938, 0.5
  %v1943 = vmul.f32 %v1939, 0.5
  %1948 = vrot.lane.b32.xlu0 %v1940, 126
  %v1949 = vpop.permute.xlu0 %1948
  %1950 = vrot.lane.b32.xlu0 %v1941, 126
  %v1951 = vpop.permute.xlu0 %1950
  %1952 = vrot.lane.b32.xlu0 %v1942, 126
  %v1953 = vpop.permute.xlu0 %1952
  %1954 = vrot.lane.b32.xlu0 %v1943, 126
  %v1955 = vpop.permute.xlu0 %1954
  %v1960 = vsub.f32 %v1932, %v1949
  %v1961 = vsub.f32 %v1933, %v1951
  %v1962 = vsub.f32 %v1934, %v1953
  %v1963 = vsub.f32 %v1935, %v1955
  %v1964 = vmax.f32 %v1960, 0.0
  %v1965 = vmax.f32 %v1961, 0.0
  %v1966 = vmax.f32 %v1962, 0.0
  %v1967 = vmax.f32 %v1963, 0.0
  %v1968 = vmin.f32 %v1964, 15.0
  %v1969 = vmin.f32 %v1965, 15.0
  %v1970 = vmin.f32 %v1966, 15.0
  %v1971 = vmin.f32 %v1967, 15.0
  %v1972 = vadd.f32 %v1932, %v1949
  %v1973 = vadd.f32 %v1933, %v1951
  %v1974 = vadd.f32 %v1934, %v1953
  %v1975 = vadd.f32 %v1935, %v1955
  %v1976 = vmax.f32 %v1972, 0.0
  %v1977 = vmax.f32 %v1973, 0.0
  %v1978 = vmax.f32 %v1974, 0.0
  %v1979 = vmax.f32 %v1975, 0.0
  %v1980 = vmin.f32 %v1976, 15.0
  %v1981 = vmin.f32 %v1977, 15.0
  %v1982 = vmin.f32 %v1978, 15.0
  %v1983 = vmin.f32 %v1979, 15.0
  %1988 = vrot.lane.b32.xlu0 %v1968, 127
  %v1989 = vpop.permute.xlu0 %1988
  %1990 = vrot.lane.b32.xlu0 %v1969, 127
  %v1991 = vpop.permute.xlu0 %1990
  %1992 = vrot.lane.b32.xlu0 %v1970, 127
  %v1993 = vpop.permute.xlu0 %1992
  %1994 = vrot.lane.b32.xlu0 %v1971, 127
  %v1995 = vpop.permute.xlu0 %1994
  %2004 = vrot.lane.b32.xlu0 %v1980, 1
  %v2005 = vpop.permute.xlu0 %2004
  %2006 = vrot.lane.b32.xlu0 %v1981, 1
  %v2007 = vpop.permute.xlu0 %2006
  %2008 = vrot.lane.b32.xlu0 %v1982, 1
  %v2009 = vpop.permute.xlu0 %2008
  %2010 = vrot.lane.b32.xlu0 %v1983, 1
  %v2011 = vpop.permute.xlu0 %2010
  %vm2016 = vcmask 15360
  %v2017 = vsel %vm2016, %v1989, %v2005
  %v2018 = vsel %vm2016, %v1991, %v2007
  %v2019 = vsel %vm2016, %v1993, %v2009
  %v2020 = vsel %vm2016, %v1995, %v2011
  %vm2021 = vcmask 23552
  %v2022 = vsel %vm2021, %v2017, %v2005
  %v2023 = vsel %vm2021, %v2018, %v2007
  %v2024 = vsel %vm2021, %v2019, %v2009
  %v2025 = vsel %vm2021, %v2020, %v2011
  %vm2026 = vcmask 31744
  %v2027 = vsel %vm2026, %v2022, %v1775
  %v2028 = vsel %vm2026, %v2023, %v1778
  %v2029 = vsel %vm2026, %v2024, %v1781
  %v2030 = vsel %vm2026, %v2025, %v1784
  %v2031 = vsel %vm1727, %v2027, %v1802
  %v2032 = vsel %vm1727, %v2028, %v1805
  %v2033 = vsel %vm1727, %v2029, %v1808
  %v2034 = vsel %vm1727, %v2030, %v1811
  %vm2035 = vcmask 48128
  %v2036 = vsel %vm2035, %v2031, 0.0
  %v2037 = vsel %vm2035, %v2032, 0.0
  %v2038 = vsel %vm2035, %v2033, 0.0
  %v2039 = vsel %vm2035, %v2034, 0.0
  %vm2040 = vcmask 56320
  %v2041 = vsel %vm2040, %v2036, 0.0
  %v2042 = vsel %vm2040, %v2037, 0.0
  %v2043 = vsel %vm2040, %v2038, 0.0
  %v2044 = vsel %vm2040, %v2039, 0.0
  %vm2045 = vcmask 64512
  %2046 = vst.msk [vmem:[%s13] sm:$0xff] %vm2045, %v2041
  %2047 = vst.msk [vmem:[%s13 + $0x8] sm:$0xff] %vm2045, %v2042
  %2048 = vst.msk [vmem:[%s13 + $0x10] sm:$0xff] %vm2045, %v2043
  %2049 = vst.msk [vmem:[%s13 + $0x18] sm:$0xff] %vm2045, %v2044
  // Predicated region
  $region54: #{onnx_model_forward.11} parent=0 // pred_check
    _
  $region55: #{onnx_model_forward.11} parent=0 // pred_check_branch
    %2051 = sbr.rel (0) target = $region57
  $region56: #{onnx_model_forward.11} parent=0 // pred_region
    _
  $region57: #{onnx_model_forward.11} parent=0 // pred_fallthru
    _
  // Predicated region
  $region58: #{onnx_model_forward.11} parent=0 // pred_check
    _
  $region59: #{onnx_model_forward.11} parent=0 // pred_check_branch
    %2053 = sbr.rel (0) target = $region61
  $region60: #{onnx_model_forward.11} parent=0 // pred_region
    _
  $region61: #{onnx_model_forward.11} parent=0 // pred_fallthru
    _

</llo_original>
